<compile_context>
chip_gen: v5e
topology: v5e:2x2
jax: 0.10.0
libtpu: 0.0.40
codegen_flags: <defaults>
</compile_context>

<pallas_src>
import functools

import numpy as np

import jax
import jax.numpy as jnp
from jax import lax
from jax.experimental import pallas as pl
from jax.experimental.pallas import tpu as pltpu

# Conv hyperparameters (the **kwargs of the module): 3x3, stride 1, padding 1.
KH, KW = 3, 3
STRIDE = 1
PAD = 1
BN_EPS = 1e-5
LEAKY_SLOPE = 0.1

_LANE = 128
_SUB = 16            # bf16 sublane packing (also satisfies the f32 requirement of 8)


def _round_up(x, m):
    return ((x + m - 1) // m) * m


def _vmem_limits():
    """Per-generation scoped-VMEM limit and tile byte budget."""
    try:
        cap = int(pltpu.get_tpu_info().vmem_capacity_bytes)
    except Exception:                       # unknown chip / interpret mode
        cap = 64 * 1024 * 1024              # v7x-sized fallback, safe everywhere
    vmem_limit = min(cap * 3 // 4, 96 * 1024 * 1024)   # ~48 MiB v7x, ~96 MiB v5e/v6e
    tile_budget = int(vmem_limit * 0.55)
    return vmem_limit, tile_budget


# ---------------------------------------------------------------------------
# Phase 1: fused im2col + conv matmul + per-tile per-channel batch statistics
# ---------------------------------------------------------------------------
def _conv_stats_kernel(slab_ref, mask_ref, w_ref, conv_ref, sum_ref, sq_ref,
                       *, offsets, tile_rows):
    # slab_ref : (tile_rows + 2*(W+4) + 2, Cin) bf16 -- flat rows of the
    #            2-wide-padded image covering this output tile plus halo.
    # The nine 3x3 taps are constant row offsets into the slab; accumulate
    # nine small bf16 MXU matmuls into an f32 register accumulator.
    o = offsets[0]
    conv = jnp.dot(slab_ref[o:o + tile_rows, :], w_ref[0],
                   preferred_element_type=jnp.float32)
    for k in range(1, KH * KW):
        o = offsets[k]
        conv += jnp.dot(slab_ref[o:o + tile_rows, :], w_ref[k],
                        preferred_element_type=jnp.float32)

    # Zero the rows that are not real output pixels (wrap-around columns of the
    # widened padding and per-image tail padding) so they contribute nothing to
    # the batch statistics and are harmless in the stored buffer.
    conv = conv * mask_ref[...].astype(jnp.float32)

    conv_ref[...] = conv.astype(conv_ref.dtype)          # bf16 intermediate

    # Per-channel sum / sum-of-squares from the f32 accumulator (VPU adds +
    # one cross-sublane reduce), not an MXU matmul.
    s = jnp.sum(conv, axis=0, keepdims=True)
    sq = jnp.sum(conv * conv, axis=0, keepdims=True)
    cols = conv.shape[1]
    sum_ref[...] = jnp.broadcast_to(s.reshape(1, 1, cols), (1, 8, cols))
    sq_ref[...] = jnp.broadcast_to(sq.reshape(1, 1, cols), (1, 8, cols))


# ---------------------------------------------------------------------------
# Phase 2: folded BN affine + LeakyReLU (bf16 conv in, f32 out)
# ---------------------------------------------------------------------------
def _bn_act_kernel(conv_ref, scale_ref, shift_ref, out_ref):
    y = conv_ref[...].astype(jnp.float32) * scale_ref[...] + shift_ref[...]
    out_ref[...] = jnp.where(y >= 0, y, LEAKY_SLOPE * y)


# ---------------------------------------------------------------------------
# Tile sizing (bytes-budgeted, per generation)
# ---------------------------------------------------------------------------
def _phase1_tile_rows(p_img, width, cin, cout_pad, tile_budget, requested):
    if requested is not None:
        t = max(_SUB, (int(requested) // _SUB) * _SUB)
        return min(t, _round_up(p_img, _SUB))
    lane_cin = _round_up(cin, _LANE)
    k9 = KH * KW * cin
    per_row = (4 * lane_cin          # slab (bf16, double buffered, lane padded)
               + 4 * _LANE           # row mask (bf16, double buffered, lane padded)
               + 4 * cout_pad        # conv out (bf16, double buffered)
               + 12 * cout_pad)      # transient f32 conv / conv^2 values
    fixed = (4 * k9 * cout_pad                          # weight, bf16, 2 buffers
             + 4 * lane_cin * (2 * width + 10)          # slab halo rows
             + 2 * 1024 * 1024)                         # misc headroom
    # TODO(synk): pin the never-changing weight block to a single VMEM buffer
    # (pipeline_mode=pl.Buffered(1)) once single-buffered blocks are confirmed
    # supported; the budget above conservatively assumes two copies.
    t = (tile_budget - fixed) // per_row
    t = max(_SUB, (int(t) // _SUB) * _SUB)
    return min(t, _round_up(p_img, _SUB))


def _phase2_tile_rows(total_tiles1, tile1, cout_pad, tile_budget):
    # Phase 2 is pure streaming: bf16 in + f32 out (double buffered) + transients.
    per_row = 20 * cout_pad
    max_rows = max(tile1, tile_budget // per_row)
    best_k = 1
    for k in range(1, total_tiles1 + 1):
        if total_tiles1 % k:
            continue
        if k * tile1 > max_rows:
            continue
        if total_tiles1 // k < 2 <= total_tiles1:   # keep >= 2 grid steps
            continue
        best_k = k
    return best_k * tile1


# ---------------------------------------------------------------------------
# Forward pass
# ---------------------------------------------------------------------------
@functools.partial(jax.jit, static_argnames=("tile_p",))
def cnn_block_forward(x_nchw, weight, gamma, beta, *, tile_p=None):
    """
    x_nchw : (N, Cin, H, W) float32
    weight : (Cout, Cin, KH, KW)   (PyTorch Conv2d weight layout)
    gamma, beta : (Cout,)
    returns (N, Cout, H, W)
    """
    n, cin, h, w = x_nchw.shape
    cout = weight.shape[0]
    k9 = KH * KW * cin
    cout_pad = _round_up(cout, _LANE)
    wp = w + 4                    # width of a 2-wide-padded image row
    p_img = h * wp                # output rows computed per image (incl. 4 garbage cols/row)

    vmem_limit, tile_budget = _vmem_limits()
    tile = _phase1_tile_rows(p_img, w, cin, cout_pad, tile_budget, tile_p)
    num_tiles_img = pl.cdiv(p_img, tile)
    # v7x has 2 TensorCores: keep the "parallel" grid axis >= 2 (and even where
    # possible) so both cores get work.
    if n * num_tiles_img < 2 and p_img > _SUB:
        tile = _round_up(pl.cdiv(p_img, 2), _SUB)
        num_tiles_img = pl.cdiv(p_img, tile)
    if (n % 2) and (num_tiles_img % 2) and num_tiles_img > 1:
        bumped = num_tiles_img + 1
        tile = _round_up(pl.cdiv(p_img, bumped), _SUB)
        num_tiles_img = pl.cdiv(p_img, tile)
    p_img_pad = num_tiles_img * tile
    total_tiles = n * num_tiles_img
    total_rows = total_tiles * tile
    slab_rows = tile + 2 * wp + 2          # tile rows + 3x3 halo in flat-row space
    halo_lead = w + 3                      # flat-row offset of the first slab row

    # --- glue: NCHW -> NHWC, widen-pad by 2, flatten rows, cut overlapping slabs
    # TODO(synk): the NCHW<->NHWC transposes are an extra HBM round trip kept
    # only for drop-in parity with the PyTorch module; accept/return NHWC (or
    # the flat (P, C) layout) if the caller permits.
    x_nhwc = jnp.transpose(x_nchw, (0, 2, 3, 1))
    xp = jnp.pad(x_nhwc, ((0, 0), (2, 2), (2, 2), (0, 0)))      # (N, H+4, W+4, Cin)
    f_rows = (h + 4) * wp
    x_flat = xp.reshape(n, f_rows, cin)
    f_ext = max(f_rows, p_img_pad + 3 * w + 13)
    x_ext = jnp.pad(x_flat, ((0, 0), (0, f_ext - f_rows), (0, 0)))
    row_idx = ((np.arange(num_tiles_img) * tile)[:, None] + halo_lead
               + np.arange(slab_rows)[None, :])                 # static indices
    slabs = x_ext[:, row_idx, :].reshape(total_tiles, slab_rows, cin)
    slabs = slabs.astype(jnp.bfloat16)

    # Row-validity mask (static): drops wrap-around columns (j < 2 or j >= W+2
    # in the widened padding) and per-image tail padding rows.
    q = np.arange(p_img_pad)
    col = q % wp
    mask_np = ((q < p_img) & (col >= 2) & (col < w + 2)).astype(np.float32)
    mask = jnp.asarray(np.tile(mask_np, n).reshape(total_rows, 1),
                       dtype=jnp.bfloat16)

    # Weight as (9, Cin, Cout_pad), bf16, (kh, kw) major to match the tap order.
    w9 = jnp.transpose(weight, (2, 3, 1, 0)).reshape(KH * KW, cin, cout)
    w9 = jnp.pad(w9.astype(jnp.bfloat16), ((0, 0), (0, 0), (0, cout_pad - cout)))

    # Slab-local row offset of tap (kh, kw) for output row r is  r + kh*wp + kw.
    offsets = tuple(kh * wp + kw for kh in range(KH) for kw in range(KW))
    kernel1 = functools.partial(_conv_stats_kernel,
                                offsets=offsets, tile_rows=tile)

    cost1 = pl.CostEstimate(
        flops=2 * total_rows * k9 * cout_pad + 3 * total_rows * cout_pad,
        transcendentals=0,
        bytes_accessed=int(total_tiles * slab_rows * cin * 2
                           + total_rows * 2
                           + k9 * cout_pad * 2
                           + total_rows * cout_pad * 2
                           + 2 * total_tiles * 8 * cout_pad * 4))

    conv_flat, tile_sums, tile_sqs = pl.pallas_call(
        kernel1,
        out_shape=(
            jax.ShapeDtypeStruct((total_rows, cout_pad), jnp.bfloat16),
            jax.ShapeDtypeStruct((total_tiles, 8, cout_pad), jnp.float32),
            jax.ShapeDtypeStruct((total_tiles, 8, cout_pad), jnp.float32),
        ),
        grid=(total_tiles,),
        in_specs=[
            pl.BlockSpec((None, slab_rows, cin), lambda i: (i, 0, 0)),
            pl.BlockSpec((tile, 1), lambda i: (i, 0)),
            pl.BlockSpec((KH * KW, cin, cout_pad), lambda i: (0, 0, 0)),
        ],
        out_specs=(
            pl.BlockSpec((tile, cout_pad), lambda i: (i, 0)),
            pl.BlockSpec((1, 8, cout_pad), lambda i: (i, 0, 0)),
            pl.BlockSpec((1, 8, cout_pad), lambda i: (i, 0, 0)),
        ),
        compiler_params=pltpu.CompilerParams(
            dimension_semantics=("parallel",),
            vmem_limit_bytes=vmem_limit),
        cost_estimate=cost1,
    )(slabs, mask, w9)

    # --- tiny cross-tile stats combine + folded BN affine (plain JAX glue) ---
    inv_cnt = 1.0 / float(n * h * w)          # masked rows contribute 0 to the sums
    mean = jnp.sum(tile_sums[:, 0, :], axis=0) * inv_cnt
    ex2 = jnp.sum(tile_sqs[:, 0, :], axis=0) * inv_cnt
    var = jnp.maximum(ex2 - mean * mean, 0.0)  # biased (training-mode) variance
    # TODO(synk): E[x^2]-mean^2 can cancel for channels with huge means; use a
    # centered / Welford-style combine if that regime matters.
    inv_std = lax.rsqrt(var + BN_EPS)
    # Zero-padded gamma makes scale exactly 0 on the padded Cout channels.
    gamma_p = jnp.pad(gamma.astype(jnp.float32), (0, cout_pad - cout))
    beta_p = jnp.pad(beta.astype(jnp.float32), (0, cout_pad - cout))
    scale_vec = gamma_p * inv_std
    scale = scale_vec.reshape(1, cout_pad)
    shift = (beta_p - mean * scale_vec).reshape(1, cout_pad)

    # --- phase 2: y = conv*scale + shift, LeakyReLU ---------------------------
    tile2 = _phase2_tile_rows(total_tiles, tile, cout_pad, tile_budget)
    num_tiles2 = total_rows // tile2

    cost2 = pl.CostEstimate(
        flops=4 * total_rows * cout_pad,
        transcendentals=0,
        bytes_accessed=int(total_rows * cout_pad * (2 + 4) + 2 * cout_pad * 4))

    out_flat = pl.pallas_call(
        _bn_act_kernel,
        out_shape=jax.ShapeDtypeStruct((total_rows, cout_pad), jnp.float32),
        grid=(num_tiles2,),
        in_specs=[
            pl.BlockSpec((tile2, cout_pad), lambda i: (i, 0)),
            pl.BlockSpec((1, cout_pad), lambda i: (0, 0)),
            pl.BlockSpec((1, cout_pad), lambda i: (0, 0)),
        ],
        out_specs=pl.BlockSpec((tile2, cout_pad), lambda i: (i, 0)),
        compiler_params=pltpu.CompilerParams(
            dimension_semantics=("parallel",),
            vmem_limit_bytes=vmem_limit),
        cost_estimate=cost2,
    )(conv_flat, scale, shift)

    # Drop padded channels, wrap-around columns and tail rows; back to NCHW.
    out_rows = out_flat.reshape(n, p_img_pad, cout_pad)[:, :p_img, :cout]
    out_nhwc = out_rows.reshape(n, h, wp, cout)[:, :, 2:2 + w, :]
    return jnp.transpose(out_nhwc, (0, 3, 1, 2)).astype(x_nchw.dtype)


def _reference(x_nchw, weight, gamma, beta):
    """Pure-JAX reference (conv + training-mode BN + LeakyReLU)."""
    conv = lax.conv_general_dilated(
        x_nchw, weight, window_strides=(STRIDE, STRIDE),
        padding=((PAD, PAD), (PAD, PAD)),
        dimension_numbers=("NCHW", "OIHW", "NCHW"))
    mean = jnp.mean(conv, axis=(0, 2, 3), keepdims=True)
    var = jnp.mean((conv - mean) ** 2, axis=(0, 2, 3), keepdims=True)
    y = (conv - mean) * lax.rsqrt(var + BN_EPS)
    y = y * gamma.reshape(1, -1, 1, 1) + beta.reshape(1, -1, 1, 1)
    return jnp.where(y >= 0, y, LEAKY_SLOPE * y)


if __name__ == "__main__":
    key = jax.random.PRNGKey(0)
    k_x, k_w, k_g, k_b = jax.random.split(key, 4)

    N, CIN, COUT, H, W = 2, 4, 8, 16, 16
    x = jax.random.normal(k_x, (N, CIN, H, W), dtype=jnp.float32)
    weight = jax.random.normal(k_w, (COUT, CIN, KH, KW), dtype=jnp.float32) * 0.1
    gamma = 1.0 + 0.1 * jax.random.normal(k_g, (COUT,), dtype=jnp.float32)
    beta = 0.1 * jax.random.normal(k_b, (COUT,), dtype=jnp.float32)

    # The kernel feeds the MXU in bf16 and stores the conv intermediate in bf16.
    # Quantize the test inputs through bf16 so the f32 reference sees the same
    # values; the remaining difference is the bf16 conv intermediate, covered
    # by the tolerance below (test-only; does not change the kernel).
    x_q = x.astype(jnp.bfloat16).astype(jnp.float32)
    w_q = weight.astype(jnp.bfloat16).astype(jnp.float32)

    # TODO(synk): BatchNorm running_mean/running_var buffer updates (training
    # side effect) are not modeled; they do not affect the forward output.

    ref = _reference(x_q, w_q, gamma, beta)

    # Auto-sized tiles (one tile per image here) ...
    out = cnn_block_forward(x_q, w_q, gamma, beta)
    out = jax.block_until_ready(out)
    assert out.shape == (N, COUT, H, W)
    err = jnp.max(jnp.abs(out - ref))
    assert jnp.allclose(out, ref, atol=5e-3, rtol=5e-3), f"max abs err {err}"

    # ... and a forced multi-tile run that exercises the halo + tail-mask path.
    out2 = cnn_block_forward(x_q, w_q, gamma, beta, tile_p=192)
    out2 = jax.block_until_ready(out2)
    err2 = jnp.max(jnp.abs(out2 - ref))
    assert jnp.allclose(out2, ref, atol=5e-3, rtol=5e-3), f"max abs err {err2}"

    print("KERNEL_OK")
</pallas_src>

<mosaic_0001>
module attributes {stable_mosaic.version = 11 : i64} {
  func.func @_conv_stats_kernel(%arg0: i32, %arg1: memref<1x362x4xbf16, #tpu.memory_space<vmem>>, %arg2: memref<320x1xbf16, #tpu.memory_space<vmem>>, %arg3: memref<9x4x128xbf16, #tpu.memory_space<vmem>>, %arg4: memref<320x128xbf16, #tpu.memory_space<vmem>>, %arg5: memref<1x8x128xf32, #tpu.memory_space<vmem>>, %arg6: memref<1x8x128xf32, #tpu.memory_space<vmem>>) attributes {dimension_semantics = [#tpu.dimension_semantics<parallel>], iteration_bounds = array<i64: 2>, scalar_prefetch = 0 : i64, scratch_operands = 0 : i64, tpu.core_type = #tpu.core_type<tc>, window_params = [{transform_indices = @transform_0, window_bounds = array<i64: 1, 362, 4>}, {transform_indices = @transform_1, window_bounds = array<i64: 320, 1>}, {pipeline_mode = #tpu.pipeline_mode<synchronous>, transform_indices = @transform_2, window_bounds = array<i64: 9, 4, 128>}, {transform_indices = @transform_3, window_bounds = array<i64: 320, 128>}, {transform_indices = @transform_4, window_bounds = array<i64: 1, 8, 128>}, {transform_indices = @transform_5, window_bounds = array<i64: 1, 8, 128>}]} {
    %c0 = arith.constant 0 : index
    %c0_0 = arith.constant 0 : index
    %c0_1 = arith.constant 0 : index
    %0 = vector.load %arg1[%c0, %c0_0, %c0_1] : memref<1x362x4xbf16, #tpu.memory_space<vmem>>, vector<1x320x4xbf16>
    %1 = vector.shape_cast %0 : vector<1x320x4xbf16> to vector<320x4xbf16>
    %c0_2 = arith.constant 0 : index
    %c0_3 = arith.constant 0 : index
    %c0_4 = arith.constant 0 : index
    %2 = vector.load %arg3[%c0_2, %c0_3, %c0_4] : memref<9x4x128xbf16, #tpu.memory_space<vmem>>, vector<1x4x128xbf16>
    %3 = vector.shape_cast %2 : vector<1x4x128xbf16> to vector<4x128xbf16>
    %cst = arith.constant dense<0.000000e+00> : vector<320x128xf32>
    %4 = tpu.matmul %1, %3, %cst {dimension_numbers = #tpu.dot_dimension_numbers<[1], [0], [0], [1], [0, 0, 1, 1], [], []>} : vector<320x4xbf16>, vector<4x128xbf16>, vector<320x128xf32> -> vector<320x128xf32>
    %c0_5 = arith.constant 0 : index
    %c1 = arith.constant 1 : index
    %c0_6 = arith.constant 0 : index
    %5 = vector.load %arg1[%c0_5, %c1, %c0_6] : memref<1x362x4xbf16, #tpu.memory_space<vmem>>, vector<1x320x4xbf16>
    %6 = vector.shape_cast %5 : vector<1x320x4xbf16> to vector<320x4xbf16>
    %c1_7 = arith.constant 1 : index
    %c0_8 = arith.constant 0 : index
    %c0_9 = arith.constant 0 : index
    %7 = vector.load %arg3[%c1_7, %c0_8, %c0_9] : memref<9x4x128xbf16, #tpu.memory_space<vmem>>, vector<1x4x128xbf16>
    %8 = vector.shape_cast %7 : vector<1x4x128xbf16> to vector<4x128xbf16>
    %cst_10 = arith.constant dense<0.000000e+00> : vector<320x128xf32>
    %9 = tpu.matmul %6, %8, %cst_10 {dimension_numbers = #tpu.dot_dimension_numbers<[1], [0], [0], [1], [0, 0, 1, 1], [], []>} : vector<320x4xbf16>, vector<4x128xbf16>, vector<320x128xf32> -> vector<320x128xf32>
    %10 = arith.addf %4, %9 : vector<320x128xf32>
    %c0_11 = arith.constant 0 : index
    %c2 = arith.constant 2 : index
    %c0_12 = arith.constant 0 : index
    %11 = vector.load %arg1[%c0_11, %c2, %c0_12] : memref<1x362x4xbf16, #tpu.memory_space<vmem>>, vector<1x320x4xbf16>
    %12 = vector.shape_cast %11 : vector<1x320x4xbf16> to vector<320x4xbf16>
    %c2_13 = arith.constant 2 : index
    %c0_14 = arith.constant 0 : index
    %c0_15 = arith.constant 0 : index
    %13 = vector.load %arg3[%c2_13, %c0_14, %c0_15] : memref<9x4x128xbf16, #tpu.memory_space<vmem>>, vector<1x4x128xbf16>
    %14 = vector.shape_cast %13 : vector<1x4x128xbf16> to vector<4x128xbf16>
    %cst_16 = arith.constant dense<0.000000e+00> : vector<320x128xf32>
    %15 = tpu.matmul %12, %14, %cst_16 {dimension_numbers = #tpu.dot_dimension_numbers<[1], [0], [0], [1], [0, 0, 1, 1], [], []>} : vector<320x4xbf16>, vector<4x128xbf16>, vector<320x128xf32> -> vector<320x128xf32>
    %16 = arith.addf %10, %15 : vector<320x128xf32>
    %c0_17 = arith.constant 0 : index
    %c20 = arith.constant 20 : index
    %c0_18 = arith.constant 0 : index
    %17 = vector.load %arg1[%c0_17, %c20, %c0_18] : memref<1x362x4xbf16, #tpu.memory_space<vmem>>, vector<1x320x4xbf16>
    %18 = vector.shape_cast %17 : vector<1x320x4xbf16> to vector<320x4xbf16>
    %c3 = arith.constant 3 : index
    %c0_19 = arith.constant 0 : index
    %c0_20 = arith.constant 0 : index
    %19 = vector.load %arg3[%c3, %c0_19, %c0_20] : memref<9x4x128xbf16, #tpu.memory_space<vmem>>, vector<1x4x128xbf16>
    %20 = vector.shape_cast %19 : vector<1x4x128xbf16> to vector<4x128xbf16>
    %cst_21 = arith.constant dense<0.000000e+00> : vector<320x128xf32>
    %21 = tpu.matmul %18, %20, %cst_21 {dimension_numbers = #tpu.dot_dimension_numbers<[1], [0], [0], [1], [0, 0, 1, 1], [], []>} : vector<320x4xbf16>, vector<4x128xbf16>, vector<320x128xf32> -> vector<320x128xf32>
    %22 = arith.addf %16, %21 : vector<320x128xf32>
    %c0_22 = arith.constant 0 : index
    %c21 = arith.constant 21 : index
    %c0_23 = arith.constant 0 : index
    %23 = vector.load %arg1[%c0_22, %c21, %c0_23] : memref<1x362x4xbf16, #tpu.memory_space<vmem>>, vector<1x320x4xbf16>
    %24 = vector.shape_cast %23 : vector<1x320x4xbf16> to vector<320x4xbf16>
    %c4 = arith.constant 4 : index
    %c0_24 = arith.constant 0 : index
    %c0_25 = arith.constant 0 : index
    %25 = vector.load %arg3[%c4, %c0_24, %c0_25] : memref<9x4x128xbf16, #tpu.memory_space<vmem>>, vector<1x4x128xbf16>
    %26 = vector.shape_cast %25 : vector<1x4x128xbf16> to vector<4x128xbf16>
    %cst_26 = arith.constant dense<0.000000e+00> : vector<320x128xf32>
    %27 = tpu.matmul %24, %26, %cst_26 {dimension_numbers = #tpu.dot_dimension_numbers<[1], [0], [0], [1], [0, 0, 1, 1], [], []>} : vector<320x4xbf16>, vector<4x128xbf16>, vector<320x128xf32> -> vector<320x128xf32>
    %28 = arith.addf %22, %27 : vector<320x128xf32>
    %c0_27 = arith.constant 0 : index
    %c22 = arith.constant 22 : index
    %c0_28 = arith.constant 0 : index
    %29 = vector.load %arg1[%c0_27, %c22, %c0_28] : memref<1x362x4xbf16, #tpu.memory_space<vmem>>, vector<1x320x4xbf16>
    %30 = vector.shape_cast %29 : vector<1x320x4xbf16> to vector<320x4xbf16>
    %c5 = arith.constant 5 : index
    %c0_29 = arith.constant 0 : index
    %c0_30 = arith.constant 0 : index
    %31 = vector.load %arg3[%c5, %c0_29, %c0_30] : memref<9x4x128xbf16, #tpu.memory_space<vmem>>, vector<1x4x128xbf16>
    %32 = vector.shape_cast %31 : vector<1x4x128xbf16> to vector<4x128xbf16>
    %cst_31 = arith.constant dense<0.000000e+00> : vector<320x128xf32>
    %33 = tpu.matmul %30, %32, %cst_31 {dimension_numbers = #tpu.dot_dimension_numbers<[1], [0], [0], [1], [0, 0, 1, 1], [], []>} : vector<320x4xbf16>, vector<4x128xbf16>, vector<320x128xf32> -> vector<320x128xf32>
    %34 = arith.addf %28, %33 : vector<320x128xf32>
    %c0_32 = arith.constant 0 : index
    %c40 = arith.constant 40 : index
    %c0_33 = arith.constant 0 : index
    %35 = vector.load %arg1[%c0_32, %c40, %c0_33] : memref<1x362x4xbf16, #tpu.memory_space<vmem>>, vector<1x320x4xbf16>
    %36 = vector.shape_cast %35 : vector<1x320x4xbf16> to vector<320x4xbf16>
    %c6 = arith.constant 6 : index
    %c0_34 = arith.constant 0 : index
    %c0_35 = arith.constant 0 : index
    %37 = vector.load %arg3[%c6, %c0_34, %c0_35] : memref<9x4x128xbf16, #tpu.memory_space<vmem>>, vector<1x4x128xbf16>
    %38 = vector.shape_cast %37 : vector<1x4x128xbf16> to vector<4x128xbf16>
    %cst_36 = arith.constant dense<0.000000e+00> : vector<320x128xf32>
    %39 = tpu.matmul %36, %38, %cst_36 {dimension_numbers = #tpu.dot_dimension_numbers<[1], [0], [0], [1], [0, 0, 1, 1], [], []>} : vector<320x4xbf16>, vector<4x128xbf16>, vector<320x128xf32> -> vector<320x128xf32>
    %40 = arith.addf %34, %39 : vector<320x128xf32>
    %c0_37 = arith.constant 0 : index
    %c41 = arith.constant 41 : index
    %c0_38 = arith.constant 0 : index
    %41 = vector.load %arg1[%c0_37, %c41, %c0_38] : memref<1x362x4xbf16, #tpu.memory_space<vmem>>, vector<1x320x4xbf16>
    %42 = vector.shape_cast %41 : vector<1x320x4xbf16> to vector<320x4xbf16>
    %c7 = arith.constant 7 : index
    %c0_39 = arith.constant 0 : index
    %c0_40 = arith.constant 0 : index
    %43 = vector.load %arg3[%c7, %c0_39, %c0_40] : memref<9x4x128xbf16, #tpu.memory_space<vmem>>, vector<1x4x128xbf16>
    %44 = vector.shape_cast %43 : vector<1x4x128xbf16> to vector<4x128xbf16>
    %cst_41 = arith.constant dense<0.000000e+00> : vector<320x128xf32>
    %45 = tpu.matmul %42, %44, %cst_41 {dimension_numbers = #tpu.dot_dimension_numbers<[1], [0], [0], [1], [0, 0, 1, 1], [], []>} : vector<320x4xbf16>, vector<4x128xbf16>, vector<320x128xf32> -> vector<320x128xf32>
    %46 = arith.addf %40, %45 : vector<320x128xf32>
    %c0_42 = arith.constant 0 : index
    %c42 = arith.constant 42 : index
    %c0_43 = arith.constant 0 : index
    %47 = vector.load %arg1[%c0_42, %c42, %c0_43] : memref<1x362x4xbf16, #tpu.memory_space<vmem>>, vector<1x320x4xbf16>
    %48 = vector.shape_cast %47 : vector<1x320x4xbf16> to vector<320x4xbf16>
    %c8 = arith.constant 8 : index
    %c0_44 = arith.constant 0 : index
    %c0_45 = arith.constant 0 : index
    %49 = vector.load %arg3[%c8, %c0_44, %c0_45] : memref<9x4x128xbf16, #tpu.memory_space<vmem>>, vector<1x4x128xbf16>
    %50 = vector.shape_cast %49 : vector<1x4x128xbf16> to vector<4x128xbf16>
    %cst_46 = arith.constant dense<0.000000e+00> : vector<320x128xf32>
    %51 = tpu.matmul %48, %50, %cst_46 {dimension_numbers = #tpu.dot_dimension_numbers<[1], [0], [0], [1], [0, 0, 1, 1], [], []>} : vector<320x4xbf16>, vector<4x128xbf16>, vector<320x128xf32> -> vector<320x128xf32>
    %52 = arith.addf %46, %51 : vector<320x128xf32>
    %c0_47 = arith.constant 0 : index
    %c0_48 = arith.constant 0 : index
    %53 = vector.load %arg2[%c0_47, %c0_48] : memref<320x1xbf16, #tpu.memory_space<vmem>>, vector<320x1xbf16>
    %54 = arith.extf %53 : vector<320x1xbf16> to vector<320x1xf32>
    %55 = vector.broadcast %54 : vector<320x1xf32> to vector<320x128xf32>
    %56 = arith.mulf %52, %55 : vector<320x128xf32>
    %57 = arith.truncf %56 : vector<320x128xf32> to vector<320x128xbf16>
    %c0_49 = arith.constant 0 : index
    %c0_50 = arith.constant 0 : index
    %58 = vector.load %arg4[%c0_49, %c0_50] : memref<320x128xbf16, #tpu.memory_space<vmem>>, vector<320x128xbf16>
    tpu.vector_store %arg4[%c0_49, %c0_50], %57 {strides = array<i32>} : memref<320x128xbf16, #tpu.memory_space<vmem>>, vector<320x128xbf16>,
    %cst_51 = arith.constant dense<0.000000e+00> : vector<128xf32>
    %59 = vector.multi_reduction <add>, %56, %cst_51 [0] : vector<320x128xf32> to vector<128xf32>
    %60 = vector.shape_cast %59 : vector<128xf32> to vector<1x128xf32>
    %61 = arith.mulf %56, %56 : vector<320x128xf32>
    %cst_52 = arith.constant dense<0.000000e+00> : vector<128xf32>
    %62 = vector.multi_reduction <add>, %61, %cst_52 [0] : vector<320x128xf32> to vector<128xf32>
    %63 = vector.shape_cast %62 : vector<128xf32> to vector<1x128xf32>
    %64 = vector.shape_cast %60 : vector<1x128xf32> to vector<1x1x128xf32>
    %65 = vector.shape_cast %64 : vector<1x1x128xf32> to vector<1x1x128xf32>
    %66 = vector.broadcast %65 : vector<1x1x128xf32> to vector<1x8x128xf32>
    %c0_53 = arith.constant 0 : index
    %c0_54 = arith.constant 0 : index
    %c0_55 = arith.constant 0 : index
    %67 = vector.load %arg5[%c0_53, %c0_54, %c0_55] : memref<1x8x128xf32, #tpu.memory_space<vmem>>, vector<1x8x128xf32>
    tpu.vector_store %arg5[%c0_53, %c0_54, %c0_55], %66 {strides = array<i32>} : memref<1x8x128xf32, #tpu.memory_space<vmem>>, vector<1x8x128xf32>,
    %68 = vector.shape_cast %63 : vector<1x128xf32> to vector<1x1x128xf32>
    %69 = vector.shape_cast %68 : vector<1x1x128xf32> to vector<1x1x128xf32>
    %70 = vector.broadcast %69 : vector<1x1x128xf32> to vector<1x8x128xf32>
    %c0_56 = arith.constant 0 : index
    %c0_57 = arith.constant 0 : index
    %c0_58 = arith.constant 0 : index
    %71 = vector.load %arg6[%c0_56, %c0_57, %c0_58] : memref<1x8x128xf32, #tpu.memory_space<vmem>>, vector<1x8x128xf32>
    tpu.vector_store %arg6[%c0_56, %c0_57, %c0_58], %70 {strides = array<i32>} : memref<1x8x128xf32, #tpu.memory_space<vmem>>, vector<1x8x128xf32>,
    return
  }
  func.func @transform_0(%arg0: i32) -> (i32, i32, i32) {
    %c0_i32 = arith.constant 0 : i32
    %c0_i32_0 = arith.constant 0 : i32
    %c0_i32_1 = arith.constant 0 : i32
    return %arg0, %c0_i32, %c0_i32_0 : i32, i32, i32
  }
  func.func @transform_1(%arg0: i32) -> (i32, i32) {
    %c0_i32 = arith.constant 0 : i32
    %c0_i32_0 = arith.constant 0 : i32
    return %arg0, %c0_i32 : i32, i32
  }
  func.func @transform_2(%arg0: i32) -> (i32, i32, i32) {
    %c0_i32 = arith.constant 0 : i32
    %c0_i32_0 = arith.constant 0 : i32
    %c0_i32_1 = arith.constant 0 : i32
    %c0_i32_2 = arith.constant 0 : i32
    return %c0_i32, %c0_i32_0, %c0_i32_1 : i32, i32, i32
  }
  func.func @transform_3(%arg0: i32) -> (i32, i32) {
    %c0_i32 = arith.constant 0 : i32
    %c0_i32_0 = arith.constant 0 : i32
    return %arg0, %c0_i32 : i32, i32
  }
  func.func @transform_4(%arg0: i32) -> (i32, i32, i32) {
    %c0_i32 = arith.constant 0 : i32
    %c0_i32_0 = arith.constant 0 : i32
    %c0_i32_1 = arith.constant 0 : i32
    return %arg0, %c0_i32, %c0_i32_0 : i32, i32, i32
  }
  func.func @transform_5(%arg0: i32) -> (i32, i32, i32) {
    %c0_i32 = arith.constant 0 : i32
    %c0_i32_0 = arith.constant 0 : i32
    %c0_i32_1 = arith.constant 0 : i32
    return %arg0, %c0_i32, %c0_i32_0 : i32, i32, i32
  }
}

module attributes {stable_mosaic.version = 11 : i64} {
  func.func @_bn_act_kernel(%arg0: i32, %arg1: memref<320x128xbf16, #tpu.memory_space<vmem>>, %arg2: memref<1x128xf32, #tpu.memory_space<vmem>>, %arg3: memref<1x128xf32, #tpu.memory_space<vmem>>, %arg4: memref<320x128xf32, #tpu.memory_space<vmem>>) attributes {dimension_semantics = [#tpu.dimension_semantics<parallel>], iteration_bounds = array<i64: 2>, scalar_prefetch = 0 : i64, scratch_operands = 0 : i64, tpu.core_type = #tpu.core_type<tc>, window_params = [{transform_indices = @transform_0, window_bounds = array<i64: 320, 128>}, {pipeline_mode = #tpu.pipeline_mode<synchronous>, transform_indices = @transform_1, window_bounds = array<i64: 1, 128>}, {pipeline_mode = #tpu.pipeline_mode<synchronous>, transform_indices = @transform_2, window_bounds = array<i64: 1, 128>}, {transform_indices = @transform_3, window_bounds = array<i64: 320, 128>}]} {
    %c0 = arith.constant 0 : index
    %c0_0 = arith.constant 0 : index
    %0 = vector.load %arg1[%c0, %c0_0] : memref<320x128xbf16, #tpu.memory_space<vmem>>, vector<320x128xbf16>
    %1 = arith.extf %0 : vector<320x128xbf16> to vector<320x128xf32>
    %c0_1 = arith.constant 0 : index
    %c0_2 = arith.constant 0 : index
    %2 = vector.load %arg2[%c0_1, %c0_2] : memref<1x128xf32, #tpu.memory_space<vmem>>, vector<1x128xf32>
    %3 = vector.broadcast %2 : vector<1x128xf32> to vector<320x128xf32>
    %4 = arith.mulf %1, %3 : vector<320x128xf32>
    %c0_3 = arith.constant 0 : index
    %c0_4 = arith.constant 0 : index
    %5 = vector.load %arg3[%c0_3, %c0_4] : memref<1x128xf32, #tpu.memory_space<vmem>>, vector<1x128xf32>
    %6 = vector.broadcast %5 : vector<1x128xf32> to vector<320x128xf32>
    %7 = arith.addf %4, %6 : vector<320x128xf32>
    %cst = arith.constant 0.000000e+00 : f32
    %8 = vector.broadcast %cst : f32 to vector<320x128xf32>
    %9 = arith.cmpf oge, %7, %8 : vector<320x128xf32>
    %cst_5 = arith.constant 1.000000e-01 : f32
    %10 = vector.broadcast %cst_5 : f32 to vector<320x128xf32>
    %11 = arith.mulf %10, %7 : vector<320x128xf32>
    %12 = arith.select %9, %7, %11 : vector<320x128xi1>, vector<320x128xf32>
    %c0_6 = arith.constant 0 : index
    %c0_7 = arith.constant 0 : index
    %13 = vector.load %arg4[%c0_6, %c0_7] : memref<320x128xf32, #tpu.memory_space<vmem>>, vector<320x128xf32>
    tpu.vector_store %arg4[%c0_6, %c0_7], %12 {strides = array<i32>} : memref<320x128xf32, #tpu.memory_space<vmem>>, vector<320x128xf32>,
    return
  }
  func.func @transform_0(%arg0: i32) -> (i32, i32) {
    %c0_i32 = arith.constant 0 : i32
    %c0_i32_0 = arith.constant 0 : i32
    return %arg0, %c0_i32 : i32, i32
  }
  func.func @transform_1(%arg0: i32) -> (i32, i32) {
    %c0_i32 = arith.constant 0 : i32
    %c0_i32_0 = arith.constant 0 : i32
    %c0_i32_1 = arith.constant 0 : i32
    return %c0_i32, %c0_i32_0 : i32, i32
  }
  func.func @transform_2(%arg0: i32) -> (i32, i32) {
    %c0_i32 = arith.constant 0 : i32
    %c0_i32_0 = arith.constant 0 : i32
    %c0_i32_1 = arith.constant 0 : i32
    return %c0_i32, %c0_i32_0 : i32, i32
  }
  func.func @transform_3(%arg0: i32) -> (i32, i32) {
    %c0_i32 = arith.constant 0 : i32
    %c0_i32_0 = arith.constant 0 : i32
    return %arg0, %c0_i32 : i32, i32
  }
}

</mosaic_0001>

<llo_original>
// kernel: cnn_block_forward.3
$region0: #{cnn_block_forward.3}
  #allocation0 [shape = 'u32[]', space=smem, size = 0x4, offset = 0x4, fixed_abs, tag = 'smem constant byte address 0x4 - core index']
  #allocation1 [shape = 'u32[72,128]{1,0:T(1,128)}', space=vmem, size = 0x9000, scoped, tag = 'internal scratch']
  %s0 = inlined_call_operand.vmem [shape: bf16[640,128], index: 0, kind: input, shape index: {}]
  %s1 = inlined_call_operand.vmem [shape: f32[1,128], index: 1, kind: input, shape index: {}]
  %s2 = inlined_call_operand.vmem [shape: f32[1,128], index: 2, kind: input, shape index: {}]
  %s3 = inlined_call_operand.vmem [shape: f32[640,128], index: 3, kind: output, shape index: {}]
  %s4 = sld [smem:[#allocation0]]
  $region45: #{cnn_block_forward.3} parent=0
    _
  %s6 = ssub.s32 1, %s4
  %s7 = scalar_select 0, %s6, %s4
  loop: start=0, step=1, limit=4
  $region2: #{cnn_block_forward.3} parent=0 // loop_pre_header
    _
  $region3: #{cnn_block_forward.3} parent=0 // loop_header
    %s9 = sphi 0, %s13
    %p10 = scmp.ge.s32.totalorder %s9, 4
    %s19 = sphi 0, %s21
    %s22 = sphi 0, %s19
    %s23 = sphi 0, %s22
    %s39 = sphi 0, %s23
    %s43 = sphi 0, %s43
    %s45 = sphi 0, %s43
    %s46 = sphi 0, %s45
    %s60 = sphi 0, %s46
    %s64 = sphi 0, %s64
    %s66 = sphi 0, %s64
    %s67 = sphi 0, %s66
    %s81 = sphi 0, %s67
    %s87 = sphi 0, %s89
    %s90 = sphi 0, %s87
    %s91 = sphi 0, %s90
    %s107 = sphi 0, %s91
  $region4: #{cnn_block_forward.3} parent=0 // loop_header_branch
    %12 = sbr.rel (%p10) target = $region8
  $region5: #{cnn_block_forward.3} parent=0 // loop_body
    %s14 = ssub.s32 %s9, 1
    %s15 = ssub.s32 %s9, 2
    %s16 = sadd.s32 %s9, 1
    %s17 = ssub.s32 %s9, %s16
    %p18 = scmp.eq.s32.totalorder %s17, 0
    %s20 = sadd.s32 %s19, 1
    %s21 = scalar_select %p18, %s19, %s20
    %p24 = pneg %p18
    %p25 = scmp.eq.s32.totalorder %s9, 1
    %p26 = por %p24, %p25
    %p27 = scmp.ne.s32.totalorder %s19, %s22
    %p28 = scmp.eq.s32.totalorder %s9, 0
    %p29 = por %p27, %p28
    %p30 = scmp.ne.s32.totalorder %s19, %s22
    %p31 = scmp.eq.s32.totalorder %s14, 1
    %p32 = por %p30, %p31
    %p33 = scmp.ne.s32.totalorder %s22, %s23
    %p34 = scmp.eq.s32.totalorder %s14, 0
    %p35 = por %p33, %p34
    %p36 = scmp.ne.s32.totalorder %s22, %s23
    %p37 = scmp.eq.s32.totalorder %s15, 1
    %p38 = por %p36, %p37
    %p40 = scmp.ne.s32.totalorder %s23, %s39
    %p41 = scmp.eq.s32.totalorder %s15, 0
    %p42 = por %p40, %p41
    %s44 = sadd.s32 %s43, 1
    %p47 = scmp.eq.s32.totalorder %s9, 1
    %p48 = scmp.ne.s32.totalorder %s43, %s45
    %p49 = scmp.eq.s32.totalorder %s9, 0
    %p50 = por %p48, %p49
    %p51 = scmp.ne.s32.totalorder %s43, %s45
    %p52 = scmp.eq.s32.totalorder %s14, 1
    %p53 = por %p51, %p52
    %p54 = scmp.ne.s32.totalorder %s45, %s46
    %p55 = scmp.eq.s32.totalorder %s14, 0
    %p56 = por %p54, %p55
    %p57 = scmp.ne.s32.totalorder %s45, %s46
    %p58 = scmp.eq.s32.totalorder %s15, 1
    %p59 = por %p57, %p58
    %p61 = scmp.ne.s32.totalorder %s46, %s60
    %p62 = scmp.eq.s32.totalorder %s15, 0
    %p63 = por %p61, %p62
    %s65 = sadd.s32 %s64, 1
    %p68 = scmp.eq.s32.totalorder %s9, 1
    %p69 = scmp.ne.s32.totalorder %s64, %s66
    %p70 = scmp.eq.s32.totalorder %s9, 0
    %p71 = por %p69, %p70
    %p72 = scmp.ne.s32.totalorder %s64, %s66
    %p73 = scmp.eq.s32.totalorder %s14, 1
    %p74 = por %p72, %p73
    %p75 = scmp.ne.s32.totalorder %s66, %s67
    %p76 = scmp.eq.s32.totalorder %s14, 0
    %p77 = por %p75, %p76
    %p78 = scmp.ne.s32.totalorder %s66, %s67
    %p79 = scmp.eq.s32.totalorder %s15, 1
    %p80 = por %p78, %p79
    %p82 = scmp.ne.s32.totalorder %s67, %s81
    %p83 = scmp.eq.s32.totalorder %s15, 0
    %p84 = por %p82, %p83
    %s85 = ssub.s32 %s9, %s16
    %p86 = scmp.eq.s32.totalorder %s85, 0
    %s88 = sadd.s32 %s87, 1
    %s89 = scalar_select %p86, %s87, %s88
    %p92 = pneg %p86
    %p93 = scmp.eq.s32.totalorder %s9, 1
    %p94 = por %p92, %p93
    %p95 = scmp.ne.s32.totalorder %s87, %s90
    %p96 = scmp.eq.s32.totalorder %s9, 0
    %p97 = por %p95, %p96
    %p98 = scmp.ne.s32.totalorder %s87, %s90
    %p99 = scmp.eq.s32.totalorder %s14, 1
    %p100 = por %p98, %p99
    %p101 = scmp.ne.s32.totalorder %s90, %s91
    %p102 = scmp.eq.s32.totalorder %s14, 0
    %p103 = por %p101, %p102
    %p104 = scmp.ne.s32.totalorder %s90, %s91
    %p105 = scmp.eq.s32.totalorder %s15, 1
    %p106 = por %p104, %p105
    %p108 = scmp.ne.s32.totalorder %s91, %s107
    %p109 = scmp.eq.s32.totalorder %s15, 0
    %p110 = por %p108, %p109
    %p111 = scmp.le.s32.totalorder 1, %s9
    %p112 = scmp.lt.s32.totalorder %s9, 3
    %p113 = pnand %p111, %p112
    %p114 = pneg %p113
    // Predicated region
    $region9: #{cnn_block_forward.3} parent=5 // pred_check
      _
    $region10: #{cnn_block_forward.3} parent=5 // pred_check_branch
      %116 = sbr.rel (%p113) target = $region12
    $region11: #{cnn_block_forward.3} parent=5 // pred_region
      %s117 = ssub.s32 %s9, 1
      // Predicated region
      $region13: #{cnn_block_forward.3} parent=11 // pred_check
        %p118 = pneg %p56
      $region14: #{cnn_block_forward.3} parent=11 // pred_check_branch
        %120 = sbr.rel (%p118) target = $region16
      $region15: #{cnn_block_forward.3} parent=11 // pred_region
        _
      $region16: #{cnn_block_forward.3} parent=11 // pred_fallthru
        _
      // Predicated region
      $region17: #{cnn_block_forward.3} parent=11 // pred_check
        %p121 = pneg %p77
      $region18: #{cnn_block_forward.3} parent=11 // pred_check_branch
        %123 = sbr.rel (%p121) target = $region20
      $region19: #{cnn_block_forward.3} parent=11 // pred_region
        _
      $region20: #{cnn_block_forward.3} parent=11 // pred_fallthru
        _
    $region12: #{cnn_block_forward.3} parent=5 // pred_fallthru
      _
    %p124 = scmp.lt.s32.totalorder %s9, 2
    // Predicated region
    $region21: #{cnn_block_forward.3} parent=5 // pred_check
      %p125 = pneg %p124
    $region22: #{cnn_block_forward.3} parent=5 // pred_check_branch
      %127 = sbr.rel (%p125) target = $region24
    $region23: #{cnn_block_forward.3} parent=5 // pred_region
      // Predicated region
      $region25: #{cnn_block_forward.3} parent=23 // pred_check
        %p128 = pneg %p29
      $region26: #{cnn_block_forward.3} parent=23 // pred_check_branch
        %130 = sbr.rel (%p128) target = $region28
      $region27: #{cnn_block_forward.3} parent=23 // pred_region
        %s131 = smul.u32 40, %s9
        %p132 = scmp.lt.s32.totalorder %s131, 79
        %s133 = scalar_select %p132, %s131, 79
        %s134 = smul.addr %s133, 4
        %s135 = scalar_lea.vmem %s0, %s134
        %s136 = smul.u32 40, %s9
      $region28: #{cnn_block_forward.3} parent=23 // pred_fallthru
        _
    $region24: #{cnn_block_forward.3} parent=5 // pred_fallthru
      _
    %p137 = scmp.le.s32.totalorder 1, %s9
    %p138 = scmp.lt.s32.totalorder %s9, 3
    %p139 = pnand %p137, %p138
    %p140 = pneg %p139
    // Predicated region
    $region29: #{cnn_block_forward.3} parent=5 // pred_check
      _
    $region30: #{cnn_block_forward.3} parent=5 // pred_check_branch
      %142 = sbr.rel (%p139) target = $region32
    $region31: #{cnn_block_forward.3} parent=5 // pred_region
      %s143 = ssub.s32 %s9, 1
      %s144 = smul.u32 40, %s14
      %p145 = scmp.lt.s32.totalorder %s144, 79
      %s146 = scalar_select %p145, %s144, 79
      %s147 = smul.addr %s146, 4
      %s148 = scalar_lea.vmem %s0, %s147
      %p149 = pneg %p35
      %p150 = pneg %p32
      %p151 = pneg %p56
      %p152 = pneg %p53
      %p153 = pneg %p77
      %p154 = pneg %p74
      %p155 = pneg %p103
      %p156 = pneg %p100
      %s157 = smul.u32 40, %s14
      %p158 = scmp.lt.s32.totalorder %s157, 79
      %s159 = scalar_select %p158, %s157, 79
      %s160 = smul.addr %s159, 8
      %s161 = scalar_lea.vmem %s3, %s160
      %s162 = smul.u32 40, %s14
      %p163 = scmp.lt.s32.totalorder %s162, 79
      %s164 = scalar_select %p163, %s162, 79
      %s165 = smul.addr %s164, 4
      %s166 = scalar_lea.vmem %s0, %s165
      %s167 = smul.u32 40, %s14
      %s168 = smul.u32 40, %s14
      %p169 = scmp.lt.s32.totalorder %s168, 79
      %s170 = scalar_select %p169, %s168, 79
      %s171 = smul.addr %s170, 8
      %s172 = scalar_lea.vmem %s3, %s171
      %s173 = smul.u32 40, %s14
      %v174 = vld [vmem:[%s166] sm:$0xf]
      %v175 = vld [vmem:[%s166 + $0x4] sm:$0xf]
      %v176 = vld [vmem:[%s166 + $0x8] sm:$0xf]
      %v177 = vld [vmem:[%s166 + $0xc] sm:$0xf]
      %v178 = vld [vmem:[%s166 + $0x10] sm:$0xf]
      %v179 = vld [vmem:[%s166 + $0x14] sm:$0xf]
      %v180 = vld [vmem:[%s166 + $0x18] sm:$0xf]
      %v181 = vld [vmem:[%s166 + $0x1c] sm:$0xf]
      %v182 = vld [vmem:[%s166 + $0x20] sm:$0xf]
      %v183 = vld [vmem:[%s166 + $0x24] sm:$0xf]
      %v184 = vld [vmem:[%s166 + $0x28] sm:$0xf]
      %v185 = vld [vmem:[%s166 + $0x2c] sm:$0xf]
      %v186 = vld [vmem:[%s166 + $0x30] sm:$0xf]
      %v187 = vld [vmem:[%s166 + $0x34] sm:$0xf]
      %v188 = vld [vmem:[%s166 + $0x38] sm:$0xf]
      %v189 = vld [vmem:[%s166 + $0x3c] sm:$0xf]
      %v190 = vld [vmem:[%s166 + $0x40] sm:$0xf]
      %v191 = vld [vmem:[%s166 + $0x44] sm:$0xf]
      %v192 = vld [vmem:[%s166 + $0x48] sm:$0xf]
      %v193 = vld [vmem:[%s166 + $0x4c] sm:$0xf]
      %v194 = vld [vmem:[%s166 + $0x50] sm:$0xf]
      %v195 = vld [vmem:[%s166 + $0x54] sm:$0xf]
      %v196 = vld [vmem:[%s166 + $0x58] sm:$0xf]
      %v197 = vld [vmem:[%s166 + $0x5c] sm:$0xf]
      %v198 = vld [vmem:[%s166 + $0x60] sm:$0xf]
      %v199 = vld [vmem:[%s166 + $0x64] sm:$0xf]
      %v200 = vld [vmem:[%s166 + $0x68] sm:$0xf]
      %v201 = vld [vmem:[%s166 + $0x6c] sm:$0xf]
      %v202 = vld [vmem:[%s166 + $0x70] sm:$0xf]
      %v203 = vld [vmem:[%s166 + $0x74] sm:$0xf]
      %v204 = vld [vmem:[%s166 + $0x78] sm:$0xf]
      %v205 = vld [vmem:[%s166 + $0x7c] sm:$0xf]
      %v206 = vld [vmem:[%s166 + $0x80] sm:$0xf]
      %v207 = vld [vmem:[%s166 + $0x84] sm:$0xf]
      %v208 = vld [vmem:[%s166 + $0x88] sm:$0xf]
      %v209 = vld [vmem:[%s166 + $0x8c] sm:$0xf]
      %v210 = vld [vmem:[%s166 + $0x90] sm:$0xf]
      %v211 = vld [vmem:[%s166 + $0x94] sm:$0xf]
      %v212 = vld [vmem:[%s166 + $0x98] sm:$0xf]
      %v213 = vld [vmem:[%s166 + $0x9c] sm:$0xf]
      %v214 = vunpack.c.l.bf16 %v174
      %v215 = vunpack.c.l.bf16 %v175
      %v216 = vunpack.c.l.bf16 %v176
      %v217 = vunpack.c.l.bf16 %v177
      %v218 = vunpack.c.l.bf16 %v178
      %v219 = vunpack.c.l.bf16 %v179
      %v220 = vunpack.c.l.bf16 %v180
      %v221 = vunpack.c.l.bf16 %v181
      %v222 = vunpack.c.l.bf16 %v182
      %v223 = vunpack.c.l.bf16 %v183
      %v224 = vunpack.c.l.bf16 %v184
      %v225 = vunpack.c.l.bf16 %v185
      %v226 = vunpack.c.l.bf16 %v186
      %v227 = vunpack.c.l.bf16 %v187
      %v228 = vunpack.c.l.bf16 %v188
      %v229 = vunpack.c.l.bf16 %v189
      %v230 = vunpack.c.l.bf16 %v190
      %v231 = vunpack.c.l.bf16 %v191
      %v232 = vunpack.c.l.bf16 %v192
      %v233 = vunpack.c.l.bf16 %v193
      %v234 = vunpack.c.l.bf16 %v194
      %v235 = vunpack.c.l.bf16 %v195
      %v236 = vunpack.c.l.bf16 %v196
      %v237 = vunpack.c.l.bf16 %v197
      %v238 = vunpack.c.l.bf16 %v198
      %v239 = vunpack.c.l.bf16 %v199
      %v240 = vunpack.c.l.bf16 %v200
      %v241 = vunpack.c.l.bf16 %v201
      %v242 = vunpack.c.l.bf16 %v202
      %v243 = vunpack.c.l.bf16 %v203
      %v244 = vunpack.c.l.bf16 %v204
      %v245 = vunpack.c.l.bf16 %v205
      %v246 = vunpack.c.l.bf16 %v206
      %v247 = vunpack.c.l.bf16 %v207
      %v248 = vunpack.c.l.bf16 %v208
      %v249 = vunpack.c.l.bf16 %v209
      %v250 = vunpack.c.l.bf16 %v210
      %v251 = vunpack.c.l.bf16 %v211
      %v252 = vunpack.c.l.bf16 %v212
      %v253 = vunpack.c.l.bf16 %v213
      %v254 = vld [vmem:[%s1] sm:$0x1]
      %v256 = vperm.slane %v254, 0
      %v258 = vmul.f32 %v214, %v256
      %v259 = vmul.f32 %v215, %v256
      %v260 = vmul.f32 %v216, %v256
      %v261 = vmul.f32 %v217, %v256
      %v262 = vmul.f32 %v218, %v256
      %v263 = vmul.f32 %v219, %v256
      %v264 = vmul.f32 %v220, %v256
      %v265 = vmul.f32 %v221, %v256
      %v266 = vmul.f32 %v222, %v256
      %v267 = vmul.f32 %v223, %v256
      %v268 = vmul.f32 %v224, %v256
      %v269 = vmul.f32 %v225, %v256
      %v270 = vmul.f32 %v226, %v256
      %v271 = vmul.f32 %v227, %v256
      %v272 = vmul.f32 %v228, %v256
      %v273 = vmul.f32 %v229, %v256
      %v274 = vmul.f32 %v230, %v256
      %v275 = vmul.f32 %v231, %v256
      %v276 = vmul.f32 %v232, %v256
      %v277 = vmul.f32 %v233, %v256
      %v278 = vmul.f32 %v234, %v256
      %v279 = vmul.f32 %v235, %v256
      %v280 = vmul.f32 %v236, %v256
      %v281 = vmul.f32 %v237, %v256
      %v282 = vmul.f32 %v238, %v256
      %v283 = vmul.f32 %v239, %v256
      %v284 = vmul.f32 %v240, %v256
      %v285 = vmul.f32 %v241, %v256
      %v286 = vmul.f32 %v242, %v256
      %v287 = vmul.f32 %v243, %v256
      %v288 = vmul.f32 %v244, %v256
      %v289 = vmul.f32 %v245, %v256
      %v290 = vmul.f32 %v246, %v256
      %v291 = vmul.f32 %v247, %v256
      %v292 = vmul.f32 %v248, %v256
      %v293 = vmul.f32 %v249, %v256
      %v294 = vmul.f32 %v250, %v256
      %v295 = vmul.f32 %v251, %v256
      %v296 = vmul.f32 %v252, %v256
      %v297 = vmul.f32 %v253, %v256
      %v298 = vld [vmem:[%s2] sm:$0x1]
      %v300 = vperm.slane %v298, 0
      %v302 = vadd.f32 %v258, %v300
      %v303 = vadd.f32 %v259, %v300
      %v304 = vadd.f32 %v260, %v300
      %v305 = vadd.f32 %v261, %v300
      %v306 = vadd.f32 %v262, %v300
      %v307 = vadd.f32 %v263, %v300
      %v308 = vadd.f32 %v264, %v300
      %v309 = vadd.f32 %v265, %v300
      %v310 = vadd.f32 %v266, %v300
      %v311 = vadd.f32 %v267, %v300
      %v312 = vadd.f32 %v268, %v300
      %v313 = vadd.f32 %v269, %v300
      %v314 = vadd.f32 %v270, %v300
      %v315 = vadd.f32 %v271, %v300
      %v316 = vadd.f32 %v272, %v300
      %v317 = vadd.f32 %v273, %v300
      %v318 = vadd.f32 %v274, %v300
      %v319 = vadd.f32 %v275, %v300
      %v320 = vadd.f32 %v276, %v300
      %v321 = vadd.f32 %v277, %v300
      %v322 = vadd.f32 %v278, %v300
      %v323 = vadd.f32 %v279, %v300
      %v324 = vadd.f32 %v280, %v300
      %v325 = vadd.f32 %v281, %v300
      %v326 = vadd.f32 %v282, %v300
      %v327 = vadd.f32 %v283, %v300
      %v328 = vadd.f32 %v284, %v300
      %v329 = vadd.f32 %v285, %v300
      %v330 = vadd.f32 %v286, %v300
      %v331 = vadd.f32 %v287, %v300
      %v332 = vadd.f32 %v288, %v300
      %v333 = vadd.f32 %v289, %v300
      %v334 = vadd.f32 %v290, %v300
      %v335 = vadd.f32 %v291, %v300
      %v336 = vadd.f32 %v292, %v300
      %v337 = vadd.f32 %v293, %v300
      %v338 = vadd.f32 %v294, %v300
      %v339 = vadd.f32 %v295, %v300
      %v340 = vadd.f32 %v296, %v300
      %v341 = vadd.f32 %v297, %v300
      %vm342 = vcmp.ge.f32.partialorder %v302, 0.0
      %vm343 = vcmp.ge.f32.partialorder %v303, 0.0
      %vm344 = vcmp.ge.f32.partialorder %v304, 0.0
      %vm345 = vcmp.ge.f32.partialorder %v305, 0.0
      %vm346 = vcmp.ge.f32.partialorder %v306, 0.0
      %vm347 = vcmp.ge.f32.partialorder %v307, 0.0
      %vm348 = vcmp.ge.f32.partialorder %v308, 0.0
      %vm349 = vcmp.ge.f32.partialorder %v309, 0.0
      %vm350 = vcmp.ge.f32.partialorder %v310, 0.0
      %vm351 = vcmp.ge.f32.partialorder %v311, 0.0
      %vm352 = vcmp.ge.f32.partialorder %v312, 0.0
      %vm353 = vcmp.ge.f32.partialorder %v313, 0.0
      %vm354 = vcmp.ge.f32.partialorder %v314, 0.0
      %vm355 = vcmp.ge.f32.partialorder %v315, 0.0
      %vm356 = vcmp.ge.f32.partialorder %v316, 0.0
      %vm357 = vcmp.ge.f32.partialorder %v317, 0.0
      %vm358 = vcmp.ge.f32.partialorder %v318, 0.0
      %vm359 = vcmp.ge.f32.partialorder %v319, 0.0
      %vm360 = vcmp.ge.f32.partialorder %v320, 0.0
      %vm361 = vcmp.ge.f32.partialorder %v321, 0.0
      %vm362 = vcmp.ge.f32.partialorder %v322, 0.0
      %vm363 = vcmp.ge.f32.partialorder %v323, 0.0
      %vm364 = vcmp.ge.f32.partialorder %v324, 0.0
      %vm365 = vcmp.ge.f32.partialorder %v325, 0.0
      %vm366 = vcmp.ge.f32.partialorder %v326, 0.0
      %vm367 = vcmp.ge.f32.partialorder %v327, 0.0
      %vm368 = vcmp.ge.f32.partialorder %v328, 0.0
      %vm369 = vcmp.ge.f32.partialorder %v329, 0.0
      %vm370 = vcmp.ge.f32.partialorder %v330, 0.0
      %vm371 = vcmp.ge.f32.partialorder %v331, 0.0
      %vm372 = vcmp.ge.f32.partialorder %v332, 0.0
      %vm373 = vcmp.ge.f32.partialorder %v333, 0.0
      %vm374 = vcmp.ge.f32.partialorder %v334, 0.0
      %vm375 = vcmp.ge.f32.partialorder %v335, 0.0
      %vm376 = vcmp.ge.f32.partialorder %v336, 0.0
      %vm377 = vcmp.ge.f32.partialorder %v337, 0.0
      %vm378 = vcmp.ge.f32.partialorder %v338, 0.0
      %vm379 = vcmp.ge.f32.partialorder %v339, 0.0
      %vm380 = vcmp.ge.f32.partialorder %v340, 0.0
      %vm381 = vcmp.ge.f32.partialorder %v341, 0.0
      %v382 = vmul.f32 %v302, 0.1
      %v383 = vmul.f32 %v303, 0.1
      %v384 = vmul.f32 %v304, 0.1
      %v385 = vmul.f32 %v305, 0.1
      %v386 = vmul.f32 %v306, 0.1
      %v387 = vmul.f32 %v307, 0.1
      %v388 = vmul.f32 %v308, 0.1
      %v389 = vmul.f32 %v309, 0.1
      %v390 = vmul.f32 %v310, 0.1
      %v391 = vmul.f32 %v311, 0.1
      %v392 = vmul.f32 %v312, 0.1
      %v393 = vmul.f32 %v313, 0.1
      %v394 = vmul.f32 %v314, 0.1
      %v395 = vmul.f32 %v315, 0.1
      %v396 = vmul.f32 %v316, 0.1
      %v397 = vmul.f32 %v317, 0.1
      %v398 = vmul.f32 %v318, 0.1
      %v399 = vmul.f32 %v319, 0.1
      %v400 = vmul.f32 %v320, 0.1
      %v401 = vmul.f32 %v321, 0.1
      %v402 = vmul.f32 %v322, 0.1
      %v403 = vmul.f32 %v323, 0.1
      %v404 = vmul.f32 %v324, 0.1
      %v405 = vmul.f32 %v325, 0.1
      %v406 = vmul.f32 %v326, 0.1
      %v407 = vmul.f32 %v327, 0.1
      %v408 = vmul.f32 %v328, 0.1
      %v409 = vmul.f32 %v329, 0.1
      %v410 = vmul.f32 %v330, 0.1
      %v411 = vmul.f32 %v331, 0.1
      %v412 = vmul.f32 %v332, 0.1
      %v413 = vmul.f32 %v333, 0.1
      %v414 = vmul.f32 %v334, 0.1
      %v415 = vmul.f32 %v335, 0.1
      %v416 = vmul.f32 %v336, 0.1
      %v417 = vmul.f32 %v337, 0.1
      %v418 = vmul.f32 %v338, 0.1
      %v419 = vmul.f32 %v339, 0.1
      %v420 = vmul.f32 %v340, 0.1
      %v421 = vmul.f32 %v341, 0.1
      %v422 = vsel %vm342, %v302, %v382
      %v423 = vsel %vm343, %v303, %v383
      %v424 = vsel %vm344, %v304, %v384
      %v425 = vsel %vm345, %v305, %v385
      %v426 = vsel %vm346, %v306, %v386
      %v427 = vsel %vm347, %v307, %v387
      %v428 = vsel %vm348, %v308, %v388
      %v429 = vsel %vm349, %v309, %v389
      %v430 = vsel %vm350, %v310, %v390
      %v431 = vsel %vm351, %v311, %v391
      %v432 = vsel %vm352, %v312, %v392
      %v433 = vsel %vm353, %v313, %v393
      %v434 = vsel %vm354, %v314, %v394
      %v435 = vsel %vm355, %v315, %v395
      %v436 = vsel %vm356, %v316, %v396
      %v437 = vsel %vm357, %v317, %v397
      %v438 = vsel %vm358, %v318, %v398
      %v439 = vsel %vm359, %v319, %v399
      %v440 = vsel %vm360, %v320, %v400
      %v441 = vsel %vm361, %v321, %v401
      %v442 = vsel %vm362, %v322, %v402
      %v443 = vsel %vm363, %v323, %v403
      %v444 = vsel %vm364, %v324, %v404
      %v445 = vsel %vm365, %v325, %v405
      %v446 = vsel %vm366, %v326, %v406
      %v447 = vsel %vm367, %v327, %v407
      %v448 = vsel %vm368, %v328, %v408
      %v449 = vsel %vm369, %v329, %v409
      %v450 = vsel %vm370, %v330, %v410
      %v451 = vsel %vm371, %v331, %v411
      %v452 = vsel %vm372, %v332, %v412
      %v453 = vsel %vm373, %v333, %v413
      %v454 = vsel %vm374, %v334, %v414
      %v455 = vsel %vm375, %v335, %v415
      %v456 = vsel %vm376, %v336, %v416
      %v457 = vsel %vm377, %v337, %v417
      %v458 = vsel %vm378, %v338, %v418
      %v459 = vsel %vm379, %v339, %v419
      %v460 = vsel %vm380, %v340, %v420
      %v461 = vsel %vm381, %v341, %v421
      %462 = vst [vmem:[%s172] sm:$0xff] %v422
      %463 = vst [vmem:[%s172 + $0x8] sm:$0xff] %v423
      %464 = vst [vmem:[%s172 + $0x10] sm:$0xff] %v424
      %465 = vst [vmem:[%s172 + $0x18] sm:$0xff] %v425
      %466 = vst [vmem:[%s172 + $0x20] sm:$0xff] %v426
      %467 = vst [vmem:[%s172 + $0x28] sm:$0xff] %v427
      %468 = vst [vmem:[%s172 + $0x30] sm:$0xff] %v428
      %469 = vst [vmem:[%s172 + $0x38] sm:$0xff] %v429
      %470 = vst [vmem:[%s172 + $0x40] sm:$0xff] %v430
      %471 = vst [vmem:[%s172 + $0x48] sm:$0xff] %v431
      %472 = vst [vmem:[%s172 + $0x50] sm:$0xff] %v432
      %473 = vst [vmem:[%s172 + $0x58] sm:$0xff] %v433
      %474 = vst [vmem:[%s172 + $0x60] sm:$0xff] %v434
      %475 = vst [vmem:[%s172 + $0x68] sm:$0xff] %v435
      %476 = vst [vmem:[%s172 + $0x70] sm:$0xff] %v436
      %477 = vst [vmem:[%s172 + $0x78] sm:$0xff] %v437
      %478 = vst [vmem:[%s172 + $0x80] sm:$0xff] %v438
      %479 = vst [vmem:[%s172 + $0x88] sm:$0xff] %v439
      %480 = vst [vmem:[%s172 + $0x90] sm:$0xff] %v440
      %481 = vst [vmem:[%s172 + $0x98] sm:$0xff] %v441
      %482 = vst [vmem:[%s172 + $0xa0] sm:$0xff] %v442
      %483 = vst [vmem:[%s172 + $0xa8] sm:$0xff] %v443
      %484 = vst [vmem:[%s172 + $0xb0] sm:$0xff] %v444
      %485 = vst [vmem:[%s172 + $0xb8] sm:$0xff] %v445
      %486 = vst [vmem:[%s172 + $0xc0] sm:$0xff] %v446
      %487 = vst [vmem:[%s172 + $0xc8] sm:$0xff] %v447
      %488 = vst [vmem:[%s172 + $0xd0] sm:$0xff] %v448
      %489 = vst [vmem:[%s172 + $0xd8] sm:$0xff] %v449
      %490 = vst [vmem:[%s172 + $0xe0] sm:$0xff] %v450
      %491 = vst [vmem:[%s172 + $0xe8] sm:$0xff] %v451
      %492 = vst [vmem:[%s172 + $0xf0] sm:$0xff] %v452
      %493 = vst [vmem:[%s172 + $0xf8] sm:$0xff] %v453
      %494 = vst [vmem:[%s172 + $0x100] sm:$0xff] %v454
      %495 = vst [vmem:[%s172 + $0x108] sm:$0xff] %v455
      %496 = vst [vmem:[%s172 + $0x110] sm:$0xff] %v456
      %497 = vst [vmem:[%s172 + $0x118] sm:$0xff] %v457
      %498 = vst [vmem:[%s172 + $0x120] sm:$0xff] %v458
      %499 = vst [vmem:[%s172 + $0x128] sm:$0xff] %v459
      %500 = vst [vmem:[%s172 + $0x130] sm:$0xff] %v460
      %501 = vst [vmem:[%s172 + $0x138] sm:$0xff] %v461
      %s502 = smul.u32 40, %s14
      %p503 = scmp.lt.s32.totalorder %s502, 79
      %s504 = scalar_select %p503, %s502, 79
      %s505 = smul.addr %s504, 8
      %s506 = scalar_lea.vmem %s3, %s505
      // Predicated region
      $region33: #{cnn_block_forward.3} parent=31 // pred_check
        %p507 = pneg %p100
      $region34: #{cnn_block_forward.3} parent=31 // pred_check_branch
        %509 = sbr.rel (%p507) target = $region36
      $region35: #{cnn_block_forward.3} parent=31 // pred_region
        %s510 = smul.u32 40, %s14
      $region36: #{cnn_block_forward.3} parent=31 // pred_fallthru
        _
    $region32: #{cnn_block_forward.3} parent=5 // pred_fallthru
      _
    %p511 = scmp.le.s32.totalorder 2, %s9
    // Predicated region
    $region37: #{cnn_block_forward.3} parent=5 // pred_check
      %p512 = pneg %p511
    $region38: #{cnn_block_forward.3} parent=5 // pred_check_branch
      %514 = sbr.rel (%p512) target = $region40
    $region39: #{cnn_block_forward.3} parent=5 // pred_region
      %s515 = ssub.s32 %s9, 2
      // Predicated region
      $region41: #{cnn_block_forward.3} parent=39 // pred_check
        %p516 = pneg %p106
      $region42: #{cnn_block_forward.3} parent=39 // pred_check_branch
        %518 = sbr.rel (%p516) target = $region44
      $region43: #{cnn_block_forward.3} parent=39 // pred_region
        %s519 = smul.u32 40, %s15
        %p520 = scmp.lt.s32.totalorder %s519, 79
        %s521 = scalar_select %p520, %s519, 79
        %s522 = smul.addr %s521, 8
        %s523 = scalar_lea.vmem %s3, %s522
      $region44: #{cnn_block_forward.3} parent=39 // pred_fallthru
        _
    $region40: #{cnn_block_forward.3} parent=5 // pred_fallthru
      _
  $region6: #{cnn_block_forward.3} parent=0 // loop_footer
    %s13 = sadd.s32 1, %s9
  $region7: #{cnn_block_forward.3} parent=0 // loop_footer_branch
    %8 = sbr.rel target = $region3
  $region8: #{cnn_block_forward.3} parent=0 // loop_exit
    _

// kernel: cnn_block_forward.2
$region0: #{cnn_block_forward.2}
  #allocation0 [shape = 'u32[]', space=smem, size = 0x4, offset = 0x4, fixed_abs, tag = 'smem constant byte address 0x4 - core index']
  #allocation1 [shape = 'u32[72,128]{1,0:T(1,128)}', space=vmem, size = 0x9000, scoped, tag = 'internal scratch']
  %s0 = inlined_call_operand.vmem [shape: bf16[2,362,4], index: 0, kind: input, shape index: {}]
  %s1 = inlined_call_operand.vmem [shape: bf16[640,1], index: 1, kind: input, shape index: {}]
  %s2 = inlined_call_operand.vmem [shape: bf16[9,4,128], index: 2, kind: input, shape index: {}]
  %s3 = inlined_call_operand.vmem [shape: bf16[640,128], index: 3, kind: output, shape index: {0}]
  %s4 = inlined_call_operand.vmem [shape: f32[2,8,128], index: 4, kind: output, shape index: {1}]
  %s5 = inlined_call_operand.vmem [shape: f32[2,8,128], index: 5, kind: output, shape index: {2}]
  %6 = xla_tuple %s3, %s4, %s5
  %s7 = sld [smem:[#allocation0]]
  $region61: #{cnn_block_forward.2} parent=0
    _
  %s9 = ssub.s32 1, %s7
  %s10 = scalar_select 0, %s9, %s7
  loop: start=0, step=1, limit=4
  $region2: #{cnn_block_forward.2} parent=0 // loop_pre_header
    _
  $region3: #{cnn_block_forward.2} parent=0 // loop_header
    %s12 = sphi 0, %s16
    %p13 = scmp.ge.s32.totalorder %s12, 4
    %s22 = sphi 0, %s24
    %s25 = sphi 0, %s22
    %s26 = sphi 0, %s25
    %s42 = sphi 0, %s26
    %s48 = sphi 0, %s50
    %s51 = sphi 0, %s48
    %s52 = sphi 0, %s51
    %s68 = sphi 0, %s52
    %s72 = sphi 0, %s72
    %s74 = sphi 0, %s72
    %s75 = sphi 0, %s74
    %s89 = sphi 0, %s75
    %s95 = sphi 0, %s97
    %s98 = sphi 0, %s95
    %s99 = sphi 0, %s98
    %s115 = sphi 0, %s99
    %s121 = sphi 0, %s123
    %s124 = sphi 0, %s121
    %s125 = sphi 0, %s124
    %s141 = sphi 0, %s125
    %s147 = sphi 0, %s149
    %s150 = sphi 0, %s147
    %s151 = sphi 0, %s150
    %s167 = sphi 0, %s151
  $region4: #{cnn_block_forward.2} parent=0 // loop_header_branch
    %15 = sbr.rel (%p13) target = $region8
  $region5: #{cnn_block_forward.2} parent=0 // loop_body
    %s17 = ssub.s32 %s12, 1
    %s18 = ssub.s32 %s12, 2
    %s19 = sadd.s32 %s12, 1
    %s20 = ssub.s32 %s12, %s19
    %p21 = scmp.eq.s32.totalorder %s20, 0
    %s23 = sadd.s32 %s22, 1
    %s24 = scalar_select %p21, %s22, %s23
    %p27 = pneg %p21
    %p28 = scmp.eq.s32.totalorder %s12, 1
    %p29 = por %p27, %p28
    %p30 = scmp.ne.s32.totalorder %s22, %s25
    %p31 = scmp.eq.s32.totalorder %s12, 0
    %p32 = por %p30, %p31
    %p33 = scmp.ne.s32.totalorder %s22, %s25
    %p34 = scmp.eq.s32.totalorder %s17, 1
    %p35 = por %p33, %p34
    %p36 = scmp.ne.s32.totalorder %s25, %s26
    %p37 = scmp.eq.s32.totalorder %s17, 0
    %p38 = por %p36, %p37
    %p39 = scmp.ne.s32.totalorder %s25, %s26
    %p40 = scmp.eq.s32.totalorder %s18, 1
    %p41 = por %p39, %p40
    %p43 = scmp.ne.s32.totalorder %s26, %s42
    %p44 = scmp.eq.s32.totalorder %s18, 0
    %p45 = por %p43, %p44
    %s46 = ssub.s32 %s12, %s19
    %p47 = scmp.eq.s32.totalorder %s46, 0
    %s49 = sadd.s32 %s48, 1
    %s50 = scalar_select %p47, %s48, %s49
    %p53 = pneg %p47
    %p54 = scmp.eq.s32.totalorder %s12, 1
    %p55 = por %p53, %p54
    %p56 = scmp.ne.s32.totalorder %s48, %s51
    %p57 = scmp.eq.s32.totalorder %s12, 0
    %p58 = por %p56, %p57
    %p59 = scmp.ne.s32.totalorder %s48, %s51
    %p60 = scmp.eq.s32.totalorder %s17, 1
    %p61 = por %p59, %p60
    %p62 = scmp.ne.s32.totalorder %s51, %s52
    %p63 = scmp.eq.s32.totalorder %s17, 0
    %p64 = por %p62, %p63
    %p65 = scmp.ne.s32.totalorder %s51, %s52
    %p66 = scmp.eq.s32.totalorder %s18, 1
    %p67 = por %p65, %p66
    %p69 = scmp.ne.s32.totalorder %s52, %s68
    %p70 = scmp.eq.s32.totalorder %s18, 0
    %p71 = por %p69, %p70
    %s73 = sadd.s32 %s72, 1
    %p76 = scmp.eq.s32.totalorder %s12, 1
    %p77 = scmp.ne.s32.totalorder %s72, %s74
    %p78 = scmp.eq.s32.totalorder %s12, 0
    %p79 = por %p77, %p78
    %p80 = scmp.ne.s32.totalorder %s72, %s74
    %p81 = scmp.eq.s32.totalorder %s17, 1
    %p82 = por %p80, %p81
    %p83 = scmp.ne.s32.totalorder %s74, %s75
    %p84 = scmp.eq.s32.totalorder %s17, 0
    %p85 = por %p83, %p84
    %p86 = scmp.ne.s32.totalorder %s74, %s75
    %p87 = scmp.eq.s32.totalorder %s18, 1
    %p88 = por %p86, %p87
    %p90 = scmp.ne.s32.totalorder %s75, %s89
    %p91 = scmp.eq.s32.totalorder %s18, 0
    %p92 = por %p90, %p91
    %s93 = ssub.s32 %s12, %s19
    %p94 = scmp.eq.s32.totalorder %s93, 0
    %s96 = sadd.s32 %s95, 1
    %s97 = scalar_select %p94, %s95, %s96
    %p100 = pneg %p94
    %p101 = scmp.eq.s32.totalorder %s12, 1
    %p102 = por %p100, %p101
    %p103 = scmp.ne.s32.totalorder %s95, %s98
    %p104 = scmp.eq.s32.totalorder %s12, 0
    %p105 = por %p103, %p104
    %p106 = scmp.ne.s32.totalorder %s95, %s98
    %p107 = scmp.eq.s32.totalorder %s17, 1
    %p108 = por %p106, %p107
    %p109 = scmp.ne.s32.totalorder %s98, %s99
    %p110 = scmp.eq.s32.totalorder %s17, 0
    %p111 = por %p109, %p110
    %p112 = scmp.ne.s32.totalorder %s98, %s99
    %p113 = scmp.eq.s32.totalorder %s18, 1
    %p114 = por %p112, %p113
    %p116 = scmp.ne.s32.totalorder %s99, %s115
    %p117 = scmp.eq.s32.totalorder %s18, 0
    %p118 = por %p116, %p117
    %s119 = ssub.s32 %s12, %s19
    %p120 = scmp.eq.s32.totalorder %s119, 0
    %s122 = sadd.s32 %s121, 1
    %s123 = scalar_select %p120, %s121, %s122
    %p126 = pneg %p120
    %p127 = scmp.eq.s32.totalorder %s12, 1
    %p128 = por %p126, %p127
    %p129 = scmp.ne.s32.totalorder %s121, %s124
    %p130 = scmp.eq.s32.totalorder %s12, 0
    %p131 = por %p129, %p130
    %p132 = scmp.ne.s32.totalorder %s121, %s124
    %p133 = scmp.eq.s32.totalorder %s17, 1
    %p134 = por %p132, %p133
    %p135 = scmp.ne.s32.totalorder %s124, %s125
    %p136 = scmp.eq.s32.totalorder %s17, 0
    %p137 = por %p135, %p136
    %p138 = scmp.ne.s32.totalorder %s124, %s125
    %p139 = scmp.eq.s32.totalorder %s18, 1
    %p140 = por %p138, %p139
    %p142 = scmp.ne.s32.totalorder %s125, %s141
    %p143 = scmp.eq.s32.totalorder %s18, 0
    %p144 = por %p142, %p143
    %s145 = ssub.s32 %s12, %s19
    %p146 = scmp.eq.s32.totalorder %s145, 0
    %s148 = sadd.s32 %s147, 1
    %s149 = scalar_select %p146, %s147, %s148
    %p152 = pneg %p146
    %p153 = scmp.eq.s32.totalorder %s12, 1
    %p154 = por %p152, %p153
    %p155 = scmp.ne.s32.totalorder %s147, %s150
    %p156 = scmp.eq.s32.totalorder %s12, 0
    %p157 = por %p155, %p156
    %p158 = scmp.ne.s32.totalorder %s147, %s150
    %p159 = scmp.eq.s32.totalorder %s17, 1
    %p160 = por %p158, %p159
    %p161 = scmp.ne.s32.totalorder %s150, %s151
    %p162 = scmp.eq.s32.totalorder %s17, 0
    %p163 = por %p161, %p162
    %p164 = scmp.ne.s32.totalorder %s150, %s151
    %p165 = scmp.eq.s32.totalorder %s18, 1
    %p166 = por %p164, %p165
    %p168 = scmp.ne.s32.totalorder %s151, %s167
    %p169 = scmp.eq.s32.totalorder %s18, 0
    %p170 = por %p168, %p169
    %p171 = scmp.le.s32.totalorder 1, %s12
    %p172 = scmp.lt.s32.totalorder %s12, 3
    %p173 = pnand %p171, %p172
    %p174 = pneg %p173
    // Predicated region
    $region9: #{cnn_block_forward.2} parent=5 // pred_check
      _
    $region10: #{cnn_block_forward.2} parent=5 // pred_check_branch
      %176 = sbr.rel (%p173) target = $region12
    $region11: #{cnn_block_forward.2} parent=5 // pred_region
      %s177 = ssub.s32 %s12, 1
      // Predicated region
      $region13: #{cnn_block_forward.2} parent=11 // pred_check
        %p178 = pneg %p85
      $region14: #{cnn_block_forward.2} parent=11 // pred_check_branch
        %180 = sbr.rel (%p178) target = $region16
      $region15: #{cnn_block_forward.2} parent=11 // pred_region
        _
      $region16: #{cnn_block_forward.2} parent=11 // pred_fallthru
        _
    $region12: #{cnn_block_forward.2} parent=5 // pred_fallthru
      _
    %p181 = scmp.lt.s32.totalorder %s12, 2
    // Predicated region
    $region17: #{cnn_block_forward.2} parent=5 // pred_check
      %p182 = pneg %p181
    $region18: #{cnn_block_forward.2} parent=5 // pred_check_branch
      %184 = sbr.rel (%p182) target = $region20
    $region19: #{cnn_block_forward.2} parent=5 // pred_region
      // Predicated region
      $region21: #{cnn_block_forward.2} parent=19 // pred_check
        %p185 = pneg %p32
      $region22: #{cnn_block_forward.2} parent=19 // pred_check_branch
        %187 = sbr.rel (%p185) target = $region24
      $region23: #{cnn_block_forward.2} parent=19 // pred_region
        %p188 = scmp.lt.s32.totalorder %s12, 1
        %s189 = scalar_select %p188, %s12, 1
        %s190 = smul.addr %s189, 46
        %s191 = smul.addr %s190, 4
        %s192 = scalar_lea.vmem %s0, %s191
      $region24: #{cnn_block_forward.2} parent=19 // pred_fallthru
        _
      // Predicated region
      $region25: #{cnn_block_forward.2} parent=19 // pred_check
        %p193 = pneg %p58
      $region26: #{cnn_block_forward.2} parent=19 // pred_check_branch
        %195 = sbr.rel (%p193) target = $region28
      $region27: #{cnn_block_forward.2} parent=19 // pred_region
        %s196 = smul.u32 40, %s12
        %p197 = scmp.lt.s32.totalorder %s196, 79
        %s198 = scalar_select %p197, %s196, 79
        %s199 = smul.addr %s198, 4
        %s200 = scalar_lea.vmem %s1, %s199
        %s201 = smul.u32 40, %s12
      $region28: #{cnn_block_forward.2} parent=19 // pred_fallthru
        _
    $region20: #{cnn_block_forward.2} parent=5 // pred_fallthru
      _
    %p202 = scmp.le.s32.totalorder 1, %s12
    %p203 = scmp.lt.s32.totalorder %s12, 3
    %p204 = pnand %p202, %p203
    %p205 = pneg %p204
    // Predicated region
    $region29: #{cnn_block_forward.2} parent=5 // pred_check
      _
    $region30: #{cnn_block_forward.2} parent=5 // pred_check_branch
      %207 = sbr.rel (%p204) target = $region32
    $region31: #{cnn_block_forward.2} parent=5 // pred_region
      %s208 = ssub.s32 %s12, 1
      %p209 = scmp.lt.s32.totalorder %s17, 1
      %s210 = scalar_select %p209, %s17, 1
      %s211 = smul.addr %s210, 46
      %s212 = smul.addr %s211, 4
      %s213 = scalar_lea.vmem %s0, %s212
      %p214 = pneg %p38
      %p215 = pneg %p35
      %s216 = smul.u32 40, %s17
      %p217 = scmp.lt.s32.totalorder %s216, 79
      %s218 = scalar_select %p217, %s216, 79
      %s219 = smul.addr %s218, 4
      %s220 = scalar_lea.vmem %s1, %s219
      %p221 = pneg %p64
      %p222 = pneg %p61
      %p223 = pneg %p85
      %p224 = pneg %p82
      %p225 = pneg %p111
      %p226 = pneg %p108
      %s227 = smul.u32 40, %s17
      %p228 = scmp.lt.s32.totalorder %s227, 79
      %s229 = scalar_select %p228, %s227, 79
      %s230 = smul.addr %s229, 4
      %s231 = scalar_lea.vmem %s3, %s230
      %p232 = pneg %p137
      %p233 = pneg %p134
      %p234 = scmp.lt.s32.totalorder %s17, 1
      %s235 = scalar_select %p234, %s17, 1
      %s236 = smul.addr %s235, 8
      %s237 = scalar_lea.vmem %s4, %s236
      %p238 = pneg %p163
      %p239 = pneg %p160
      %p240 = scmp.lt.s32.totalorder %s17, 1
      %s241 = scalar_select %p240, %s17, 1
      %s242 = smul.addr %s241, 8
      %s243 = scalar_lea.vmem %s5, %s242
      %p244 = scmp.lt.s32.totalorder %s17, 1
      %s245 = scalar_select %p244, %s17, 1
      %s246 = smul.addr %s245, 46
      %s247 = smul.addr %s246, 4
      %s248 = scalar_lea.vmem %s0, %s247
      %s249 = smul.u32 40, %s17
      %p250 = scmp.lt.s32.totalorder %s249, 79
      %s251 = scalar_select %p250, %s249, 79
      %s252 = smul.addr %s251, 4
      %s253 = scalar_lea.vmem %s1, %s252
      %s254 = smul.u32 40, %s17
      %s255 = smul.u32 40, %s17
      %p256 = scmp.lt.s32.totalorder %s255, 79
      %s257 = scalar_select %p256, %s255, 79
      %s258 = smul.addr %s257, 4
      %s259 = scalar_lea.vmem %s3, %s258
      %s260 = smul.u32 40, %s17
      %p261 = scmp.lt.s32.totalorder %s17, 1
      %s262 = scalar_select %p261, %s17, 1
      %s263 = smul.addr %s262, 8
      %s264 = scalar_lea.vmem %s4, %s263
      %p265 = scmp.lt.s32.totalorder %s17, 1
      %s266 = scalar_select %p265, %s17, 1
      %s267 = smul.addr %s266, 8
      %s268 = scalar_lea.vmem %s5, %s267
      %v270 = vld [vmem:[%s248] sm:$0xf]
      %v271 = vld [vmem:[%s248 + $0x4] sm:$0xf]
      %v272 = vld [vmem:[%s248 + $0x8] sm:$0xf]
      %v273 = vld [vmem:[%s248 + $0xc] sm:$0xf]
      %v274 = vld [vmem:[%s248 + $0x10] sm:$0xf]
      %v275 = vld [vmem:[%s248 + $0x14] sm:$0xf]
      %v276 = vld [vmem:[%s248 + $0x18] sm:$0xf]
      %v277 = vld [vmem:[%s248 + $0x1c] sm:$0xf]
      %v278 = vld [vmem:[%s248 + $0x20] sm:$0xf]
      %v279 = vld [vmem:[%s248 + $0x24] sm:$0xf]
      %v280 = vld [vmem:[%s248 + $0x28] sm:$0xf]
      %v281 = vld [vmem:[%s248 + $0x2c] sm:$0xf]
      %v282 = vld [vmem:[%s248 + $0x30] sm:$0xf]
      %v283 = vld [vmem:[%s248 + $0x34] sm:$0xf]
      %v284 = vld [vmem:[%s248 + $0x38] sm:$0xf]
      %v285 = vld [vmem:[%s248 + $0x3c] sm:$0xf]
      %v286 = vld [vmem:[%s248 + $0x40] sm:$0xf]
      %v287 = vld [vmem:[%s248 + $0x44] sm:$0xf]
      %v288 = vld [vmem:[%s248 + $0x48] sm:$0xf]
      %v289 = vld [vmem:[%s248 + $0x4c] sm:$0xf]
      %v290 = vld [vmem:[%s248 + $0x50] sm:$0xf]
      %v291 = vld [vmem:[%s248 + $0x54] sm:$0xf]
      %v292 = vld [vmem:[%s248 + $0x58] sm:$0xf]
      %v293 = vld [vmem:[%s248 + $0x5c] sm:$0xf]
      %v294 = vld [vmem:[%s248 + $0x60] sm:$0xf]
      %v295 = vld [vmem:[%s248 + $0x64] sm:$0xf]
      %v296 = vld [vmem:[%s248 + $0x68] sm:$0xf]
      %v297 = vld [vmem:[%s248 + $0x6c] sm:$0xf]
      %v298 = vld [vmem:[%s248 + $0x70] sm:$0xf]
      %v299 = vld [vmem:[%s248 + $0x74] sm:$0xf]
      %v300 = vld [vmem:[%s248 + $0x78] sm:$0xf]
      %v301 = vld [vmem:[%s248 + $0x7c] sm:$0xf]
      %v302 = vld [vmem:[%s248 + $0x80] sm:$0xf]
      %v303 = vld [vmem:[%s248 + $0x84] sm:$0xf]
      %v304 = vld [vmem:[%s248 + $0x88] sm:$0xf]
      %v305 = vld [vmem:[%s248 + $0x8c] sm:$0xf]
      %v306 = vld [vmem:[%s248 + $0x90] sm:$0xf]
      %v307 = vld [vmem:[%s248 + $0x94] sm:$0xf]
      %v308 = vld [vmem:[%s248 + $0x98] sm:$0xf]
      %v309 = vld [vmem:[%s248 + $0x9c] sm:$0xf]
      %v310 = vld [vmem:[%s2] sm:$0x3]
      %v311 = vld [vmem:[%s248 + $0xa0] sm:$0x1]
      %s312 = scalar_lea.vmem %s2, 2
      %v313 = vld [vmem:[%s312] sm:$0x3]
      %v355 = vunpack.c.l.b16 %v270
      %v356 = vunpack.c.l.b16 %v271
      %v357 = vunpack.c.l.b16 %v272
      %v358 = vunpack.c.l.b16 %v273
      %v359 = vunpack.c.l.b16 %v274
      %v360 = vunpack.c.l.b16 %v275
      %v361 = vunpack.c.l.b16 %v276
      %v362 = vunpack.c.l.b16 %v277
      %v363 = vunpack.c.l.b16 %v278
      %v364 = vunpack.c.l.b16 %v279
      %v365 = vunpack.c.l.b16 %v280
      %v366 = vunpack.c.l.b16 %v281
      %v367 = vunpack.c.l.b16 %v282
      %v368 = vunpack.c.l.b16 %v283
      %v369 = vunpack.c.l.b16 %v284
      %v370 = vunpack.c.l.b16 %v285
      %v371 = vunpack.c.l.b16 %v286
      %v372 = vunpack.c.l.b16 %v287
      %v373 = vunpack.c.l.b16 %v288
      %v374 = vunpack.c.l.b16 %v289
      %v375 = vunpack.c.l.b16 %v290
      %v376 = vunpack.c.l.b16 %v291
      %v377 = vunpack.c.l.b16 %v292
      %v378 = vunpack.c.l.b16 %v293
      %v379 = vunpack.c.l.b16 %v294
      %v380 = vunpack.c.l.b16 %v295
      %v381 = vunpack.c.l.b16 %v296
      %v382 = vunpack.c.l.b16 %v297
      %v383 = vunpack.c.l.b16 %v298
      %v384 = vunpack.c.l.b16 %v299
      %v385 = vunpack.c.l.b16 %v300
      %v386 = vunpack.c.l.b16 %v301
      %v387 = vunpack.c.l.b16 %v302
      %v388 = vunpack.c.l.b16 %v303
      %v389 = vunpack.c.l.b16 %v304
      %v390 = vunpack.c.l.b16 %v305
      %v391 = vunpack.c.l.b16 %v306
      %v392 = vunpack.c.l.b16 %v307
      %v393 = vunpack.c.l.b16 %v308
      %v394 = vunpack.c.l.b16 %v309
      %v395 = vunpack.c.l.b16 %v311
      %v396 = vpack.c.b16 %v356, %v355
      %v397 = vpack.c.b16 %v358, %v357
      %v398 = vpack.c.b16 %v360, %v359
      %v399 = vpack.c.b16 %v362, %v361
      %v400 = vpack.c.b16 %v364, %v363
      %v401 = vpack.c.b16 %v366, %v365
      %v402 = vpack.c.b16 %v368, %v367
      %v403 = vpack.c.b16 %v370, %v369
      %v404 = vpack.c.b16 %v372, %v371
      %v405 = vpack.c.b16 %v374, %v373
      %v406 = vpack.c.b16 %v376, %v375
      %v407 = vpack.c.b16 %v378, %v377
      %v408 = vpack.c.b16 %v380, %v379
      %v409 = vpack.c.b16 %v382, %v381
      %v410 = vpack.c.b16 %v384, %v383
      %v411 = vpack.c.b16 %v386, %v385
      %v412 = vpack.c.b16 %v388, %v387
      %v413 = vpack.c.b16 %v390, %v389
      %v414 = vpack.c.b16 %v392, %v391
      %v415 = vpack.c.b16 %v394, %v393
      %v416 = vpack.c.b16 %v395, %v395
      %vm417 = vsmask.f32 7424
      %v419 = vshrl.u32 %v396, 16
      %v421 = vshll.u32 %v396, 16
      %v423 = vrot.slane %v421, 1
      %v424 = vor.u32 %v419, %v423
      %v426 = vshll.u32 %v397, 16
      %v428 = vrot.slane %v426, 1
      %v429 = vsel %vm417, %v424, %v428
      %v430 = vshrl.u32 %v397, 16
      %v432 = vor.u32 %v430, %v428
      %v434 = vshll.u32 %v398, 16
      %v436 = vrot.slane %v434, 1
      %v437 = vsel %vm417, %v432, %v436
      %v438 = vshrl.u32 %v398, 16
      %v440 = vor.u32 %v438, %v436
      %v442 = vshll.u32 %v399, 16
      %v444 = vrot.slane %v442, 1
      %v445 = vsel %vm417, %v440, %v444
      %v446 = vshrl.u32 %v399, 16
      %v448 = vor.u32 %v446, %v444
      %v450 = vshll.u32 %v400, 16
      %v452 = vrot.slane %v450, 1
      %v453 = vsel %vm417, %v448, %v452
      %v454 = vshrl.u32 %v400, 16
      %v456 = vor.u32 %v454, %v452
      %v458 = vshll.u32 %v401, 16
      %v460 = vrot.slane %v458, 1
      %v461 = vsel %vm417, %v456, %v460
      %v462 = vshrl.u32 %v401, 16
      %v464 = vor.u32 %v462, %v460
      %v466 = vshll.u32 %v402, 16
      %v468 = vrot.slane %v466, 1
      %v469 = vsel %vm417, %v464, %v468
      %v470 = vshrl.u32 %v402, 16
      %v472 = vor.u32 %v470, %v468
      %v474 = vshll.u32 %v403, 16
      %v476 = vrot.slane %v474, 1
      %v477 = vsel %vm417, %v472, %v476
      %v478 = vshrl.u32 %v403, 16
      %v480 = vor.u32 %v478, %v476
      %v482 = vshll.u32 %v404, 16
      %v484 = vrot.slane %v482, 1
      %v485 = vsel %vm417, %v480, %v484
      %v486 = vshrl.u32 %v404, 16
      %v488 = vor.u32 %v486, %v484
      %v490 = vshll.u32 %v405, 16
      %v492 = vrot.slane %v490, 1
      %v493 = vsel %vm417, %v488, %v492
      %v494 = vshrl.u32 %v405, 16
      %v496 = vor.u32 %v494, %v492
      %v498 = vshll.u32 %v406, 16
      %v500 = vrot.slane %v498, 1
      %v501 = vsel %vm417, %v496, %v500
      %v502 = vshrl.u32 %v406, 16
      %v504 = vor.u32 %v502, %v500
      %v506 = vshll.u32 %v407, 16
      %v508 = vrot.slane %v506, 1
      %v509 = vsel %vm417, %v504, %v508
      %v510 = vshrl.u32 %v407, 16
      %v512 = vor.u32 %v510, %v508
      %v514 = vshll.u32 %v408, 16
      %v516 = vrot.slane %v514, 1
      %v517 = vsel %vm417, %v512, %v516
      %v518 = vshrl.u32 %v408, 16
      %v520 = vor.u32 %v518, %v516
      %v522 = vshll.u32 %v409, 16
      %v524 = vrot.slane %v522, 1
      %v525 = vsel %vm417, %v520, %v524
      %v526 = vshrl.u32 %v409, 16
      %v528 = vor.u32 %v526, %v524
      %v530 = vshll.u32 %v410, 16
      %v532 = vrot.slane %v530, 1
      %v533 = vsel %vm417, %v528, %v532
      %v534 = vshrl.u32 %v410, 16
      %v536 = vor.u32 %v534, %v532
      %v538 = vshll.u32 %v411, 16
      %v540 = vrot.slane %v538, 1
      %v541 = vsel %vm417, %v536, %v540
      %v542 = vshrl.u32 %v411, 16
      %v544 = vor.u32 %v542, %v540
      %v546 = vshll.u32 %v412, 16
      %v548 = vrot.slane %v546, 1
      %v549 = vsel %vm417, %v544, %v548
      %v550 = vshrl.u32 %v412, 16
      %v552 = vor.u32 %v550, %v548
      %v554 = vshll.u32 %v413, 16
      %v556 = vrot.slane %v554, 1
      %v557 = vsel %vm417, %v552, %v556
      %v558 = vshrl.u32 %v413, 16
      %v560 = vor.u32 %v558, %v556
      %v562 = vshll.u32 %v414, 16
      %v564 = vrot.slane %v562, 1
      %v565 = vsel %vm417, %v560, %v564
      %v566 = vshrl.u32 %v414, 16
      %v568 = vor.u32 %v566, %v564
      %v570 = vshll.u32 %v415, 16
      %v572 = vrot.slane %v570, 1
      %v573 = vsel %vm417, %v568, %v572
      %v574 = vshrl.u32 %v415, 16
      %v576 = vor.u32 %v574, %v572
      %v578 = vshll.u32 %v416, 16
      %v580 = vrot.slane %v578, 1
      %v581 = vsel %vm417, %v576, %v580
      %vm582 = vcmask 31744
      %v584 = vsel %vm582, %v429, 0
      %v587 = vsel %vm582, %v437, 0
      %v590 = vsel %vm582, %v445, 0
      %v593 = vsel %vm582, %v453, 0
      %v596 = vsel %vm582, %v461, 0
      %v599 = vsel %vm582, %v469, 0
      %v602 = vsel %vm582, %v477, 0
      %v605 = vsel %vm582, %v485, 0
      %v608 = vsel %vm582, %v493, 0
      %v611 = vsel %vm582, %v501, 0
      %v614 = vsel %vm582, %v509, 0
      %v617 = vsel %vm582, %v517, 0
      %v620 = vsel %vm582, %v525, 0
      %v623 = vsel %vm582, %v533, 0
      %v626 = vsel %vm582, %v541, 0
      %v629 = vsel %vm582, %v549, 0
      %v632 = vsel %vm582, %v557, 0
      %v635 = vsel %vm582, %v565, 0
      %v638 = vsel %vm582, %v573, 0
      %v641 = vsel %vm582, %v581, 0
      %vm643 = vcmask 1041408
      %v645 = vsel %vm643, %v313, 0
      %647 = vmatpush.bf16.msra.mxu0 0
      %648 = vmatpush.bf16.msra.mxu0 0
      %649 = vmatpush.bf16.msra.mxu0 0
      %650 = vmatpush.bf16.msra.mxu0 0
      %651 = vmatpush.bf16.msra.mxu0 0
      %652 = vmatpush.bf16.msra.mxu0 0
      %653 = vmatpush.bf16.msra.mxu0 0
      %654 = vmatpush.bf16.msra.mxu0 %v645
      %655 = vmatmul.bf16.gmra.mxu0 %v584
      %v656 = vpop.f32.mrf.mxu0
      %v657 = vadd.f32 0.0, %v656
      %v658 = vpop.f32.mrf.mxu0
      %v659 = vadd.f32 0.0, %v658
      %660 = vmatmul.bf16.gmra.mxu0 %v587
      %v661 = vpop.f32.mrf.mxu0
      %v662 = vadd.f32 0.0, %v661
      %v663 = vpop.f32.mrf.mxu0
      %v664 = vadd.f32 0.0, %v663
      %665 = vmatmul.bf16.gmra.mxu0 %v590
      %v666 = vpop.f32.mrf.mxu0
      %v667 = vadd.f32 0.0, %v666
      %v668 = vpop.f32.mrf.mxu0
      %v669 = vadd.f32 0.0, %v668
      %670 = vmatmul.bf16.gmra.mxu0 %v593
      %v671 = vpop.f32.mrf.mxu0
      %v672 = vadd.f32 0.0, %v671
      %v673 = vpop.f32.mrf.mxu0
      %v674 = vadd.f32 0.0, %v673
      %675 = vmatmul.bf16.gmra.mxu0 %v596
      %v676 = vpop.f32.mrf.mxu0
      %v677 = vadd.f32 0.0, %v676
      %v678 = vpop.f32.mrf.mxu0
      %v679 = vadd.f32 0.0, %v678
      %680 = vmatmul.bf16.gmra.mxu0 %v599
      %v681 = vpop.f32.mrf.mxu0
      %v682 = vadd.f32 0.0, %v681
      %v683 = vpop.f32.mrf.mxu0
      %v684 = vadd.f32 0.0, %v683
      %685 = vmatmul.bf16.gmra.mxu0 %v602
      %v686 = vpop.f32.mrf.mxu0
      %v687 = vadd.f32 0.0, %v686
      %v688 = vpop.f32.mrf.mxu0
      %v689 = vadd.f32 0.0, %v688
      %690 = vmatmul.bf16.gmra.mxu0 %v605
      %v691 = vpop.f32.mrf.mxu0
      %v692 = vadd.f32 0.0, %v691
      %v693 = vpop.f32.mrf.mxu0
      %v694 = vadd.f32 0.0, %v693
      %695 = vmatmul.bf16.gmra.mxu0 %v608
      %v696 = vpop.f32.mrf.mxu0
      %v697 = vadd.f32 0.0, %v696
      %v698 = vpop.f32.mrf.mxu0
      %v699 = vadd.f32 0.0, %v698
      %700 = vmatmul.bf16.gmra.mxu0 %v611
      %v701 = vpop.f32.mrf.mxu0
      %v702 = vadd.f32 0.0, %v701
      %v703 = vpop.f32.mrf.mxu0
      %v704 = vadd.f32 0.0, %v703
      %705 = vmatmul.bf16.gmra.mxu0 %v614
      %v706 = vpop.f32.mrf.mxu0
      %v707 = vadd.f32 0.0, %v706
      %v708 = vpop.f32.mrf.mxu0
      %v709 = vadd.f32 0.0, %v708
      %710 = vmatmul.bf16.gmra.mxu0 %v617
      %v711 = vpop.f32.mrf.mxu0
      %v712 = vadd.f32 0.0, %v711
      %v713 = vpop.f32.mrf.mxu0
      %v714 = vadd.f32 0.0, %v713
      %715 = vmatmul.bf16.gmra.mxu0 %v620
      %v716 = vpop.f32.mrf.mxu0
      %v717 = vadd.f32 0.0, %v716
      %v718 = vpop.f32.mrf.mxu0
      %v719 = vadd.f32 0.0, %v718
      %720 = vmatmul.bf16.gmra.mxu0 %v623
      %v721 = vpop.f32.mrf.mxu0
      %v722 = vadd.f32 0.0, %v721
      %v723 = vpop.f32.mrf.mxu0
      %v724 = vadd.f32 0.0, %v723
      %725 = vmatmul.bf16.gmra.mxu0 %v626
      %v726 = vpop.f32.mrf.mxu0
      %v727 = vadd.f32 0.0, %v726
      %v728 = vpop.f32.mrf.mxu0
      %v729 = vadd.f32 0.0, %v728
      %730 = vmatmul.bf16.gmra.mxu0 %v629
      %v731 = vpop.f32.mrf.mxu0
      %v732 = vadd.f32 0.0, %v731
      %v733 = vpop.f32.mrf.mxu0
      %v734 = vadd.f32 0.0, %v733
      %735 = vmatmul.bf16.gmra.mxu0 %v632
      %v736 = vpop.f32.mrf.mxu0
      %v737 = vadd.f32 0.0, %v736
      %v738 = vpop.f32.mrf.mxu0
      %v739 = vadd.f32 0.0, %v738
      %740 = vmatmul.bf16.gmra.mxu0 %v635
      %v741 = vpop.f32.mrf.mxu0
      %v742 = vadd.f32 0.0, %v741
      %v743 = vpop.f32.mrf.mxu0
      %v744 = vadd.f32 0.0, %v743
      %745 = vmatmul.bf16.gmra.mxu0 %v638
      %v746 = vpop.f32.mrf.mxu0
      %v747 = vadd.f32 0.0, %v746
      %v748 = vpop.f32.mrf.mxu0
      %v749 = vadd.f32 0.0, %v748
      %750 = vmatmul.bf16.gmra.mxu0 %v641
      %v751 = vpop.f32.mrf.mxu0
      %v752 = vadd.f32 0.0, %v751
      %v753 = vpop.f32.mrf.mxu0
      %v754 = vadd.f32 0.0, %v753
      %755 = vdwg.mxu0
      %v756 = vsel %vm582, %v396, 0
      %v758 = vsel %vm582, %v397, 0
      %v760 = vsel %vm582, %v398, 0
      %v762 = vsel %vm582, %v399, 0
      %v764 = vsel %vm582, %v400, 0
      %v766 = vsel %vm582, %v401, 0
      %v768 = vsel %vm582, %v402, 0
      %v770 = vsel %vm582, %v403, 0
      %v772 = vsel %vm582, %v404, 0
      %v774 = vsel %vm582, %v405, 0
      %v776 = vsel %vm582, %v406, 0
      %v778 = vsel %vm582, %v407, 0
      %v780 = vsel %vm582, %v408, 0
      %v782 = vsel %vm582, %v409, 0
      %v784 = vsel %vm582, %v410, 0
      %v786 = vsel %vm582, %v411, 0
      %v788 = vsel %vm582, %v412, 0
      %v790 = vsel %vm582, %v413, 0
      %v792 = vsel %vm582, %v414, 0
      %v794 = vsel %vm582, %v415, 0
      %v797 = vsel %vm643, %v310, 0
      %799 = vmatpush.bf16.msra.mxu0 0
      %800 = vmatpush.bf16.msra.mxu0 0
      %801 = vmatpush.bf16.msra.mxu0 0
      %802 = vmatpush.bf16.msra.mxu0 0
      %803 = vmatpush.bf16.msra.mxu0 0
      %804 = vmatpush.bf16.msra.mxu0 0
      %805 = vmatpush.bf16.msra.mxu0 0
      %806 = vmatpush.bf16.msra.mxu0 %v797
      %807 = vmatmul.bf16.gmra.mxu0 %v756
      %v808 = vpop.f32.mrf.mxu0
      %v809 = vadd.f32 %v657, %v808
      %v810 = vpop.f32.mrf.mxu0
      %v811 = vadd.f32 %v659, %v810
      %812 = vmatmul.bf16.gmra.mxu0 %v758
      %v813 = vpop.f32.mrf.mxu0
      %v814 = vadd.f32 %v662, %v813
      %v815 = vpop.f32.mrf.mxu0
      %v816 = vadd.f32 %v664, %v815
      %817 = vmatmul.bf16.gmra.mxu0 %v760
      %v818 = vpop.f32.mrf.mxu0
      %v819 = vadd.f32 %v667, %v818
      %v820 = vpop.f32.mrf.mxu0
      %v821 = vadd.f32 %v669, %v820
      %822 = vmatmul.bf16.gmra.mxu0 %v762
      %v823 = vpop.f32.mrf.mxu0
      %v824 = vadd.f32 %v672, %v823
      %v825 = vpop.f32.mrf.mxu0
      %v826 = vadd.f32 %v674, %v825
      %827 = vmatmul.bf16.gmra.mxu0 %v764
      %v828 = vpop.f32.mrf.mxu0
      %v829 = vadd.f32 %v677, %v828
      %v830 = vpop.f32.mrf.mxu0
      %v831 = vadd.f32 %v679, %v830
      %832 = vmatmul.bf16.gmra.mxu0 %v766
      %v833 = vpop.f32.mrf.mxu0
      %v834 = vadd.f32 %v682, %v833
      %v835 = vpop.f32.mrf.mxu0
      %v836 = vadd.f32 %v684, %v835
      %837 = vmatmul.bf16.gmra.mxu0 %v768
      %v838 = vpop.f32.mrf.mxu0
      %v839 = vadd.f32 %v687, %v838
      %v840 = vpop.f32.mrf.mxu0
      %v841 = vadd.f32 %v689, %v840
      %842 = vmatmul.bf16.gmra.mxu0 %v770
      %v843 = vpop.f32.mrf.mxu0
      %v844 = vadd.f32 %v692, %v843
      %v845 = vpop.f32.mrf.mxu0
      %v846 = vadd.f32 %v694, %v845
      %847 = vmatmul.bf16.gmra.mxu0 %v772
      %v848 = vpop.f32.mrf.mxu0
      %v849 = vadd.f32 %v697, %v848
      %v850 = vpop.f32.mrf.mxu0
      %v851 = vadd.f32 %v699, %v850
      %852 = vmatmul.bf16.gmra.mxu0 %v774
      %v853 = vpop.f32.mrf.mxu0
      %v854 = vadd.f32 %v702, %v853
      %v855 = vpop.f32.mrf.mxu0
      %v856 = vadd.f32 %v704, %v855
      %857 = vmatmul.bf16.gmra.mxu0 %v776
      %v858 = vpop.f32.mrf.mxu0
      %v859 = vadd.f32 %v707, %v858
      %v860 = vpop.f32.mrf.mxu0
      %v861 = vadd.f32 %v709, %v860
      %862 = vmatmul.bf16.gmra.mxu0 %v778
      %v863 = vpop.f32.mrf.mxu0
      %v864 = vadd.f32 %v712, %v863
      %v865 = vpop.f32.mrf.mxu0
      %v866 = vadd.f32 %v714, %v865
      %867 = vmatmul.bf16.gmra.mxu0 %v780
      %v868 = vpop.f32.mrf.mxu0
      %v869 = vadd.f32 %v717, %v868
      %v870 = vpop.f32.mrf.mxu0
      %v871 = vadd.f32 %v719, %v870
      %872 = vmatmul.bf16.gmra.mxu0 %v782
      %v873 = vpop.f32.mrf.mxu0
      %v874 = vadd.f32 %v722, %v873
      %v875 = vpop.f32.mrf.mxu0
      %v876 = vadd.f32 %v724, %v875
      %877 = vmatmul.bf16.gmra.mxu0 %v784
      %v878 = vpop.f32.mrf.mxu0
      %v879 = vadd.f32 %v727, %v878
      %v880 = vpop.f32.mrf.mxu0
      %v881 = vadd.f32 %v729, %v880
      %882 = vmatmul.bf16.gmra.mxu0 %v786
      %v883 = vpop.f32.mrf.mxu0
      %v884 = vadd.f32 %v732, %v883
      %v885 = vpop.f32.mrf.mxu0
      %v886 = vadd.f32 %v734, %v885
      %887 = vmatmul.bf16.gmra.mxu0 %v788
      %v888 = vpop.f32.mrf.mxu0
      %v889 = vadd.f32 %v737, %v888
      %v890 = vpop.f32.mrf.mxu0
      %v891 = vadd.f32 %v739, %v890
      %892 = vmatmul.bf16.gmra.mxu0 %v790
      %v893 = vpop.f32.mrf.mxu0
      %v894 = vadd.f32 %v742, %v893
      %v895 = vpop.f32.mrf.mxu0
      %v896 = vadd.f32 %v744, %v895
      %897 = vmatmul.bf16.gmra.mxu0 %v792
      %v898 = vpop.f32.mrf.mxu0
      %v899 = vadd.f32 %v747, %v898
      %v900 = vpop.f32.mrf.mxu0
      %v901 = vadd.f32 %v749, %v900
      %902 = vmatmul.bf16.gmra.mxu0 %v794
      %v903 = vpop.f32.mrf.mxu0
      %v904 = vadd.f32 %v752, %v903
      %v905 = vpop.f32.mrf.mxu0
      %v906 = vadd.f32 %v754, %v905
      %907 = vdwg.mxu0
      %v908 = vld [vmem:[%s248] sm:$0xe]
      %s909 = scalar_lea.vmem %s2, 4
      %v910 = vld [vmem:[%s909] sm:$0x3]
      %v912 = vunpack.c.l.b16 %v908
      %v913 = vpack.c.b16 %v356, %v912
      %vm914 = vcmask 1046528
      %v915 = vrot.slane %v913, 1
      %v916 = vrot.slane %v397, 1
      %v917 = vsel %vm914, %v915, %v916
      %v918 = vrot.slane %v398, 1
      %v919 = vsel %vm914, %v916, %v918
      %v920 = vrot.slane %v399, 1
      %v921 = vsel %vm914, %v918, %v920
      %v922 = vrot.slane %v400, 1
      %v923 = vsel %vm914, %v920, %v922
      %v924 = vrot.slane %v401, 1
      %v925 = vsel %vm914, %v922, %v924
      %v926 = vrot.slane %v402, 1
      %v927 = vsel %vm914, %v924, %v926
      %v928 = vrot.slane %v403, 1
      %v929 = vsel %vm914, %v926, %v928
      %v930 = vrot.slane %v404, 1
      %v931 = vsel %vm914, %v928, %v930
      %v932 = vrot.slane %v405, 1
      %v933 = vsel %vm914, %v930, %v932
      %v934 = vrot.slane %v406, 1
      %v935 = vsel %vm914, %v932, %v934
      %v936 = vrot.slane %v407, 1
      %v937 = vsel %vm914, %v934, %v936
      %v938 = vrot.slane %v408, 1
      %v939 = vsel %vm914, %v936, %v938
      %v940 = vrot.slane %v409, 1
      %v941 = vsel %vm914, %v938, %v940
      %v942 = vrot.slane %v410, 1
      %v943 = vsel %vm914, %v940, %v942
      %v944 = vrot.slane %v411, 1
      %v945 = vsel %vm914, %v942, %v944
      %v946 = vrot.slane %v412, 1
      %v947 = vsel %vm914, %v944, %v946
      %v948 = vrot.slane %v413, 1
      %v949 = vsel %vm914, %v946, %v948
      %v950 = vrot.slane %v414, 1
      %v951 = vsel %vm914, %v948, %v950
      %v952 = vrot.slane %v415, 1
      %v953 = vsel %vm914, %v950, %v952
      %v954 = vrot.slane %v416, 1
      %v955 = vsel %vm914, %v952, %v954
      %v957 = vsel %vm582, %v917, 0
      %v960 = vsel %vm582, %v919, 0
      %v963 = vsel %vm582, %v921, 0
      %v966 = vsel %vm582, %v923, 0
      %v969 = vsel %vm582, %v925, 0
      %v972 = vsel %vm582, %v927, 0
      %v975 = vsel %vm582, %v929, 0
      %v978 = vsel %vm582, %v931, 0
      %v981 = vsel %vm582, %v933, 0
      %v984 = vsel %vm582, %v935, 0
      %v987 = vsel %vm582, %v937, 0
      %v990 = vsel %vm582, %v939, 0
      %v993 = vsel %vm582, %v941, 0
      %v996 = vsel %vm582, %v943, 0
      %v999 = vsel %vm582, %v945, 0
      %v1002 = vsel %vm582, %v947, 0
      %v1005 = vsel %vm582, %v949, 0
      %v1008 = vsel %vm582, %v951, 0
      %v1011 = vsel %vm582, %v953, 0
      %v1014 = vsel %vm582, %v955, 0
      %v1017 = vsel %vm643, %v910, 0
      %1019 = vmatpush.bf16.msra.mxu0 0
      %1020 = vmatpush.bf16.msra.mxu0 0
      %1021 = vmatpush.bf16.msra.mxu0 0
      %1022 = vmatpush.bf16.msra.mxu0 0
      %1023 = vmatpush.bf16.msra.mxu0 0
      %1024 = vmatpush.bf16.msra.mxu0 0
      %1025 = vmatpush.bf16.msra.mxu0 0
      %1026 = vmatpush.bf16.msra.mxu0 %v1017
      %1027 = vmatmul.bf16.gmra.mxu0 %v957
      %v1028 = vpop.f32.mrf.mxu0
      %v1029 = vadd.f32 0.0, %v1028
      %v1030 = vpop.f32.mrf.mxu0
      %v1031 = vadd.f32 0.0, %v1030
      %1032 = vmatmul.bf16.gmra.mxu0 %v960
      %v1033 = vpop.f32.mrf.mxu0
      %v1034 = vadd.f32 0.0, %v1033
      %v1035 = vpop.f32.mrf.mxu0
      %v1036 = vadd.f32 0.0, %v1035
      %1037 = vmatmul.bf16.gmra.mxu0 %v963
      %v1038 = vpop.f32.mrf.mxu0
      %v1039 = vadd.f32 0.0, %v1038
      %v1040 = vpop.f32.mrf.mxu0
      %v1041 = vadd.f32 0.0, %v1040
      %1042 = vmatmul.bf16.gmra.mxu0 %v966
      %v1043 = vpop.f32.mrf.mxu0
      %v1044 = vadd.f32 0.0, %v1043
      %v1045 = vpop.f32.mrf.mxu0
      %v1046 = vadd.f32 0.0, %v1045
      %1047 = vmatmul.bf16.gmra.mxu0 %v969
      %v1048 = vpop.f32.mrf.mxu0
      %v1049 = vadd.f32 0.0, %v1048
      %v1050 = vpop.f32.mrf.mxu0
      %v1051 = vadd.f32 0.0, %v1050
      %1052 = vmatmul.bf16.gmra.mxu0 %v972
      %v1053 = vpop.f32.mrf.mxu0
      %v1054 = vadd.f32 0.0, %v1053
      %v1055 = vpop.f32.mrf.mxu0
      %v1056 = vadd.f32 0.0, %v1055
      %1057 = vmatmul.bf16.gmra.mxu0 %v975
      %v1058 = vpop.f32.mrf.mxu0
      %v1059 = vadd.f32 0.0, %v1058
      %v1060 = vpop.f32.mrf.mxu0
      %v1061 = vadd.f32 0.0, %v1060
      %1062 = vmatmul.bf16.gmra.mxu0 %v978
      %v1063 = vpop.f32.mrf.mxu0
      %v1064 = vadd.f32 0.0, %v1063
      %v1065 = vpop.f32.mrf.mxu0
      %v1066 = vadd.f32 0.0, %v1065
      %1067 = vmatmul.bf16.gmra.mxu0 %v981
      %v1068 = vpop.f32.mrf.mxu0
      %v1069 = vadd.f32 0.0, %v1068
      %v1070 = vpop.f32.mrf.mxu0
      %v1071 = vadd.f32 0.0, %v1070
      %1072 = vmatmul.bf16.gmra.mxu0 %v984
      %v1073 = vpop.f32.mrf.mxu0
      %v1074 = vadd.f32 0.0, %v1073
      %v1075 = vpop.f32.mrf.mxu0
      %v1076 = vadd.f32 0.0, %v1075
      %1077 = vmatmul.bf16.gmra.mxu0 %v987
      %v1078 = vpop.f32.mrf.mxu0
      %v1079 = vadd.f32 0.0, %v1078
      %v1080 = vpop.f32.mrf.mxu0
      %v1081 = vadd.f32 0.0, %v1080
      %1082 = vmatmul.bf16.gmra.mxu0 %v990
      %v1083 = vpop.f32.mrf.mxu0
      %v1084 = vadd.f32 0.0, %v1083
      %v1085 = vpop.f32.mrf.mxu0
      %v1086 = vadd.f32 0.0, %v1085
      %1087 = vmatmul.bf16.gmra.mxu0 %v993
      %v1088 = vpop.f32.mrf.mxu0
      %v1089 = vadd.f32 0.0, %v1088
      %v1090 = vpop.f32.mrf.mxu0
      %v1091 = vadd.f32 0.0, %v1090
      %1092 = vmatmul.bf16.gmra.mxu0 %v996
      %v1093 = vpop.f32.mrf.mxu0
      %v1094 = vadd.f32 0.0, %v1093
      %v1095 = vpop.f32.mrf.mxu0
      %v1096 = vadd.f32 0.0, %v1095
      %1097 = vmatmul.bf16.gmra.mxu0 %v999
      %v1098 = vpop.f32.mrf.mxu0
      %v1099 = vadd.f32 0.0, %v1098
      %v1100 = vpop.f32.mrf.mxu0
      %v1101 = vadd.f32 0.0, %v1100
      %1102 = vmatmul.bf16.gmra.mxu0 %v1002
      %v1103 = vpop.f32.mrf.mxu0
      %v1104 = vadd.f32 0.0, %v1103
      %v1105 = vpop.f32.mrf.mxu0
      %v1106 = vadd.f32 0.0, %v1105
      %1107 = vmatmul.bf16.gmra.mxu0 %v1005
      %v1108 = vpop.f32.mrf.mxu0
      %v1109 = vadd.f32 0.0, %v1108
      %v1110 = vpop.f32.mrf.mxu0
      %v1111 = vadd.f32 0.0, %v1110
      %1112 = vmatmul.bf16.gmra.mxu0 %v1008
      %v1113 = vpop.f32.mrf.mxu0
      %v1114 = vadd.f32 0.0, %v1113
      %v1115 = vpop.f32.mrf.mxu0
      %v1116 = vadd.f32 0.0, %v1115
      %1117 = vmatmul.bf16.gmra.mxu0 %v1011
      %v1118 = vpop.f32.mrf.mxu0
      %v1119 = vadd.f32 0.0, %v1118
      %v1120 = vpop.f32.mrf.mxu0
      %v1121 = vadd.f32 0.0, %v1120
      %1122 = vmatmul.bf16.gmra.mxu0 %v1014
      %v1123 = vpop.f32.mrf.mxu0
      %v1124 = vadd.f32 0.0, %v1123
      %v1125 = vpop.f32.mrf.mxu0
      %v1126 = vadd.f32 0.0, %v1125
      %1127 = vdwg.mxu0
      %v1128 = vadd.f32 %v809, %v1029
      %v1129 = vadd.f32 %v811, %v1031
      %v1130 = vadd.f32 %v814, %v1034
      %v1131 = vadd.f32 %v816, %v1036
      %v1132 = vadd.f32 %v819, %v1039
      %v1133 = vadd.f32 %v821, %v1041
      %v1134 = vadd.f32 %v824, %v1044
      %v1135 = vadd.f32 %v826, %v1046
      %v1136 = vadd.f32 %v829, %v1049
      %v1137 = vadd.f32 %v831, %v1051
      %v1138 = vadd.f32 %v834, %v1054
      %v1139 = vadd.f32 %v836, %v1056
      %v1140 = vadd.f32 %v839, %v1059
      %v1141 = vadd.f32 %v841, %v1061
      %v1142 = vadd.f32 %v844, %v1064
      %v1143 = vadd.f32 %v846, %v1066
      %v1144 = vadd.f32 %v849, %v1069
      %v1145 = vadd.f32 %v851, %v1071
      %v1146 = vadd.f32 %v854, %v1074
      %v1147 = vadd.f32 %v856, %v1076
      %v1148 = vadd.f32 %v859, %v1079
      %v1149 = vadd.f32 %v861, %v1081
      %v1150 = vadd.f32 %v864, %v1084
      %v1151 = vadd.f32 %v866, %v1086
      %v1152 = vadd.f32 %v869, %v1089
      %v1153 = vadd.f32 %v871, %v1091
      %v1154 = vadd.f32 %v874, %v1094
      %v1155 = vadd.f32 %v876, %v1096
      %v1156 = vadd.f32 %v879, %v1099
      %v1157 = vadd.f32 %v881, %v1101
      %v1158 = vadd.f32 %v884, %v1104
      %v1159 = vadd.f32 %v886, %v1106
      %v1160 = vadd.f32 %v889, %v1109
      %v1161 = vadd.f32 %v891, %v1111
      %v1162 = vadd.f32 %v894, %v1114
      %v1163 = vadd.f32 %v896, %v1116
      %v1164 = vadd.f32 %v899, %v1119
      %v1165 = vadd.f32 %v901, %v1121
      %v1166 = vadd.f32 %v904, %v1124
      %v1167 = vadd.f32 %v906, %v1126
      %v1168 = vld [vmem:[%s248 + $0x8] sm:$0xc]
      %v1169 = vld [vmem:[%s248 + $0xc] sm:$0xf]
      %v1170 = vld [vmem:[%s248 + $0x10] sm:$0xf]
      %v1171 = vld [vmem:[%s248 + $0x14] sm:$0xf]
      %v1172 = vld [vmem:[%s248 + $0x18] sm:$0xf]
      %v1173 = vld [vmem:[%s248 + $0x1c] sm:$0xf]
      %v1174 = vld [vmem:[%s248 + $0x20] sm:$0xf]
      %v1175 = vld [vmem:[%s248 + $0x24] sm:$0xf]
      %v1176 = vld [vmem:[%s248 + $0x28] sm:$0xf]
      %v1177 = vld [vmem:[%s248 + $0x2c] sm:$0xf]
      %v1178 = vld [vmem:[%s248 + $0x30] sm:$0xf]
      %v1179 = vld [vmem:[%s248 + $0x34] sm:$0xf]
      %v1180 = vld [vmem:[%s248 + $0x38] sm:$0xf]
      %v1181 = vld [vmem:[%s248 + $0x3c] sm:$0xf]
      %v1182 = vld [vmem:[%s248 + $0x40] sm:$0xf]
      %v1183 = vld [vmem:[%s248 + $0x44] sm:$0xf]
      %v1184 = vld [vmem:[%s248 + $0x48] sm:$0xf]
      %v1185 = vld [vmem:[%s248 + $0x4c] sm:$0xf]
      %v1186 = vld [vmem:[%s248 + $0x50] sm:$0xf]
      %v1187 = vld [vmem:[%s248 + $0x54] sm:$0xf]
      %v1188 = vld [vmem:[%s248 + $0x58] sm:$0xf]
      %v1189 = vld [vmem:[%s248 + $0x5c] sm:$0xf]
      %v1190 = vld [vmem:[%s248 + $0x60] sm:$0xf]
      %v1191 = vld [vmem:[%s248 + $0x64] sm:$0xf]
      %v1192 = vld [vmem:[%s248 + $0x68] sm:$0xf]
      %v1193 = vld [vmem:[%s248 + $0x6c] sm:$0xf]
      %v1194 = vld [vmem:[%s248 + $0x70] sm:$0xf]
      %v1195 = vld [vmem:[%s248 + $0x74] sm:$0xf]
      %v1196 = vld [vmem:[%s248 + $0x78] sm:$0xf]
      %v1197 = vld [vmem:[%s248 + $0x7c] sm:$0xf]
      %v1198 = vld [vmem:[%s248 + $0x80] sm:$0xf]
      %v1199 = vld [vmem:[%s248 + $0x84] sm:$0xf]
      %v1200 = vld [vmem:[%s248 + $0x88] sm:$0xf]
      %v1201 = vld [vmem:[%s248 + $0x8c] sm:$0xf]
      %v1202 = vld [vmem:[%s248 + $0x90] sm:$0xf]
      %v1203 = vld [vmem:[%s248 + $0x94] sm:$0xf]
      %v1204 = vld [vmem:[%s248 + $0x98] sm:$0xf]
      %v1205 = vld [vmem:[%s248 + $0x9c] sm:$0xf]
      %v1206 = vld [vmem:[%s248 + $0xa0] sm:$0xf]
      %v1207 = vld [vmem:[%s248 + $0xa4] sm:$0xf]
      %v1208 = vld [vmem:[%s248 + $0xa8] sm:$0x3]
      %s1209 = scalar_lea.vmem %s2, 6
      %v1210 = vld [vmem:[%s1209] sm:$0x3]
      %v1252 = vunpack.c.l.b16 %v1168
      %v1253 = vunpack.c.l.b16 %v1169
      %v1254 = vunpack.c.l.b16 %v1170
      %v1255 = vunpack.c.l.b16 %v1171
      %v1256 = vunpack.c.l.b16 %v1172
      %v1257 = vunpack.c.l.b16 %v1173
      %v1258 = vunpack.c.l.b16 %v1174
      %v1259 = vunpack.c.l.b16 %v1175
      %v1260 = vunpack.c.l.b16 %v1176
      %v1261 = vunpack.c.l.b16 %v1177
      %v1262 = vunpack.c.l.b16 %v1178
      %v1263 = vunpack.c.l.b16 %v1179
      %v1264 = vunpack.c.l.b16 %v1180
      %v1265 = vunpack.c.l.b16 %v1181
      %v1266 = vunpack.c.l.b16 %v1182
      %v1267 = vunpack.c.l.b16 %v1183
      %v1268 = vunpack.c.l.b16 %v1184
      %v1269 = vunpack.c.l.b16 %v1185
      %v1270 = vunpack.c.l.b16 %v1186
      %v1271 = vunpack.c.l.b16 %v1187
      %v1272 = vunpack.c.l.b16 %v1188
      %v1273 = vunpack.c.l.b16 %v1189
      %v1274 = vunpack.c.l.b16 %v1190
      %v1275 = vunpack.c.l.b16 %v1191
      %v1276 = vunpack.c.l.b16 %v1192
      %v1277 = vunpack.c.l.b16 %v1193
      %v1278 = vunpack.c.l.b16 %v1194
      %v1279 = vunpack.c.l.b16 %v1195
      %v1280 = vunpack.c.l.b16 %v1196
      %v1281 = vunpack.c.l.b16 %v1197
      %v1282 = vunpack.c.l.b16 %v1198
      %v1283 = vunpack.c.l.b16 %v1199
      %v1284 = vunpack.c.l.b16 %v1200
      %v1285 = vunpack.c.l.b16 %v1201
      %v1286 = vunpack.c.l.b16 %v1202
      %v1287 = vunpack.c.l.b16 %v1203
      %v1288 = vunpack.c.l.b16 %v1204
      %v1289 = vunpack.c.l.b16 %v1205
      %v1290 = vunpack.c.l.b16 %v1206
      %v1291 = vunpack.c.l.b16 %v1207
      %v1292 = vunpack.c.l.b16 %v1208
      %v1293 = vpack.c.b16 %v1253, %v1252
      %v1294 = vpack.c.b16 %v1255, %v1254
      %v1295 = vpack.c.b16 %v1257, %v1256
      %v1296 = vpack.c.b16 %v1259, %v1258
      %v1297 = vpack.c.b16 %v1261, %v1260
      %v1298 = vpack.c.b16 %v1263, %v1262
      %v1299 = vpack.c.b16 %v1265, %v1264
      %v1300 = vpack.c.b16 %v1267, %v1266
      %v1301 = vpack.c.b16 %v1269, %v1268
      %v1302 = vpack.c.b16 %v1271, %v1270
      %v1303 = vpack.c.b16 %v1273, %v1272
      %v1304 = vpack.c.b16 %v1275, %v1274
      %v1305 = vpack.c.b16 %v1277, %v1276
      %v1306 = vpack.c.b16 %v1279, %v1278
      %v1307 = vpack.c.b16 %v1281, %v1280
      %v1308 = vpack.c.b16 %v1283, %v1282
      %v1309 = vpack.c.b16 %v1285, %v1284
      %v1310 = vpack.c.b16 %v1287, %v1286
      %v1311 = vpack.c.b16 %v1289, %v1288
      %v1312 = vpack.c.b16 %v1291, %v1290
      %v1313 = vpack.c.b16 %v1292, %v1292
      %vm1314 = vcmask 1045504
      %v1315 = vrot.slane %v1293, 2
      %v1316 = vrot.slane %v1294, 2
      %v1317 = vsel %vm1314, %v1315, %v1316
      %v1318 = vrot.slane %v1295, 2
      %v1319 = vsel %vm1314, %v1316, %v1318
      %v1320 = vrot.slane %v1296, 2
      %v1321 = vsel %vm1314, %v1318, %v1320
      %v1322 = vrot.slane %v1297, 2
      %v1323 = vsel %vm1314, %v1320, %v1322
      %v1324 = vrot.slane %v1298, 2
      %v1325 = vsel %vm1314, %v1322, %v1324
      %v1326 = vrot.slane %v1299, 2
      %v1327 = vsel %vm1314, %v1324, %v1326
      %v1328 = vrot.slane %v1300, 2
      %v1329 = vsel %vm1314, %v1326, %v1328
      %v1330 = vrot.slane %v1301, 2
      %v1331 = vsel %vm1314, %v1328, %v1330
      %v1332 = vrot.slane %v1302, 2
      %v1333 = vsel %vm1314, %v1330, %v1332
      %v1334 = vrot.slane %v1303, 2
      %v1335 = vsel %vm1314, %v1332, %v1334
      %v1336 = vrot.slane %v1304, 2
      %v1337 = vsel %vm1314, %v1334, %v1336
      %v1338 = vrot.slane %v1305, 2
      %v1339 = vsel %vm1314, %v1336, %v1338
      %v1340 = vrot.slane %v1306, 2
      %v1341 = vsel %vm1314, %v1338, %v1340
      %v1342 = vrot.slane %v1307, 2
      %v1343 = vsel %vm1314, %v1340, %v1342
      %v1344 = vrot.slane %v1308, 2
      %v1345 = vsel %vm1314, %v1342, %v1344
      %v1346 = vrot.slane %v1309, 2
      %v1347 = vsel %vm1314, %v1344, %v1346
      %v1348 = vrot.slane %v1310, 2
      %v1349 = vsel %vm1314, %v1346, %v1348
      %v1350 = vrot.slane %v1311, 2
      %v1351 = vsel %vm1314, %v1348, %v1350
      %v1352 = vrot.slane %v1312, 2
      %v1353 = vsel %vm1314, %v1350, %v1352
      %v1354 = vrot.slane %v1313, 2
      %v1355 = vsel %vm1314, %v1352, %v1354
      %v1357 = vsel %vm582, %v1317, 0
      %v1360 = vsel %vm582, %v1319, 0
      %v1363 = vsel %vm582, %v1321, 0
      %v1366 = vsel %vm582, %v1323, 0
      %v1369 = vsel %vm582, %v1325, 0
      %v1372 = vsel %vm582, %v1327, 0
      %v1375 = vsel %vm582, %v1329, 0
      %v1378 = vsel %vm582, %v1331, 0
      %v1381 = vsel %vm582, %v1333, 0
      %v1384 = vsel %vm582, %v1335, 0
      %v1387 = vsel %vm582, %v1337, 0
      %v1390 = vsel %vm582, %v1339, 0
      %v1393 = vsel %vm582, %v1341, 0
      %v1396 = vsel %vm582, %v1343, 0
      %v1399 = vsel %vm582, %v1345, 0
      %v1402 = vsel %vm582, %v1347, 0
      %v1405 = vsel %vm582, %v1349, 0
      %v1408 = vsel %vm582, %v1351, 0
      %v1411 = vsel %vm582, %v1353, 0
      %v1414 = vsel %vm582, %v1355, 0
      %v1417 = vsel %vm643, %v1210, 0
      %1419 = vmatpush.bf16.msra.mxu0 0
      %1420 = vmatpush.bf16.msra.mxu0 0
      %1421 = vmatpush.bf16.msra.mxu0 0
      %1422 = vmatpush.bf16.msra.mxu0 0
      %1423 = vmatpush.bf16.msra.mxu0 0
      %1424 = vmatpush.bf16.msra.mxu0 0
      %1425 = vmatpush.bf16.msra.mxu0 0
      %1426 = vmatpush.bf16.msra.mxu0 %v1417
      %1427 = vmatmul.bf16.gmra.mxu0 %v1357
      %v1428 = vpop.f32.mrf.mxu0
      %v1429 = vadd.f32 0.0, %v1428
      %v1430 = vpop.f32.mrf.mxu0
      %v1431 = vadd.f32 0.0, %v1430
      %1432 = vmatmul.bf16.gmra.mxu0 %v1360
      %v1433 = vpop.f32.mrf.mxu0
      %v1434 = vadd.f32 0.0, %v1433
      %v1435 = vpop.f32.mrf.mxu0
      %v1436 = vadd.f32 0.0, %v1435
      %1437 = vmatmul.bf16.gmra.mxu0 %v1363
      %v1438 = vpop.f32.mrf.mxu0
      %v1439 = vadd.f32 0.0, %v1438
      %v1440 = vpop.f32.mrf.mxu0
      %v1441 = vadd.f32 0.0, %v1440
      %1442 = vmatmul.bf16.gmra.mxu0 %v1366
      %v1443 = vpop.f32.mrf.mxu0
      %v1444 = vadd.f32 0.0, %v1443
      %v1445 = vpop.f32.mrf.mxu0
      %v1446 = vadd.f32 0.0, %v1445
      %1447 = vmatmul.bf16.gmra.mxu0 %v1369
      %v1448 = vpop.f32.mrf.mxu0
      %v1449 = vadd.f32 0.0, %v1448
      %v1450 = vpop.f32.mrf.mxu0
      %v1451 = vadd.f32 0.0, %v1450
      %1452 = vmatmul.bf16.gmra.mxu0 %v1372
      %v1453 = vpop.f32.mrf.mxu0
      %v1454 = vadd.f32 0.0, %v1453
      %v1455 = vpop.f32.mrf.mxu0
      %v1456 = vadd.f32 0.0, %v1455
      %1457 = vmatmul.bf16.gmra.mxu0 %v1375
      %v1458 = vpop.f32.mrf.mxu0
      %v1459 = vadd.f32 0.0, %v1458
      %v1460 = vpop.f32.mrf.mxu0
      %v1461 = vadd.f32 0.0, %v1460
      %1462 = vmatmul.bf16.gmra.mxu0 %v1378
      %v1463 = vpop.f32.mrf.mxu0
      %v1464 = vadd.f32 0.0, %v1463
      %v1465 = vpop.f32.mrf.mxu0
      %v1466 = vadd.f32 0.0, %v1465
      %1467 = vmatmul.bf16.gmra.mxu0 %v1381
      %v1468 = vpop.f32.mrf.mxu0
      %v1469 = vadd.f32 0.0, %v1468
      %v1470 = vpop.f32.mrf.mxu0
      %v1471 = vadd.f32 0.0, %v1470
      %1472 = vmatmul.bf16.gmra.mxu0 %v1384
      %v1473 = vpop.f32.mrf.mxu0
      %v1474 = vadd.f32 0.0, %v1473
      %v1475 = vpop.f32.mrf.mxu0
      %v1476 = vadd.f32 0.0, %v1475
      %1477 = vmatmul.bf16.gmra.mxu0 %v1387
      %v1478 = vpop.f32.mrf.mxu0
      %v1479 = vadd.f32 0.0, %v1478
      %v1480 = vpop.f32.mrf.mxu0
      %v1481 = vadd.f32 0.0, %v1480
      %1482 = vmatmul.bf16.gmra.mxu0 %v1390
      %v1483 = vpop.f32.mrf.mxu0
      %v1484 = vadd.f32 0.0, %v1483
      %v1485 = vpop.f32.mrf.mxu0
      %v1486 = vadd.f32 0.0, %v1485
      %1487 = vmatmul.bf16.gmra.mxu0 %v1393
      %v1488 = vpop.f32.mrf.mxu0
      %v1489 = vadd.f32 0.0, %v1488
      %v1490 = vpop.f32.mrf.mxu0
      %v1491 = vadd.f32 0.0, %v1490
      %1492 = vmatmul.bf16.gmra.mxu0 %v1396
      %v1493 = vpop.f32.mrf.mxu0
      %v1494 = vadd.f32 0.0, %v1493
      %v1495 = vpop.f32.mrf.mxu0
      %v1496 = vadd.f32 0.0, %v1495
      %1497 = vmatmul.bf16.gmra.mxu0 %v1399
      %v1498 = vpop.f32.mrf.mxu0
      %v1499 = vadd.f32 0.0, %v1498
      %v1500 = vpop.f32.mrf.mxu0
      %v1501 = vadd.f32 0.0, %v1500
      %1502 = vmatmul.bf16.gmra.mxu0 %v1402
      %v1503 = vpop.f32.mrf.mxu0
      %v1504 = vadd.f32 0.0, %v1503
      %v1505 = vpop.f32.mrf.mxu0
      %v1506 = vadd.f32 0.0, %v1505
      %1507 = vmatmul.bf16.gmra.mxu0 %v1405
      %v1508 = vpop.f32.mrf.mxu0
      %v1509 = vadd.f32 0.0, %v1508
      %v1510 = vpop.f32.mrf.mxu0
      %v1511 = vadd.f32 0.0, %v1510
      %1512 = vmatmul.bf16.gmra.mxu0 %v1408
      %v1513 = vpop.f32.mrf.mxu0
      %v1514 = vadd.f32 0.0, %v1513
      %v1515 = vpop.f32.mrf.mxu0
      %v1516 = vadd.f32 0.0, %v1515
      %1517 = vmatmul.bf16.gmra.mxu0 %v1411
      %v1518 = vpop.f32.mrf.mxu0
      %v1519 = vadd.f32 0.0, %v1518
      %v1520 = vpop.f32.mrf.mxu0
      %v1521 = vadd.f32 0.0, %v1520
      %1522 = vmatmul.bf16.gmra.mxu0 %v1414
      %v1523 = vpop.f32.mrf.mxu0
      %v1524 = vadd.f32 0.0, %v1523
      %v1525 = vpop.f32.mrf.mxu0
      %v1526 = vadd.f32 0.0, %v1525
      %1527 = vdwg.mxu0
      %v1528 = vadd.f32 %v1128, %v1429
      %v1529 = vadd.f32 %v1129, %v1431
      %v1530 = vadd.f32 %v1130, %v1434
      %v1531 = vadd.f32 %v1131, %v1436
      %v1532 = vadd.f32 %v1132, %v1439
      %v1533 = vadd.f32 %v1133, %v1441
      %v1534 = vadd.f32 %v1134, %v1444
      %v1535 = vadd.f32 %v1135, %v1446
      %v1536 = vadd.f32 %v1136, %v1449
      %v1537 = vadd.f32 %v1137, %v1451
      %v1538 = vadd.f32 %v1138, %v1454
      %v1539 = vadd.f32 %v1139, %v1456
      %v1540 = vadd.f32 %v1140, %v1459
      %v1541 = vadd.f32 %v1141, %v1461
      %v1542 = vadd.f32 %v1142, %v1464
      %v1543 = vadd.f32 %v1143, %v1466
      %v1544 = vadd.f32 %v1144, %v1469
      %v1545 = vadd.f32 %v1145, %v1471
      %v1546 = vadd.f32 %v1146, %v1474
      %v1547 = vadd.f32 %v1147, %v1476
      %v1548 = vadd.f32 %v1148, %v1479
      %v1549 = vadd.f32 %v1149, %v1481
      %v1550 = vadd.f32 %v1150, %v1484
      %v1551 = vadd.f32 %v1151, %v1486
      %v1552 = vadd.f32 %v1152, %v1489
      %v1553 = vadd.f32 %v1153, %v1491
      %v1554 = vadd.f32 %v1154, %v1494
      %v1555 = vadd.f32 %v1155, %v1496
      %v1556 = vadd.f32 %v1156, %v1499
      %v1557 = vadd.f32 %v1157, %v1501
      %v1558 = vadd.f32 %v1158, %v1504
      %v1559 = vadd.f32 %v1159, %v1506
      %v1560 = vadd.f32 %v1160, %v1509
      %v1561 = vadd.f32 %v1161, %v1511
      %v1562 = vadd.f32 %v1162, %v1514
      %v1563 = vadd.f32 %v1163, %v1516
      %v1564 = vadd.f32 %v1164, %v1519
      %v1565 = vadd.f32 %v1165, %v1521
      %v1566 = vadd.f32 %v1166, %v1524
      %v1567 = vadd.f32 %v1167, %v1526
      %v1568 = vld [vmem:[%s248 + $0xa8] sm:$0x7]
      %s1569 = scalar_lea.vmem %s2, 8
      %v1570 = vld [vmem:[%s1569] sm:$0x3]
      %v1572 = vunpack.c.l.b16 %v1568
      %v1573 = vpack.c.b16 %v1572, %v1572
      %vm1574 = vsmask.f32 5376
      %v1576 = vshrl.u32 %v1293, 16
      %v1578 = vrot.slane %v1576, 2
      %v1579 = vshll.u32 %v1293, 16
      %v1581 = vrot.slane %v1579, 3
      %v1582 = vor.u32 %v1578, %v1581
      %v1584 = vshrl.u32 %v1294, 16
      %v1586 = vrot.slane %v1584, 2
      %v1587 = vshll.u32 %v1294, 16
      %v1589 = vrot.slane %v1587, 3
      %v1590 = vor.u32 %v1586, %v1589
      %v1591 = vsel %vm1574, %v1582, %v1590
      %v1593 = vshrl.u32 %v1295, 16
      %v1595 = vrot.slane %v1593, 2
      %v1596 = vshll.u32 %v1295, 16
      %v1598 = vrot.slane %v1596, 3
      %v1599 = vor.u32 %v1595, %v1598
      %v1600 = vsel %vm1574, %v1590, %v1599
      %v1602 = vshrl.u32 %v1296, 16
      %v1604 = vrot.slane %v1602, 2
      %v1605 = vshll.u32 %v1296, 16
      %v1607 = vrot.slane %v1605, 3
      %v1608 = vor.u32 %v1604, %v1607
      %v1609 = vsel %vm1574, %v1599, %v1608
      %v1611 = vshrl.u32 %v1297, 16
      %v1613 = vrot.slane %v1611, 2
      %v1614 = vshll.u32 %v1297, 16
      %v1616 = vrot.slane %v1614, 3
      %v1617 = vor.u32 %v1613, %v1616
      %v1618 = vsel %vm1574, %v1608, %v1617
      %v1620 = vshrl.u32 %v1298, 16
      %v1622 = vrot.slane %v1620, 2
      %v1623 = vshll.u32 %v1298, 16
      %v1625 = vrot.slane %v1623, 3
      %v1626 = vor.u32 %v1622, %v1625
      %v1627 = vsel %vm1574, %v1617, %v1626
      %v1629 = vshrl.u32 %v1299, 16
      %v1631 = vrot.slane %v1629, 2
      %v1632 = vshll.u32 %v1299, 16
      %v1634 = vrot.slane %v1632, 3
      %v1635 = vor.u32 %v1631, %v1634
      %v1636 = vsel %vm1574, %v1626, %v1635
      %v1638 = vshrl.u32 %v1300, 16
      %v1640 = vrot.slane %v1638, 2
      %v1641 = vshll.u32 %v1300, 16
      %v1643 = vrot.slane %v1641, 3
      %v1644 = vor.u32 %v1640, %v1643
      %v1645 = vsel %vm1574, %v1635, %v1644
      %v1647 = vshrl.u32 %v1301, 16
      %v1649 = vrot.slane %v1647, 2
      %v1650 = vshll.u32 %v1301, 16
      %v1652 = vrot.slane %v1650, 3
      %v1653 = vor.u32 %v1649, %v1652
      %v1654 = vsel %vm1574, %v1644, %v1653
      %v1656 = vshrl.u32 %v1302, 16
      %v1658 = vrot.slane %v1656, 2
      %v1659 = vshll.u32 %v1302, 16
      %v1661 = vrot.slane %v1659, 3
      %v1662 = vor.u32 %v1658, %v1661
      %v1663 = vsel %vm1574, %v1653, %v1662
      %v1665 = vshrl.u32 %v1303, 16
      %v1667 = vrot.slane %v1665, 2
      %v1668 = vshll.u32 %v1303, 16
      %v1670 = vrot.slane %v1668, 3
      %v1671 = vor.u32 %v1667, %v1670
      %v1672 = vsel %vm1574, %v1662, %v1671
      %v1674 = vshrl.u32 %v1304, 16
      %v1676 = vrot.slane %v1674, 2
      %v1677 = vshll.u32 %v1304, 16
      %v1679 = vrot.slane %v1677, 3
      %v1680 = vor.u32 %v1676, %v1679
      %v1681 = vsel %vm1574, %v1671, %v1680
      %v1683 = vshrl.u32 %v1305, 16
      %v1685 = vrot.slane %v1683, 2
      %v1686 = vshll.u32 %v1305, 16
      %v1688 = vrot.slane %v1686, 3
      %v1689 = vor.u32 %v1685, %v1688
      %v1690 = vsel %vm1574, %v1680, %v1689
      %v1692 = vshrl.u32 %v1306, 16
      %v1694 = vrot.slane %v1692, 2
      %v1695 = vshll.u32 %v1306, 16
      %v1697 = vrot.slane %v1695, 3
      %v1698 = vor.u32 %v1694, %v1697
      %v1699 = vsel %vm1574, %v1689, %v1698
      %v1701 = vshrl.u32 %v1307, 16
      %v1703 = vrot.slane %v1701, 2
      %v1704 = vshll.u32 %v1307, 16
      %v1706 = vrot.slane %v1704, 3
      %v1707 = vor.u32 %v1703, %v1706
      %v1708 = vsel %vm1574, %v1698, %v1707
      %v1710 = vshrl.u32 %v1308, 16
      %v1712 = vrot.slane %v1710, 2
      %v1713 = vshll.u32 %v1308, 16
      %v1715 = vrot.slane %v1713, 3
      %v1716 = vor.u32 %v1712, %v1715
      %v1717 = vsel %vm1574, %v1707, %v1716
      %v1719 = vshrl.u32 %v1309, 16
      %v1721 = vrot.slane %v1719, 2
      %v1722 = vshll.u32 %v1309, 16
      %v1724 = vrot.slane %v1722, 3
      %v1725 = vor.u32 %v1721, %v1724
      %v1726 = vsel %vm1574, %v1716, %v1725
      %v1728 = vshrl.u32 %v1310, 16
      %v1730 = vrot.slane %v1728, 2
      %v1731 = vshll.u32 %v1310, 16
      %v1733 = vrot.slane %v1731, 3
      %v1734 = vor.u32 %v1730, %v1733
      %v1735 = vsel %vm1574, %v1725, %v1734
      %v1737 = vshrl.u32 %v1311, 16
      %v1739 = vrot.slane %v1737, 2
      %v1740 = vshll.u32 %v1311, 16
      %v1742 = vrot.slane %v1740, 3
      %v1743 = vor.u32 %v1739, %v1742
      %v1744 = vsel %vm1574, %v1734, %v1743
      %v1746 = vshrl.u32 %v1312, 16
      %v1748 = vrot.slane %v1746, 2
      %v1749 = vshll.u32 %v1312, 16
      %v1751 = vrot.slane %v1749, 3
      %v1752 = vor.u32 %v1748, %v1751
      %v1753 = vsel %vm1574, %v1743, %v1752
      %v1755 = vshrl.u32 %v1573, 16
      %v1757 = vrot.slane %v1755, 2
      %v1758 = vshll.u32 %v1573, 16
      %v1760 = vrot.slane %v1758, 3
      %v1761 = vor.u32 %v1757, %v1760
      %v1762 = vsel %vm1574, %v1752, %v1761
      %v1764 = vsel %vm582, %v1591, 0
      %v1767 = vsel %vm582, %v1600, 0
      %v1770 = vsel %vm582, %v1609, 0
      %v1773 = vsel %vm582, %v1618, 0
      %v1776 = vsel %vm582, %v1627, 0
      %v1779 = vsel %vm582, %v1636, 0
      %v1782 = vsel %vm582, %v1645, 0
      %v1785 = vsel %vm582, %v1654, 0
      %v1788 = vsel %vm582, %v1663, 0
      %v1791 = vsel %vm582, %v1672, 0
      %v1794 = vsel %vm582, %v1681, 0
      %v1797 = vsel %vm582, %v1690, 0
      %v1800 = vsel %vm582, %v1699, 0
      %v1803 = vsel %vm582, %v1708, 0
      %v1806 = vsel %vm582, %v1717, 0
      %v1809 = vsel %vm582, %v1726, 0
      %v1812 = vsel %vm582, %v1735, 0
      %v1815 = vsel %vm582, %v1744, 0
      %v1818 = vsel %vm582, %v1753, 0
      %v1821 = vsel %vm582, %v1762, 0
      %v1824 = vsel %vm643, %v1570, 0
      %1826 = vmatpush.bf16.msra.mxu0 0
      %1827 = vmatpush.bf16.msra.mxu0 0
      %1828 = vmatpush.bf16.msra.mxu0 0
      %1829 = vmatpush.bf16.msra.mxu0 0
      %1830 = vmatpush.bf16.msra.mxu0 0
      %1831 = vmatpush.bf16.msra.mxu0 0
      %1832 = vmatpush.bf16.msra.mxu0 0
      %1833 = vmatpush.bf16.msra.mxu0 %v1824
      %1834 = vmatmul.bf16.gmra.mxu0 %v1764
      %v1835 = vpop.f32.mrf.mxu0
      %v1836 = vadd.f32 0.0, %v1835
      %v1837 = vpop.f32.mrf.mxu0
      %v1838 = vadd.f32 0.0, %v1837
      %1839 = vmatmul.bf16.gmra.mxu0 %v1767
      %v1840 = vpop.f32.mrf.mxu0
      %v1841 = vadd.f32 0.0, %v1840
      %v1842 = vpop.f32.mrf.mxu0
      %v1843 = vadd.f32 0.0, %v1842
      %1844 = vmatmul.bf16.gmra.mxu0 %v1770
      %v1845 = vpop.f32.mrf.mxu0
      %v1846 = vadd.f32 0.0, %v1845
      %v1847 = vpop.f32.mrf.mxu0
      %v1848 = vadd.f32 0.0, %v1847
      %1849 = vmatmul.bf16.gmra.mxu0 %v1773
      %v1850 = vpop.f32.mrf.mxu0
      %v1851 = vadd.f32 0.0, %v1850
      %v1852 = vpop.f32.mrf.mxu0
      %v1853 = vadd.f32 0.0, %v1852
      %1854 = vmatmul.bf16.gmra.mxu0 %v1776
      %v1855 = vpop.f32.mrf.mxu0
      %v1856 = vadd.f32 0.0, %v1855
      %v1857 = vpop.f32.mrf.mxu0
      %v1858 = vadd.f32 0.0, %v1857
      %1859 = vmatmul.bf16.gmra.mxu0 %v1779
      %v1860 = vpop.f32.mrf.mxu0
      %v1861 = vadd.f32 0.0, %v1860
      %v1862 = vpop.f32.mrf.mxu0
      %v1863 = vadd.f32 0.0, %v1862
      %1864 = vmatmul.bf16.gmra.mxu0 %v1782
      %v1865 = vpop.f32.mrf.mxu0
      %v1866 = vadd.f32 0.0, %v1865
      %v1867 = vpop.f32.mrf.mxu0
      %v1868 = vadd.f32 0.0, %v1867
      %1869 = vmatmul.bf16.gmra.mxu0 %v1785
      %v1870 = vpop.f32.mrf.mxu0
      %v1871 = vadd.f32 0.0, %v1870
      %v1872 = vpop.f32.mrf.mxu0
      %v1873 = vadd.f32 0.0, %v1872
      %1874 = vmatmul.bf16.gmra.mxu0 %v1788
      %v1875 = vpop.f32.mrf.mxu0
      %v1876 = vadd.f32 0.0, %v1875
      %v1877 = vpop.f32.mrf.mxu0
      %v1878 = vadd.f32 0.0, %v1877
      %1879 = vmatmul.bf16.gmra.mxu0 %v1791
      %v1880 = vpop.f32.mrf.mxu0
      %v1881 = vadd.f32 0.0, %v1880
      %v1882 = vpop.f32.mrf.mxu0
      %v1883 = vadd.f32 0.0, %v1882
      %1884 = vmatmul.bf16.gmra.mxu0 %v1794
      %v1885 = vpop.f32.mrf.mxu0
      %v1886 = vadd.f32 0.0, %v1885
      %v1887 = vpop.f32.mrf.mxu0
      %v1888 = vadd.f32 0.0, %v1887
      %1889 = vmatmul.bf16.gmra.mxu0 %v1797
      %v1890 = vpop.f32.mrf.mxu0
      %v1891 = vadd.f32 0.0, %v1890
      %v1892 = vpop.f32.mrf.mxu0
      %v1893 = vadd.f32 0.0, %v1892
      %1894 = vmatmul.bf16.gmra.mxu0 %v1800
      %v1895 = vpop.f32.mrf.mxu0
      %v1896 = vadd.f32 0.0, %v1895
      %v1897 = vpop.f32.mrf.mxu0
      %v1898 = vadd.f32 0.0, %v1897
      %1899 = vmatmul.bf16.gmra.mxu0 %v1803
      %v1900 = vpop.f32.mrf.mxu0
      %v1901 = vadd.f32 0.0, %v1900
      %v1902 = vpop.f32.mrf.mxu0
      %v1903 = vadd.f32 0.0, %v1902
      %1904 = vmatmul.bf16.gmra.mxu0 %v1806
      %v1905 = vpop.f32.mrf.mxu0
      %v1906 = vadd.f32 0.0, %v1905
      %v1907 = vpop.f32.mrf.mxu0
      %v1908 = vadd.f32 0.0, %v1907
      %1909 = vmatmul.bf16.gmra.mxu0 %v1809
      %v1910 = vpop.f32.mrf.mxu0
      %v1911 = vadd.f32 0.0, %v1910
      %v1912 = vpop.f32.mrf.mxu0
      %v1913 = vadd.f32 0.0, %v1912
      %1914 = vmatmul.bf16.gmra.mxu0 %v1812
      %v1915 = vpop.f32.mrf.mxu0
      %v1916 = vadd.f32 0.0, %v1915
      %v1917 = vpop.f32.mrf.mxu0
      %v1918 = vadd.f32 0.0, %v1917
      %1919 = vmatmul.bf16.gmra.mxu0 %v1815
      %v1920 = vpop.f32.mrf.mxu0
      %v1921 = vadd.f32 0.0, %v1920
      %v1922 = vpop.f32.mrf.mxu0
      %v1923 = vadd.f32 0.0, %v1922
      %1924 = vmatmul.bf16.gmra.mxu0 %v1818
      %v1925 = vpop.f32.mrf.mxu0
      %v1926 = vadd.f32 0.0, %v1925
      %v1927 = vpop.f32.mrf.mxu0
      %v1928 = vadd.f32 0.0, %v1927
      %1929 = vmatmul.bf16.gmra.mxu0 %v1821
      %v1930 = vpop.f32.mrf.mxu0
      %v1931 = vadd.f32 0.0, %v1930
      %v1932 = vpop.f32.mrf.mxu0
      %v1933 = vadd.f32 0.0, %v1932
      %1934 = vdwg.mxu0
      %v1935 = vadd.f32 %v1528, %v1836
      %v1936 = vadd.f32 %v1529, %v1838
      %v1937 = vadd.f32 %v1530, %v1841
      %v1938 = vadd.f32 %v1531, %v1843
      %v1939 = vadd.f32 %v1532, %v1846
      %v1940 = vadd.f32 %v1533, %v1848
      %v1941 = vadd.f32 %v1534, %v1851
      %v1942 = vadd.f32 %v1535, %v1853
      %v1943 = vadd.f32 %v1536, %v1856
      %v1944 = vadd.f32 %v1537, %v1858
      %v1945 = vadd.f32 %v1538, %v1861
      %v1946 = vadd.f32 %v1539, %v1863
      %v1947 = vadd.f32 %v1540, %v1866
      %v1948 = vadd.f32 %v1541, %v1868
      %v1949 = vadd.f32 %v1542, %v1871
      %v1950 = vadd.f32 %v1543, %v1873
      %v1951 = vadd.f32 %v1544, %v1876
      %v1952 = vadd.f32 %v1545, %v1878
      %v1953 = vadd.f32 %v1546, %v1881
      %v1954 = vadd.f32 %v1547, %v1883
      %v1955 = vadd.f32 %v1548, %v1886
      %v1956 = vadd.f32 %v1549, %v1888
      %v1957 = vadd.f32 %v1550, %v1891
      %v1958 = vadd.f32 %v1551, %v1893
      %v1959 = vadd.f32 %v1552, %v1896
      %v1960 = vadd.f32 %v1553, %v1898
      %v1961 = vadd.f32 %v1554, %v1901
      %v1962 = vadd.f32 %v1555, %v1903
      %v1963 = vadd.f32 %v1556, %v1906
      %v1964 = vadd.f32 %v1557, %v1908
      %v1965 = vadd.f32 %v1558, %v1911
      %v1966 = vadd.f32 %v1559, %v1913
      %v1967 = vadd.f32 %v1560, %v1916
      %v1968 = vadd.f32 %v1561, %v1918
      %v1969 = vadd.f32 %v1562, %v1921
      %v1970 = vadd.f32 %v1563, %v1923
      %v1971 = vadd.f32 %v1564, %v1926
      %v1972 = vadd.f32 %v1565, %v1928
      %v1973 = vadd.f32 %v1566, %v1931
      %v1974 = vadd.f32 %v1567, %v1933
      %v1975 = vld [vmem:[%s248 + $0x8] sm:$0x8]
      %s1976 = scalar_lea.vmem %s2, 10
      %v1977 = vld [vmem:[%s1976] sm:$0x3]
      %v1979 = vunpack.c.l.b16 %v1975
      %v1980 = vpack.c.b16 %v1253, %v1979
      %vm1981 = vcmask 1044480
      %v1982 = vrot.slane %v1980, 3
      %v1983 = vrot.slane %v1294, 3
      %v1984 = vsel %vm1981, %v1982, %v1983
      %v1985 = vrot.slane %v1295, 3
      %v1986 = vsel %vm1981, %v1983, %v1985
      %v1987 = vrot.slane %v1296, 3
      %v1988 = vsel %vm1981, %v1985, %v1987
      %v1989 = vrot.slane %v1297, 3
      %v1990 = vsel %vm1981, %v1987, %v1989
      %v1991 = vrot.slane %v1298, 3
      %v1992 = vsel %vm1981, %v1989, %v1991
      %v1993 = vrot.slane %v1299, 3
      %v1994 = vsel %vm1981, %v1991, %v1993
      %v1995 = vrot.slane %v1300, 3
      %v1996 = vsel %vm1981, %v1993, %v1995
      %v1997 = vrot.slane %v1301, 3
      %v1998 = vsel %vm1981, %v1995, %v1997
      %v1999 = vrot.slane %v1302, 3
      %v2000 = vsel %vm1981, %v1997, %v1999
      %v2001 = vrot.slane %v1303, 3
      %v2002 = vsel %vm1981, %v1999, %v2001
      %v2003 = vrot.slane %v1304, 3
      %v2004 = vsel %vm1981, %v2001, %v2003
      %v2005 = vrot.slane %v1305, 3
      %v2006 = vsel %vm1981, %v2003, %v2005
      %v2007 = vrot.slane %v1306, 3
      %v2008 = vsel %vm1981, %v2005, %v2007
      %v2009 = vrot.slane %v1307, 3
      %v2010 = vsel %vm1981, %v2007, %v2009
      %v2011 = vrot.slane %v1308, 3
      %v2012 = vsel %vm1981, %v2009, %v2011
      %v2013 = vrot.slane %v1309, 3
      %v2014 = vsel %vm1981, %v2011, %v2013
      %v2015 = vrot.slane %v1310, 3
      %v2016 = vsel %vm1981, %v2013, %v2015
      %v2017 = vrot.slane %v1311, 3
      %v2018 = vsel %vm1981, %v2015, %v2017
      %v2019 = vrot.slane %v1312, 3
      %v2020 = vsel %vm1981, %v2017, %v2019
      %v2021 = vrot.slane %v1573, 3
      %v2022 = vsel %vm1981, %v2019, %v2021
      %v2024 = vsel %vm582, %v1984, 0
      %v2027 = vsel %vm582, %v1986, 0
      %v2030 = vsel %vm582, %v1988, 0
      %v2033 = vsel %vm582, %v1990, 0
      %v2036 = vsel %vm582, %v1992, 0
      %v2039 = vsel %vm582, %v1994, 0
      %v2042 = vsel %vm582, %v1996, 0
      %v2045 = vsel %vm582, %v1998, 0
      %v2048 = vsel %vm582, %v2000, 0
      %v2051 = vsel %vm582, %v2002, 0
      %v2054 = vsel %vm582, %v2004, 0
      %v2057 = vsel %vm582, %v2006, 0
      %v2060 = vsel %vm582, %v2008, 0
      %v2063 = vsel %vm582, %v2010, 0
      %v2066 = vsel %vm582, %v2012, 0
      %v2069 = vsel %vm582, %v2014, 0
      %v2072 = vsel %vm582, %v2016, 0
      %v2075 = vsel %vm582, %v2018, 0
      %v2078 = vsel %vm582, %v2020, 0
      %v2081 = vsel %vm582, %v2022, 0
      %v2084 = vsel %vm643, %v1977, 0
      %2086 = vmatpush.bf16.msra.mxu0 0
      %2087 = vmatpush.bf16.msra.mxu0 0
      %2088 = vmatpush.bf16.msra.mxu0 0
      %2089 = vmatpush.bf16.msra.mxu0 0
      %2090 = vmatpush.bf16.msra.mxu0 0
      %2091 = vmatpush.bf16.msra.mxu0 0
      %2092 = vmatpush.bf16.msra.mxu0 0
      %2093 = vmatpush.bf16.msra.mxu0 %v2084
      %2094 = vmatmul.bf16.gmra.mxu0 %v2024
      %v2095 = vpop.f32.mrf.mxu0
      %v2096 = vadd.f32 0.0, %v2095
      %v2097 = vpop.f32.mrf.mxu0
      %v2098 = vadd.f32 0.0, %v2097
      %2099 = vmatmul.bf16.gmra.mxu0 %v2027
      %v2100 = vpop.f32.mrf.mxu0
      %v2101 = vadd.f32 0.0, %v2100
      %v2102 = vpop.f32.mrf.mxu0
      %v2103 = vadd.f32 0.0, %v2102
      %2104 = vmatmul.bf16.gmra.mxu0 %v2030
      %v2105 = vpop.f32.mrf.mxu0
      %v2106 = vadd.f32 0.0, %v2105
      %v2107 = vpop.f32.mrf.mxu0
      %v2108 = vadd.f32 0.0, %v2107
      %2109 = vmatmul.bf16.gmra.mxu0 %v2033
      %v2110 = vpop.f32.mrf.mxu0
      %v2111 = vadd.f32 0.0, %v2110
      %v2112 = vpop.f32.mrf.mxu0
      %v2113 = vadd.f32 0.0, %v2112
      %2114 = vmatmul.bf16.gmra.mxu0 %v2036
      %v2115 = vpop.f32.mrf.mxu0
      %v2116 = vadd.f32 0.0, %v2115
      %v2117 = vpop.f32.mrf.mxu0
      %v2118 = vadd.f32 0.0, %v2117
      %2119 = vmatmul.bf16.gmra.mxu0 %v2039
      %v2120 = vpop.f32.mrf.mxu0
      %v2121 = vadd.f32 0.0, %v2120
      %v2122 = vpop.f32.mrf.mxu0
      %v2123 = vadd.f32 0.0, %v2122
      %2124 = vmatmul.bf16.gmra.mxu0 %v2042
      %v2125 = vpop.f32.mrf.mxu0
      %v2126 = vadd.f32 0.0, %v2125
      %v2127 = vpop.f32.mrf.mxu0
      %v2128 = vadd.f32 0.0, %v2127
      %2129 = vmatmul.bf16.gmra.mxu0 %v2045
      %v2130 = vpop.f32.mrf.mxu0
      %v2131 = vadd.f32 0.0, %v2130
      %v2132 = vpop.f32.mrf.mxu0
      %v2133 = vadd.f32 0.0, %v2132
      %2134 = vmatmul.bf16.gmra.mxu0 %v2048
      %v2135 = vpop.f32.mrf.mxu0
      %v2136 = vadd.f32 0.0, %v2135
      %v2137 = vpop.f32.mrf.mxu0
      %v2138 = vadd.f32 0.0, %v2137
      %2139 = vmatmul.bf16.gmra.mxu0 %v2051
      %v2140 = vpop.f32.mrf.mxu0
      %v2141 = vadd.f32 0.0, %v2140
      %v2142 = vpop.f32.mrf.mxu0
      %v2143 = vadd.f32 0.0, %v2142
      %2144 = vmatmul.bf16.gmra.mxu0 %v2054
      %v2145 = vpop.f32.mrf.mxu0
      %v2146 = vadd.f32 0.0, %v2145
      %v2147 = vpop.f32.mrf.mxu0
      %v2148 = vadd.f32 0.0, %v2147
      %2149 = vmatmul.bf16.gmra.mxu0 %v2057
      %v2150 = vpop.f32.mrf.mxu0
      %v2151 = vadd.f32 0.0, %v2150
      %v2152 = vpop.f32.mrf.mxu0
      %v2153 = vadd.f32 0.0, %v2152
      %2154 = vmatmul.bf16.gmra.mxu0 %v2060
      %v2155 = vpop.f32.mrf.mxu0
      %v2156 = vadd.f32 0.0, %v2155
      %v2157 = vpop.f32.mrf.mxu0
      %v2158 = vadd.f32 0.0, %v2157
      %2159 = vmatmul.bf16.gmra.mxu0 %v2063
      %v2160 = vpop.f32.mrf.mxu0
      %v2161 = vadd.f32 0.0, %v2160
      %v2162 = vpop.f32.mrf.mxu0
      %v2163 = vadd.f32 0.0, %v2162
      %2164 = vmatmul.bf16.gmra.mxu0 %v2066
      %v2165 = vpop.f32.mrf.mxu0
      %v2166 = vadd.f32 0.0, %v2165
      %v2167 = vpop.f32.mrf.mxu0
      %v2168 = vadd.f32 0.0, %v2167
      %2169 = vmatmul.bf16.gmra.mxu0 %v2069
      %v2170 = vpop.f32.mrf.mxu0
      %v2171 = vadd.f32 0.0, %v2170
      %v2172 = vpop.f32.mrf.mxu0
      %v2173 = vadd.f32 0.0, %v2172
      %2174 = vmatmul.bf16.gmra.mxu0 %v2072
      %v2175 = vpop.f32.mrf.mxu0
      %v2176 = vadd.f32 0.0, %v2175
      %v2177 = vpop.f32.mrf.mxu0
      %v2178 = vadd.f32 0.0, %v2177
      %2179 = vmatmul.bf16.gmra.mxu0 %v2075
      %v2180 = vpop.f32.mrf.mxu0
      %v2181 = vadd.f32 0.0, %v2180
      %v2182 = vpop.f32.mrf.mxu0
      %v2183 = vadd.f32 0.0, %v2182
      %2184 = vmatmul.bf16.gmra.mxu0 %v2078
      %v2185 = vpop.f32.mrf.mxu0
      %v2186 = vadd.f32 0.0, %v2185
      %v2187 = vpop.f32.mrf.mxu0
      %v2188 = vadd.f32 0.0, %v2187
      %2189 = vmatmul.bf16.gmra.mxu0 %v2081
      %v2190 = vpop.f32.mrf.mxu0
      %v2191 = vadd.f32 0.0, %v2190
      %v2192 = vpop.f32.mrf.mxu0
      %v2193 = vadd.f32 0.0, %v2192
      %2194 = vdwg.mxu0
      %v2195 = vadd.f32 %v1935, %v2096
      %v2196 = vadd.f32 %v1936, %v2098
      %v2197 = vadd.f32 %v1937, %v2101
      %v2198 = vadd.f32 %v1938, %v2103
      %v2199 = vadd.f32 %v1939, %v2106
      %v2200 = vadd.f32 %v1940, %v2108
      %v2201 = vadd.f32 %v1941, %v2111
      %v2202 = vadd.f32 %v1942, %v2113
      %v2203 = vadd.f32 %v1943, %v2116
      %v2204 = vadd.f32 %v1944, %v2118
      %v2205 = vadd.f32 %v1945, %v2121
      %v2206 = vadd.f32 %v1946, %v2123
      %v2207 = vadd.f32 %v1947, %v2126
      %v2208 = vadd.f32 %v1948, %v2128
      %v2209 = vadd.f32 %v1949, %v2131
      %v2210 = vadd.f32 %v1950, %v2133
      %v2211 = vadd.f32 %v1951, %v2136
      %v2212 = vadd.f32 %v1952, %v2138
      %v2213 = vadd.f32 %v1953, %v2141
      %v2214 = vadd.f32 %v1954, %v2143
      %v2215 = vadd.f32 %v1955, %v2146
      %v2216 = vadd.f32 %v1956, %v2148
      %v2217 = vadd.f32 %v1957, %v2151
      %v2218 = vadd.f32 %v1958, %v2153
      %v2219 = vadd.f32 %v1959, %v2156
      %v2220 = vadd.f32 %v1960, %v2158
      %v2221 = vadd.f32 %v1961, %v2161
      %v2222 = vadd.f32 %v1962, %v2163
      %v2223 = vadd.f32 %v1963, %v2166
      %v2224 = vadd.f32 %v1964, %v2168
      %v2225 = vadd.f32 %v1965, %v2171
      %v2226 = vadd.f32 %v1966, %v2173
      %v2227 = vadd.f32 %v1967, %v2176
      %v2228 = vadd.f32 %v1968, %v2178
      %v2229 = vadd.f32 %v1969, %v2181
      %v2230 = vadd.f32 %v1970, %v2183
      %v2231 = vadd.f32 %v1971, %v2186
      %v2232 = vadd.f32 %v1972, %v2188
      %v2233 = vadd.f32 %v1973, %v2191
      %v2234 = vadd.f32 %v1974, %v2193
      %v2235 = vld [vmem:[%s248 + $0x14] sm:$0xf]
      %v2236 = vld [vmem:[%s248 + $0x18] sm:$0xf]
      %v2237 = vld [vmem:[%s248 + $0x1c] sm:$0xf]
      %v2238 = vld [vmem:[%s248 + $0x20] sm:$0xf]
      %v2239 = vld [vmem:[%s248 + $0x24] sm:$0xf]
      %v2240 = vld [vmem:[%s248 + $0x28] sm:$0xf]
      %v2241 = vld [vmem:[%s248 + $0x2c] sm:$0xf]
      %v2242 = vld [vmem:[%s248 + $0x30] sm:$0xf]
      %v2243 = vld [vmem:[%s248 + $0x34] sm:$0xf]
      %v2244 = vld [vmem:[%s248 + $0x38] sm:$0xf]
      %v2245 = vld [vmem:[%s248 + $0x3c] sm:$0xf]
      %v2246 = vld [vmem:[%s248 + $0x40] sm:$0xf]
      %v2247 = vld [vmem:[%s248 + $0x44] sm:$0xf]
      %v2248 = vld [vmem:[%s248 + $0x48] sm:$0xf]
      %v2249 = vld [vmem:[%s248 + $0x4c] sm:$0xf]
      %v2250 = vld [vmem:[%s248 + $0x50] sm:$0xf]
      %v2251 = vld [vmem:[%s248 + $0x54] sm:$0xf]
      %v2252 = vld [vmem:[%s248 + $0x58] sm:$0xf]
      %v2253 = vld [vmem:[%s248 + $0x5c] sm:$0xf]
      %v2254 = vld [vmem:[%s248 + $0x60] sm:$0xf]
      %v2255 = vld [vmem:[%s248 + $0x64] sm:$0xf]
      %v2256 = vld [vmem:[%s248 + $0x68] sm:$0xf]
      %v2257 = vld [vmem:[%s248 + $0x6c] sm:$0xf]
      %v2258 = vld [vmem:[%s248 + $0x70] sm:$0xf]
      %v2259 = vld [vmem:[%s248 + $0x74] sm:$0xf]
      %v2260 = vld [vmem:[%s248 + $0x78] sm:$0xf]
      %v2261 = vld [vmem:[%s248 + $0x7c] sm:$0xf]
      %v2262 = vld [vmem:[%s248 + $0x80] sm:$0xf]
      %v2263 = vld [vmem:[%s248 + $0x84] sm:$0xf]
      %v2264 = vld [vmem:[%s248 + $0x88] sm:$0xf]
      %v2265 = vld [vmem:[%s248 + $0x8c] sm:$0xf]
      %v2266 = vld [vmem:[%s248 + $0x90] sm:$0xf]
      %v2267 = vld [vmem:[%s248 + $0x94] sm:$0xf]
      %v2268 = vld [vmem:[%s248 + $0x98] sm:$0xf]
      %v2269 = vld [vmem:[%s248 + $0x9c] sm:$0xf]
      %v2270 = vld [vmem:[%s248 + $0xa0] sm:$0xf]
      %v2271 = vld [vmem:[%s248 + $0xa4] sm:$0xf]
      %v2272 = vld [vmem:[%s248 + $0xa8] sm:$0xf]
      %v2273 = vld [vmem:[%s248 + $0xac] sm:$0xf]
      %v2274 = vld [vmem:[%s248 + $0xb0] sm:$0xf]
      %s2275 = scalar_lea.vmem %s2, 12
      %v2276 = vld [vmem:[%s2275] sm:$0x3]
      %v2317 = vunpack.c.l.b16 %v2235
      %v2318 = vunpack.c.l.b16 %v2236
      %v2319 = vunpack.c.l.b16 %v2237
      %v2320 = vunpack.c.l.b16 %v2238
      %v2321 = vunpack.c.l.b16 %v2239
      %v2322 = vunpack.c.l.b16 %v2240
      %v2323 = vunpack.c.l.b16 %v2241
      %v2324 = vunpack.c.l.b16 %v2242
      %v2325 = vunpack.c.l.b16 %v2243
      %v2326 = vunpack.c.l.b16 %v2244
      %v2327 = vunpack.c.l.b16 %v2245
      %v2328 = vunpack.c.l.b16 %v2246
      %v2329 = vunpack.c.l.b16 %v2247
      %v2330 = vunpack.c.l.b16 %v2248
      %v2331 = vunpack.c.l.b16 %v2249
      %v2332 = vunpack.c.l.b16 %v2250
      %v2333 = vunpack.c.l.b16 %v2251
      %v2334 = vunpack.c.l.b16 %v2252
      %v2335 = vunpack.c.l.b16 %v2253
      %v2336 = vunpack.c.l.b16 %v2254
      %v2337 = vunpack.c.l.b16 %v2255
      %v2338 = vunpack.c.l.b16 %v2256
      %v2339 = vunpack.c.l.b16 %v2257
      %v2340 = vunpack.c.l.b16 %v2258
      %v2341 = vunpack.c.l.b16 %v2259
      %v2342 = vunpack.c.l.b16 %v2260
      %v2343 = vunpack.c.l.b16 %v2261
      %v2344 = vunpack.c.l.b16 %v2262
      %v2345 = vunpack.c.l.b16 %v2263
      %v2346 = vunpack.c.l.b16 %v2264
      %v2347 = vunpack.c.l.b16 %v2265
      %v2348 = vunpack.c.l.b16 %v2266
      %v2349 = vunpack.c.l.b16 %v2267
      %v2350 = vunpack.c.l.b16 %v2268
      %v2351 = vunpack.c.l.b16 %v2269
      %v2352 = vunpack.c.l.b16 %v2270
      %v2353 = vunpack.c.l.b16 %v2271
      %v2354 = vunpack.c.l.b16 %v2272
      %v2355 = vunpack.c.l.b16 %v2273
      %v2356 = vunpack.c.l.b16 %v2274
      %v2357 = vpack.c.b16 %v2318, %v2317
      %v2358 = vpack.c.b16 %v2320, %v2319
      %v2359 = vpack.c.b16 %v2322, %v2321
      %v2360 = vpack.c.b16 %v2324, %v2323
      %v2361 = vpack.c.b16 %v2326, %v2325
      %v2362 = vpack.c.b16 %v2328, %v2327
      %v2363 = vpack.c.b16 %v2330, %v2329
      %v2364 = vpack.c.b16 %v2332, %v2331
      %v2365 = vpack.c.b16 %v2334, %v2333
      %v2366 = vpack.c.b16 %v2336, %v2335
      %v2367 = vpack.c.b16 %v2338, %v2337
      %v2368 = vpack.c.b16 %v2340, %v2339
      %v2369 = vpack.c.b16 %v2342, %v2341
      %v2370 = vpack.c.b16 %v2344, %v2343
      %v2371 = vpack.c.b16 %v2346, %v2345
      %v2372 = vpack.c.b16 %v2348, %v2347
      %v2373 = vpack.c.b16 %v2350, %v2349
      %v2374 = vpack.c.b16 %v2352, %v2351
      %v2375 = vpack.c.b16 %v2354, %v2353
      %v2376 = vpack.c.b16 %v2356, %v2355
      %v2378 = vsel %vm582, %v2357, 0
      %v2381 = vsel %vm582, %v2358, 0
      %v2384 = vsel %vm582, %v2359, 0
      %v2387 = vsel %vm582, %v2360, 0
      %v2390 = vsel %vm582, %v2361, 0
      %v2393 = vsel %vm582, %v2362, 0
      %v2396 = vsel %vm582, %v2363, 0
      %v2399 = vsel %vm582, %v2364, 0
      %v2402 = vsel %vm582, %v2365, 0
      %v2405 = vsel %vm582, %v2366, 0
      %v2408 = vsel %vm582, %v2367, 0
      %v2411 = vsel %vm582, %v2368, 0
      %v2414 = vsel %vm582, %v2369, 0
      %v2417 = vsel %vm582, %v2370, 0
      %v2420 = vsel %vm582, %v2371, 0
      %v2423 = vsel %vm582, %v2372, 0
      %v2426 = vsel %vm582, %v2373, 0
      %v2429 = vsel %vm582, %v2374, 0
      %v2432 = vsel %vm582, %v2375, 0
      %v2435 = vsel %vm582, %v2376, 0
      %v2438 = vsel %vm643, %v2276, 0
      %2440 = vmatpush.bf16.msra.mxu0 0
      %2441 = vmatpush.bf16.msra.mxu0 0
      %2442 = vmatpush.bf16.msra.mxu0 0
      %2443 = vmatpush.bf16.msra.mxu0 0
      %2444 = vmatpush.bf16.msra.mxu0 0
      %2445 = vmatpush.bf16.msra.mxu0 0
      %2446 = vmatpush.bf16.msra.mxu0 0
      %2447 = vmatpush.bf16.msra.mxu0 %v2438
      %2448 = vmatmul.bf16.gmra.mxu0 %v2378
      %v2449 = vpop.f32.mrf.mxu0
      %v2450 = vadd.f32 0.0, %v2449
      %v2451 = vpop.f32.mrf.mxu0
      %v2452 = vadd.f32 0.0, %v2451
      %2453 = vmatmul.bf16.gmra.mxu0 %v2381
      %v2454 = vpop.f32.mrf.mxu0
      %v2455 = vadd.f32 0.0, %v2454
      %v2456 = vpop.f32.mrf.mxu0
      %v2457 = vadd.f32 0.0, %v2456
      %2458 = vmatmul.bf16.gmra.mxu0 %v2384
      %v2459 = vpop.f32.mrf.mxu0
      %v2460 = vadd.f32 0.0, %v2459
      %v2461 = vpop.f32.mrf.mxu0
      %v2462 = vadd.f32 0.0, %v2461
      %2463 = vmatmul.bf16.gmra.mxu0 %v2387
      %v2464 = vpop.f32.mrf.mxu0
      %v2465 = vadd.f32 0.0, %v2464
      %v2466 = vpop.f32.mrf.mxu0
      %v2467 = vadd.f32 0.0, %v2466
      %2468 = vmatmul.bf16.gmra.mxu0 %v2390
      %v2469 = vpop.f32.mrf.mxu0
      %v2470 = vadd.f32 0.0, %v2469
      %v2471 = vpop.f32.mrf.mxu0
      %v2472 = vadd.f32 0.0, %v2471
      %2473 = vmatmul.bf16.gmra.mxu0 %v2393
      %v2474 = vpop.f32.mrf.mxu0
      %v2475 = vadd.f32 0.0, %v2474
      %v2476 = vpop.f32.mrf.mxu0
      %v2477 = vadd.f32 0.0, %v2476
      %2478 = vmatmul.bf16.gmra.mxu0 %v2396
      %v2479 = vpop.f32.mrf.mxu0
      %v2480 = vadd.f32 0.0, %v2479
      %v2481 = vpop.f32.mrf.mxu0
      %v2482 = vadd.f32 0.0, %v2481
      %2483 = vmatmul.bf16.gmra.mxu0 %v2399
      %v2484 = vpop.f32.mrf.mxu0
      %v2485 = vadd.f32 0.0, %v2484
      %v2486 = vpop.f32.mrf.mxu0
      %v2487 = vadd.f32 0.0, %v2486
      %2488 = vmatmul.bf16.gmra.mxu0 %v2402
      %v2489 = vpop.f32.mrf.mxu0
      %v2490 = vadd.f32 0.0, %v2489
      %v2491 = vpop.f32.mrf.mxu0
      %v2492 = vadd.f32 0.0, %v2491
      %2493 = vmatmul.bf16.gmra.mxu0 %v2405
      %v2494 = vpop.f32.mrf.mxu0
      %v2495 = vadd.f32 0.0, %v2494
      %v2496 = vpop.f32.mrf.mxu0
      %v2497 = vadd.f32 0.0, %v2496
      %2498 = vmatmul.bf16.gmra.mxu0 %v2408
      %v2499 = vpop.f32.mrf.mxu0
      %v2500 = vadd.f32 0.0, %v2499
      %v2501 = vpop.f32.mrf.mxu0
      %v2502 = vadd.f32 0.0, %v2501
      %2503 = vmatmul.bf16.gmra.mxu0 %v2411
      %v2504 = vpop.f32.mrf.mxu0
      %v2505 = vadd.f32 0.0, %v2504
      %v2506 = vpop.f32.mrf.mxu0
      %v2507 = vadd.f32 0.0, %v2506
      %2508 = vmatmul.bf16.gmra.mxu0 %v2414
      %v2509 = vpop.f32.mrf.mxu0
      %v2510 = vadd.f32 0.0, %v2509
      %v2511 = vpop.f32.mrf.mxu0
      %v2512 = vadd.f32 0.0, %v2511
      %2513 = vmatmul.bf16.gmra.mxu0 %v2417
      %v2514 = vpop.f32.mrf.mxu0
      %v2515 = vadd.f32 0.0, %v2514
      %v2516 = vpop.f32.mrf.mxu0
      %v2517 = vadd.f32 0.0, %v2516
      %2518 = vmatmul.bf16.gmra.mxu0 %v2420
      %v2519 = vpop.f32.mrf.mxu0
      %v2520 = vadd.f32 0.0, %v2519
      %v2521 = vpop.f32.mrf.mxu0
      %v2522 = vadd.f32 0.0, %v2521
      %2523 = vmatmul.bf16.gmra.mxu0 %v2423
      %v2524 = vpop.f32.mrf.mxu0
      %v2525 = vadd.f32 0.0, %v2524
      %v2526 = vpop.f32.mrf.mxu0
      %v2527 = vadd.f32 0.0, %v2526
      %2528 = vmatmul.bf16.gmra.mxu0 %v2426
      %v2529 = vpop.f32.mrf.mxu0
      %v2530 = vadd.f32 0.0, %v2529
      %v2531 = vpop.f32.mrf.mxu0
      %v2532 = vadd.f32 0.0, %v2531
      %2533 = vmatmul.bf16.gmra.mxu0 %v2429
      %v2534 = vpop.f32.mrf.mxu0
      %v2535 = vadd.f32 0.0, %v2534
      %v2536 = vpop.f32.mrf.mxu0
      %v2537 = vadd.f32 0.0, %v2536
      %2538 = vmatmul.bf16.gmra.mxu0 %v2432
      %v2539 = vpop.f32.mrf.mxu0
      %v2540 = vadd.f32 0.0, %v2539
      %v2541 = vpop.f32.mrf.mxu0
      %v2542 = vadd.f32 0.0, %v2541
      %2543 = vmatmul.bf16.gmra.mxu0 %v2435
      %v2544 = vpop.f32.mrf.mxu0
      %v2545 = vadd.f32 0.0, %v2544
      %v2546 = vpop.f32.mrf.mxu0
      %v2547 = vadd.f32 0.0, %v2546
      %2548 = vdwg.mxu0
      %v2549 = vadd.f32 %v2195, %v2450
      %v2550 = vadd.f32 %v2196, %v2452
      %v2551 = vadd.f32 %v2197, %v2455
      %v2552 = vadd.f32 %v2198, %v2457
      %v2553 = vadd.f32 %v2199, %v2460
      %v2554 = vadd.f32 %v2200, %v2462
      %v2555 = vadd.f32 %v2201, %v2465
      %v2556 = vadd.f32 %v2202, %v2467
      %v2557 = vadd.f32 %v2203, %v2470
      %v2558 = vadd.f32 %v2204, %v2472
      %v2559 = vadd.f32 %v2205, %v2475
      %v2560 = vadd.f32 %v2206, %v2477
      %v2561 = vadd.f32 %v2207, %v2480
      %v2562 = vadd.f32 %v2208, %v2482
      %v2563 = vadd.f32 %v2209, %v2485
      %v2564 = vadd.f32 %v2210, %v2487
      %v2565 = vadd.f32 %v2211, %v2490
      %v2566 = vadd.f32 %v2212, %v2492
      %v2567 = vadd.f32 %v2213, %v2495
      %v2568 = vadd.f32 %v2214, %v2497
      %v2569 = vadd.f32 %v2215, %v2500
      %v2570 = vadd.f32 %v2216, %v2502
      %v2571 = vadd.f32 %v2217, %v2505
      %v2572 = vadd.f32 %v2218, %v2507
      %v2573 = vadd.f32 %v2219, %v2510
      %v2574 = vadd.f32 %v2220, %v2512
      %v2575 = vadd.f32 %v2221, %v2515
      %v2576 = vadd.f32 %v2222, %v2517
      %v2577 = vadd.f32 %v2223, %v2520
      %v2578 = vadd.f32 %v2224, %v2522
      %v2579 = vadd.f32 %v2225, %v2525
      %v2580 = vadd.f32 %v2226, %v2527
      %v2581 = vadd.f32 %v2227, %v2530
      %v2582 = vadd.f32 %v2228, %v2532
      %v2583 = vadd.f32 %v2229, %v2535
      %v2584 = vadd.f32 %v2230, %v2537
      %v2585 = vadd.f32 %v2231, %v2540
      %v2586 = vadd.f32 %v2232, %v2542
      %v2587 = vadd.f32 %v2233, %v2545
      %v2588 = vadd.f32 %v2234, %v2547
      %v2589 = vld [vmem:[%s248 + $0x14] sm:$0xf]
      %v2590 = vld [vmem:[%s248 + $0x18] sm:$0xf]
      %v2591 = vld [vmem:[%s248 + $0x1c] sm:$0xf]
      %v2592 = vld [vmem:[%s248 + $0x20] sm:$0xf]
      %v2593 = vld [vmem:[%s248 + $0x24] sm:$0xf]
      %v2594 = vld [vmem:[%s248 + $0x28] sm:$0xf]
      %v2595 = vld [vmem:[%s248 + $0x2c] sm:$0xf]
      %v2596 = vld [vmem:[%s248 + $0x30] sm:$0xf]
      %v2597 = vld [vmem:[%s248 + $0x34] sm:$0xf]
      %v2598 = vld [vmem:[%s248 + $0x38] sm:$0xf]
      %v2599 = vld [vmem:[%s248 + $0x3c] sm:$0xf]
      %v2600 = vld [vmem:[%s248 + $0x40] sm:$0xf]
      %v2601 = vld [vmem:[%s248 + $0x44] sm:$0xf]
      %v2602 = vld [vmem:[%s248 + $0x48] sm:$0xf]
      %v2603 = vld [vmem:[%s248 + $0x4c] sm:$0xf]
      %v2604 = vld [vmem:[%s248 + $0x50] sm:$0xf]
      %v2605 = vld [vmem:[%s248 + $0x54] sm:$0xf]
      %v2606 = vld [vmem:[%s248 + $0x58] sm:$0xf]
      %v2607 = vld [vmem:[%s248 + $0x5c] sm:$0xf]
      %v2608 = vld [vmem:[%s248 + $0x60] sm:$0xf]
      %v2609 = vld [vmem:[%s248 + $0x64] sm:$0xf]
      %v2610 = vld [vmem:[%s248 + $0x68] sm:$0xf]
      %v2611 = vld [vmem:[%s248 + $0x6c] sm:$0xf]
      %v2612 = vld [vmem:[%s248 + $0x70] sm:$0xf]
      %v2613 = vld [vmem:[%s248 + $0x74] sm:$0xf]
      %v2614 = vld [vmem:[%s248 + $0x78] sm:$0xf]
      %v2615 = vld [vmem:[%s248 + $0x7c] sm:$0xf]
      %v2616 = vld [vmem:[%s248 + $0x80] sm:$0xf]
      %v2617 = vld [vmem:[%s248 + $0x84] sm:$0xf]
      %v2618 = vld [vmem:[%s248 + $0x88] sm:$0xf]
      %v2619 = vld [vmem:[%s248 + $0x8c] sm:$0xf]
      %v2620 = vld [vmem:[%s248 + $0x90] sm:$0xf]
      %v2621 = vld [vmem:[%s248 + $0x94] sm:$0xf]
      %v2622 = vld [vmem:[%s248 + $0x98] sm:$0xf]
      %v2623 = vld [vmem:[%s248 + $0x9c] sm:$0xf]
      %v2624 = vld [vmem:[%s248 + $0xa0] sm:$0xf]
      %v2625 = vld [vmem:[%s248 + $0xa4] sm:$0xf]
      %v2626 = vld [vmem:[%s248 + $0xa8] sm:$0xf]
      %v2627 = vld [vmem:[%s248 + $0xac] sm:$0xf]
      %v2628 = vld [vmem:[%s248 + $0xb0] sm:$0xf]
      %v2629 = vld [vmem:[%s248 + $0xb4] sm:$0x1]
      %s2630 = scalar_lea.vmem %s2, 14
      %v2631 = vld [vmem:[%s2630] sm:$0x3]
      %v2673 = vunpack.c.l.b16 %v2589
      %v2674 = vunpack.c.l.b16 %v2590
      %v2675 = vunpack.c.l.b16 %v2591
      %v2676 = vunpack.c.l.b16 %v2592
      %v2677 = vunpack.c.l.b16 %v2593
      %v2678 = vunpack.c.l.b16 %v2594
      %v2679 = vunpack.c.l.b16 %v2595
      %v2680 = vunpack.c.l.b16 %v2596
      %v2681 = vunpack.c.l.b16 %v2597
      %v2682 = vunpack.c.l.b16 %v2598
      %v2683 = vunpack.c.l.b16 %v2599
      %v2684 = vunpack.c.l.b16 %v2600
      %v2685 = vunpack.c.l.b16 %v2601
      %v2686 = vunpack.c.l.b16 %v2602
      %v2687 = vunpack.c.l.b16 %v2603
      %v2688 = vunpack.c.l.b16 %v2604
      %v2689 = vunpack.c.l.b16 %v2605
      %v2690 = vunpack.c.l.b16 %v2606
      %v2691 = vunpack.c.l.b16 %v2607
      %v2692 = vunpack.c.l.b16 %v2608
      %v2693 = vunpack.c.l.b16 %v2609
      %v2694 = vunpack.c.l.b16 %v2610
      %v2695 = vunpack.c.l.b16 %v2611
      %v2696 = vunpack.c.l.b16 %v2612
      %v2697 = vunpack.c.l.b16 %v2613
      %v2698 = vunpack.c.l.b16 %v2614
      %v2699 = vunpack.c.l.b16 %v2615
      %v2700 = vunpack.c.l.b16 %v2616
      %v2701 = vunpack.c.l.b16 %v2617
      %v2702 = vunpack.c.l.b16 %v2618
      %v2703 = vunpack.c.l.b16 %v2619
      %v2704 = vunpack.c.l.b16 %v2620
      %v2705 = vunpack.c.l.b16 %v2621
      %v2706 = vunpack.c.l.b16 %v2622
      %v2707 = vunpack.c.l.b16 %v2623
      %v2708 = vunpack.c.l.b16 %v2624
      %v2709 = vunpack.c.l.b16 %v2625
      %v2710 = vunpack.c.l.b16 %v2626
      %v2711 = vunpack.c.l.b16 %v2627
      %v2712 = vunpack.c.l.b16 %v2628
      %v2713 = vunpack.c.l.b16 %v2629
      %v2714 = vpack.c.b16 %v2674, %v2673
      %v2715 = vpack.c.b16 %v2676, %v2675
      %v2716 = vpack.c.b16 %v2678, %v2677
      %v2717 = vpack.c.b16 %v2680, %v2679
      %v2718 = vpack.c.b16 %v2682, %v2681
      %v2719 = vpack.c.b16 %v2684, %v2683
      %v2720 = vpack.c.b16 %v2686, %v2685
      %v2721 = vpack.c.b16 %v2688, %v2687
      %v2722 = vpack.c.b16 %v2690, %v2689
      %v2723 = vpack.c.b16 %v2692, %v2691
      %v2724 = vpack.c.b16 %v2694, %v2693
      %v2725 = vpack.c.b16 %v2696, %v2695
      %v2726 = vpack.c.b16 %v2698, %v2697
      %v2727 = vpack.c.b16 %v2700, %v2699
      %v2728 = vpack.c.b16 %v2702, %v2701
      %v2729 = vpack.c.b16 %v2704, %v2703
      %v2730 = vpack.c.b16 %v2706, %v2705
      %v2731 = vpack.c.b16 %v2708, %v2707
      %v2732 = vpack.c.b16 %v2710, %v2709
      %v2733 = vpack.c.b16 %v2712, %v2711
      %v2734 = vpack.c.b16 %v2713, %v2713
      %v2736 = vshrl.u32 %v2714, 16
      %v2738 = vshll.u32 %v2714, 16
      %v2740 = vrot.slane %v2738, 1
      %v2741 = vor.u32 %v2736, %v2740
      %v2743 = vshll.u32 %v2715, 16
      %v2745 = vrot.slane %v2743, 1
      %v2746 = vsel %vm417, %v2741, %v2745
      %v2747 = vshrl.u32 %v2715, 16
      %v2749 = vor.u32 %v2747, %v2745
      %v2751 = vshll.u32 %v2716, 16
      %v2753 = vrot.slane %v2751, 1
      %v2754 = vsel %vm417, %v2749, %v2753
      %v2755 = vshrl.u32 %v2716, 16
      %v2757 = vor.u32 %v2755, %v2753
      %v2759 = vshll.u32 %v2717, 16
      %v2761 = vrot.slane %v2759, 1
      %v2762 = vsel %vm417, %v2757, %v2761
      %v2763 = vshrl.u32 %v2717, 16
      %v2765 = vor.u32 %v2763, %v2761
      %v2767 = vshll.u32 %v2718, 16
      %v2769 = vrot.slane %v2767, 1
      %v2770 = vsel %vm417, %v2765, %v2769
      %v2771 = vshrl.u32 %v2718, 16
      %v2773 = vor.u32 %v2771, %v2769
      %v2775 = vshll.u32 %v2719, 16
      %v2777 = vrot.slane %v2775, 1
      %v2778 = vsel %vm417, %v2773, %v2777
      %v2779 = vshrl.u32 %v2719, 16
      %v2781 = vor.u32 %v2779, %v2777
      %v2783 = vshll.u32 %v2720, 16
      %v2785 = vrot.slane %v2783, 1
      %v2786 = vsel %vm417, %v2781, %v2785
      %v2787 = vshrl.u32 %v2720, 16
      %v2789 = vor.u32 %v2787, %v2785
      %v2791 = vshll.u32 %v2721, 16
      %v2793 = vrot.slane %v2791, 1
      %v2794 = vsel %vm417, %v2789, %v2793
      %v2795 = vshrl.u32 %v2721, 16
      %v2797 = vor.u32 %v2795, %v2793
      %v2799 = vshll.u32 %v2722, 16
      %v2801 = vrot.slane %v2799, 1
      %v2802 = vsel %vm417, %v2797, %v2801
      %v2803 = vshrl.u32 %v2722, 16
      %v2805 = vor.u32 %v2803, %v2801
      %v2807 = vshll.u32 %v2723, 16
      %v2809 = vrot.slane %v2807, 1
      %v2810 = vsel %vm417, %v2805, %v2809
      %v2811 = vshrl.u32 %v2723, 16
      %v2813 = vor.u32 %v2811, %v2809
      %v2815 = vshll.u32 %v2724, 16
      %v2817 = vrot.slane %v2815, 1
      %v2818 = vsel %vm417, %v2813, %v2817
      %v2819 = vshrl.u32 %v2724, 16
      %v2821 = vor.u32 %v2819, %v2817
      %v2823 = vshll.u32 %v2725, 16
      %v2825 = vrot.slane %v2823, 1
      %v2826 = vsel %vm417, %v2821, %v2825
      %v2827 = vshrl.u32 %v2725, 16
      %v2829 = vor.u32 %v2827, %v2825
      %v2831 = vshll.u32 %v2726, 16
      %v2833 = vrot.slane %v2831, 1
      %v2834 = vsel %vm417, %v2829, %v2833
      %v2835 = vshrl.u32 %v2726, 16
      %v2837 = vor.u32 %v2835, %v2833
      %v2839 = vshll.u32 %v2727, 16
      %v2841 = vrot.slane %v2839, 1
      %v2842 = vsel %vm417, %v2837, %v2841
      %v2843 = vshrl.u32 %v2727, 16
      %v2845 = vor.u32 %v2843, %v2841
      %v2847 = vshll.u32 %v2728, 16
      %v2849 = vrot.slane %v2847, 1
      %v2850 = vsel %vm417, %v2845, %v2849
      %v2851 = vshrl.u32 %v2728, 16
      %v2853 = vor.u32 %v2851, %v2849
      %v2855 = vshll.u32 %v2729, 16
      %v2857 = vrot.slane %v2855, 1
      %v2858 = vsel %vm417, %v2853, %v2857
      %v2859 = vshrl.u32 %v2729, 16
      %v2861 = vor.u32 %v2859, %v2857
      %v2863 = vshll.u32 %v2730, 16
      %v2865 = vrot.slane %v2863, 1
      %v2866 = vsel %vm417, %v2861, %v2865
      %v2867 = vshrl.u32 %v2730, 16
      %v2869 = vor.u32 %v2867, %v2865
      %v2871 = vshll.u32 %v2731, 16
      %v2873 = vrot.slane %v2871, 1
      %v2874 = vsel %vm417, %v2869, %v2873
      %v2875 = vshrl.u32 %v2731, 16
      %v2877 = vor.u32 %v2875, %v2873
      %v2879 = vshll.u32 %v2732, 16
      %v2881 = vrot.slane %v2879, 1
      %v2882 = vsel %vm417, %v2877, %v2881
      %v2883 = vshrl.u32 %v2732, 16
      %v2885 = vor.u32 %v2883, %v2881
      %v2887 = vshll.u32 %v2733, 16
      %v2889 = vrot.slane %v2887, 1
      %v2890 = vsel %vm417, %v2885, %v2889
      %v2891 = vshrl.u32 %v2733, 16
      %v2893 = vor.u32 %v2891, %v2889
      %v2895 = vshll.u32 %v2734, 16
      %v2897 = vrot.slane %v2895, 1
      %v2898 = vsel %vm417, %v2893, %v2897
      %v2900 = vsel %vm582, %v2746, 0
      %v2903 = vsel %vm582, %v2754, 0
      %v2906 = vsel %vm582, %v2762, 0
      %v2909 = vsel %vm582, %v2770, 0
      %v2912 = vsel %vm582, %v2778, 0
      %v2915 = vsel %vm582, %v2786, 0
      %v2918 = vsel %vm582, %v2794, 0
      %v2921 = vsel %vm582, %v2802, 0
      %v2924 = vsel %vm582, %v2810, 0
      %v2927 = vsel %vm582, %v2818, 0
      %v2930 = vsel %vm582, %v2826, 0
      %v2933 = vsel %vm582, %v2834, 0
      %v2936 = vsel %vm582, %v2842, 0
      %v2939 = vsel %vm582, %v2850, 0
      %v2942 = vsel %vm582, %v2858, 0
      %v2945 = vsel %vm582, %v2866, 0
      %v2948 = vsel %vm582, %v2874, 0
      %v2951 = vsel %vm582, %v2882, 0
      %v2954 = vsel %vm582, %v2890, 0
      %v2957 = vsel %vm582, %v2898, 0
      %v2960 = vsel %vm643, %v2631, 0
      %2962 = vmatpush.bf16.msra.mxu0 0
      %2963 = vmatpush.bf16.msra.mxu0 0
      %2964 = vmatpush.bf16.msra.mxu0 0
      %2965 = vmatpush.bf16.msra.mxu0 0
      %2966 = vmatpush.bf16.msra.mxu0 0
      %2967 = vmatpush.bf16.msra.mxu0 0
      %2968 = vmatpush.bf16.msra.mxu0 0
      %2969 = vmatpush.bf16.msra.mxu0 %v2960
      %2970 = vmatmul.bf16.gmra.mxu0 %v2900
      %v2971 = vpop.f32.mrf.mxu0
      %v2972 = vadd.f32 0.0, %v2971
      %v2973 = vpop.f32.mrf.mxu0
      %v2974 = vadd.f32 0.0, %v2973
      %2975 = vmatmul.bf16.gmra.mxu0 %v2903
      %v2976 = vpop.f32.mrf.mxu0
      %v2977 = vadd.f32 0.0, %v2976
      %v2978 = vpop.f32.mrf.mxu0
      %v2979 = vadd.f32 0.0, %v2978
      %2980 = vmatmul.bf16.gmra.mxu0 %v2906
      %v2981 = vpop.f32.mrf.mxu0
      %v2982 = vadd.f32 0.0, %v2981
      %v2983 = vpop.f32.mrf.mxu0
      %v2984 = vadd.f32 0.0, %v2983
      %2985 = vmatmul.bf16.gmra.mxu0 %v2909
      %v2986 = vpop.f32.mrf.mxu0
      %v2987 = vadd.f32 0.0, %v2986
      %v2988 = vpop.f32.mrf.mxu0
      %v2989 = vadd.f32 0.0, %v2988
      %2990 = vmatmul.bf16.gmra.mxu0 %v2912
      %v2991 = vpop.f32.mrf.mxu0
      %v2992 = vadd.f32 0.0, %v2991
      %v2993 = vpop.f32.mrf.mxu0
      %v2994 = vadd.f32 0.0, %v2993
      %2995 = vmatmul.bf16.gmra.mxu0 %v2915
      %v2996 = vpop.f32.mrf.mxu0
      %v2997 = vadd.f32 0.0, %v2996
      %v2998 = vpop.f32.mrf.mxu0
      %v2999 = vadd.f32 0.0, %v2998
      %3000 = vmatmul.bf16.gmra.mxu0 %v2918
      %v3001 = vpop.f32.mrf.mxu0
      %v3002 = vadd.f32 0.0, %v3001
      %v3003 = vpop.f32.mrf.mxu0
      %v3004 = vadd.f32 0.0, %v3003
      %3005 = vmatmul.bf16.gmra.mxu0 %v2921
      %v3006 = vpop.f32.mrf.mxu0
      %v3007 = vadd.f32 0.0, %v3006
      %v3008 = vpop.f32.mrf.mxu0
      %v3009 = vadd.f32 0.0, %v3008
      %3010 = vmatmul.bf16.gmra.mxu0 %v2924
      %v3011 = vpop.f32.mrf.mxu0
      %v3012 = vadd.f32 0.0, %v3011
      %v3013 = vpop.f32.mrf.mxu0
      %v3014 = vadd.f32 0.0, %v3013
      %3015 = vmatmul.bf16.gmra.mxu0 %v2927
      %v3016 = vpop.f32.mrf.mxu0
      %v3017 = vadd.f32 0.0, %v3016
      %v3018 = vpop.f32.mrf.mxu0
      %v3019 = vadd.f32 0.0, %v3018
      %3020 = vmatmul.bf16.gmra.mxu0 %v2930
      %v3021 = vpop.f32.mrf.mxu0
      %v3022 = vadd.f32 0.0, %v3021
      %v3023 = vpop.f32.mrf.mxu0
      %v3024 = vadd.f32 0.0, %v3023
      %3025 = vmatmul.bf16.gmra.mxu0 %v2933
      %v3026 = vpop.f32.mrf.mxu0
      %v3027 = vadd.f32 0.0, %v3026
      %v3028 = vpop.f32.mrf.mxu0
      %v3029 = vadd.f32 0.0, %v3028
      %3030 = vmatmul.bf16.gmra.mxu0 %v2936
      %v3031 = vpop.f32.mrf.mxu0
      %v3032 = vadd.f32 0.0, %v3031
      %v3033 = vpop.f32.mrf.mxu0
      %v3034 = vadd.f32 0.0, %v3033
      %3035 = vmatmul.bf16.gmra.mxu0 %v2939
      %v3036 = vpop.f32.mrf.mxu0
      %v3037 = vadd.f32 0.0, %v3036
      %v3038 = vpop.f32.mrf.mxu0
      %v3039 = vadd.f32 0.0, %v3038
      %3040 = vmatmul.bf16.gmra.mxu0 %v2942
      %v3041 = vpop.f32.mrf.mxu0
      %v3042 = vadd.f32 0.0, %v3041
      %v3043 = vpop.f32.mrf.mxu0
      %v3044 = vadd.f32 0.0, %v3043
      %3045 = vmatmul.bf16.gmra.mxu0 %v2945
      %v3046 = vpop.f32.mrf.mxu0
      %v3047 = vadd.f32 0.0, %v3046
      %v3048 = vpop.f32.mrf.mxu0
      %v3049 = vadd.f32 0.0, %v3048
      %3050 = vmatmul.bf16.gmra.mxu0 %v2948
      %v3051 = vpop.f32.mrf.mxu0
      %v3052 = vadd.f32 0.0, %v3051
      %v3053 = vpop.f32.mrf.mxu0
      %v3054 = vadd.f32 0.0, %v3053
      %3055 = vmatmul.bf16.gmra.mxu0 %v2951
      %v3056 = vpop.f32.mrf.mxu0
      %v3057 = vadd.f32 0.0, %v3056
      %v3058 = vpop.f32.mrf.mxu0
      %v3059 = vadd.f32 0.0, %v3058
      %3060 = vmatmul.bf16.gmra.mxu0 %v2954
      %v3061 = vpop.f32.mrf.mxu0
      %v3062 = vadd.f32 0.0, %v3061
      %v3063 = vpop.f32.mrf.mxu0
      %v3064 = vadd.f32 0.0, %v3063
      %3065 = vmatmul.bf16.gmra.mxu0 %v2957
      %v3066 = vpop.f32.mrf.mxu0
      %v3067 = vadd.f32 0.0, %v3066
      %v3068 = vpop.f32.mrf.mxu0
      %v3069 = vadd.f32 0.0, %v3068
      %3070 = vdwg.mxu0
      %v3071 = vadd.f32 %v2549, %v2972
      %v3072 = vadd.f32 %v2550, %v2974
      %v3073 = vadd.f32 %v2551, %v2977
      %v3074 = vadd.f32 %v2552, %v2979
      %v3075 = vadd.f32 %v2553, %v2982
      %v3076 = vadd.f32 %v2554, %v2984
      %v3077 = vadd.f32 %v2555, %v2987
      %v3078 = vadd.f32 %v2556, %v2989
      %v3079 = vadd.f32 %v2557, %v2992
      %v3080 = vadd.f32 %v2558, %v2994
      %v3081 = vadd.f32 %v2559, %v2997
      %v3082 = vadd.f32 %v2560, %v2999
      %v3083 = vadd.f32 %v2561, %v3002
      %v3084 = vadd.f32 %v2562, %v3004
      %v3085 = vadd.f32 %v2563, %v3007
      %v3086 = vadd.f32 %v2564, %v3009
      %v3087 = vadd.f32 %v2565, %v3012
      %v3088 = vadd.f32 %v2566, %v3014
      %v3089 = vadd.f32 %v2567, %v3017
      %v3090 = vadd.f32 %v2568, %v3019
      %v3091 = vadd.f32 %v2569, %v3022
      %v3092 = vadd.f32 %v2570, %v3024
      %v3093 = vadd.f32 %v2571, %v3027
      %v3094 = vadd.f32 %v2572, %v3029
      %v3095 = vadd.f32 %v2573, %v3032
      %v3096 = vadd.f32 %v2574, %v3034
      %v3097 = vadd.f32 %v2575, %v3037
      %v3098 = vadd.f32 %v2576, %v3039
      %v3099 = vadd.f32 %v2577, %v3042
      %v3100 = vadd.f32 %v2578, %v3044
      %v3101 = vadd.f32 %v2579, %v3047
      %v3102 = vadd.f32 %v2580, %v3049
      %v3103 = vadd.f32 %v2581, %v3052
      %v3104 = vadd.f32 %v2582, %v3054
      %v3105 = vadd.f32 %v2583, %v3057
      %v3106 = vadd.f32 %v2584, %v3059
      %v3107 = vadd.f32 %v2585, %v3062
      %v3108 = vadd.f32 %v2586, %v3064
      %v3109 = vadd.f32 %v2587, %v3067
      %v3110 = vadd.f32 %v2588, %v3069
      %v3111 = vld [vmem:[%s248 + $0x14] sm:$0xe]
      %s3112 = scalar_lea.vmem %s2, 16
      %v3113 = vld [vmem:[%s3112] sm:$0x3]
      %v3115 = vunpack.c.l.b16 %v3111
      %v3116 = vpack.c.b16 %v2674, %v3115
      %v3117 = vrot.slane %v3116, 1
      %v3118 = vrot.slane %v2715, 1
      %v3119 = vsel %vm914, %v3117, %v3118
      %v3120 = vrot.slane %v2716, 1
      %v3121 = vsel %vm914, %v3118, %v3120
      %v3122 = vrot.slane %v2717, 1
      %v3123 = vsel %vm914, %v3120, %v3122
      %v3124 = vrot.slane %v2718, 1
      %v3125 = vsel %vm914, %v3122, %v3124
      %v3126 = vrot.slane %v2719, 1
      %v3127 = vsel %vm914, %v3124, %v3126
      %v3128 = vrot.slane %v2720, 1
      %v3129 = vsel %vm914, %v3126, %v3128
      %v3130 = vrot.slane %v2721, 1
      %v3131 = vsel %vm914, %v3128, %v3130
      %v3132 = vrot.slane %v2722, 1
      %v3133 = vsel %vm914, %v3130, %v3132
      %v3134 = vrot.slane %v2723, 1
      %v3135 = vsel %vm914, %v3132, %v3134
      %v3136 = vrot.slane %v2724, 1
      %v3137 = vsel %vm914, %v3134, %v3136
      %v3138 = vrot.slane %v2725, 1
      %v3139 = vsel %vm914, %v3136, %v3138
      %v3140 = vrot.slane %v2726, 1
      %v3141 = vsel %vm914, %v3138, %v3140
      %v3142 = vrot.slane %v2727, 1
      %v3143 = vsel %vm914, %v3140, %v3142
      %v3144 = vrot.slane %v2728, 1
      %v3145 = vsel %vm914, %v3142, %v3144
      %v3146 = vrot.slane %v2729, 1
      %v3147 = vsel %vm914, %v3144, %v3146
      %v3148 = vrot.slane %v2730, 1
      %v3149 = vsel %vm914, %v3146, %v3148
      %v3150 = vrot.slane %v2731, 1
      %v3151 = vsel %vm914, %v3148, %v3150
      %v3152 = vrot.slane %v2732, 1
      %v3153 = vsel %vm914, %v3150, %v3152
      %v3154 = vrot.slane %v2733, 1
      %v3155 = vsel %vm914, %v3152, %v3154
      %v3156 = vrot.slane %v2734, 1
      %v3157 = vsel %vm914, %v3154, %v3156
      %v3159 = vsel %vm582, %v3119, 0
      %v3162 = vsel %vm582, %v3121, 0
      %v3165 = vsel %vm582, %v3123, 0
      %v3168 = vsel %vm582, %v3125, 0
      %v3171 = vsel %vm582, %v3127, 0
      %v3174 = vsel %vm582, %v3129, 0
      %v3177 = vsel %vm582, %v3131, 0
      %v3180 = vsel %vm582, %v3133, 0
      %v3183 = vsel %vm582, %v3135, 0
      %v3186 = vsel %vm582, %v3137, 0
      %v3189 = vsel %vm582, %v3139, 0
      %v3192 = vsel %vm582, %v3141, 0
      %v3195 = vsel %vm582, %v3143, 0
      %v3198 = vsel %vm582, %v3145, 0
      %v3201 = vsel %vm582, %v3147, 0
      %v3204 = vsel %vm582, %v3149, 0
      %v3207 = vsel %vm582, %v3151, 0
      %v3210 = vsel %vm582, %v3153, 0
      %v3213 = vsel %vm582, %v3155, 0
      %v3216 = vsel %vm582, %v3157, 0
      %v3219 = vsel %vm643, %v3113, 0
      %3221 = vmatpush.bf16.msra.mxu0 0
      %3222 = vmatpush.bf16.msra.mxu0 0
      %3223 = vmatpush.bf16.msra.mxu0 0
      %3224 = vmatpush.bf16.msra.mxu0 0
      %3225 = vmatpush.bf16.msra.mxu0 0
      %3226 = vmatpush.bf16.msra.mxu0 0
      %3227 = vmatpush.bf16.msra.mxu0 0
      %3228 = vmatpush.bf16.msra.mxu0 %v3219
      %3229 = vmatmul.bf16.gmra.mxu0 %v3159
      %v3230 = vpop.f32.mrf.mxu0
      %v3231 = vadd.f32 0.0, %v3230
      %v3232 = vpop.f32.mrf.mxu0
      %v3233 = vadd.f32 0.0, %v3232
      %3234 = vmatmul.bf16.gmra.mxu0 %v3162
      %v3235 = vpop.f32.mrf.mxu0
      %v3236 = vadd.f32 0.0, %v3235
      %v3237 = vpop.f32.mrf.mxu0
      %v3238 = vadd.f32 0.0, %v3237
      %3239 = vmatmul.bf16.gmra.mxu0 %v3165
      %v3240 = vpop.f32.mrf.mxu0
      %v3241 = vadd.f32 0.0, %v3240
      %v3242 = vpop.f32.mrf.mxu0
      %v3243 = vadd.f32 0.0, %v3242
      %3244 = vmatmul.bf16.gmra.mxu0 %v3168
      %v3245 = vpop.f32.mrf.mxu0
      %v3246 = vadd.f32 0.0, %v3245
      %v3247 = vpop.f32.mrf.mxu0
      %v3248 = vadd.f32 0.0, %v3247
      %3249 = vmatmul.bf16.gmra.mxu0 %v3171
      %v3250 = vpop.f32.mrf.mxu0
      %v3251 = vadd.f32 0.0, %v3250
      %v3252 = vpop.f32.mrf.mxu0
      %v3253 = vadd.f32 0.0, %v3252
      %3254 = vmatmul.bf16.gmra.mxu0 %v3174
      %v3255 = vpop.f32.mrf.mxu0
      %v3256 = vadd.f32 0.0, %v3255
      %v3257 = vpop.f32.mrf.mxu0
      %v3258 = vadd.f32 0.0, %v3257
      %3259 = vmatmul.bf16.gmra.mxu0 %v3177
      %v3260 = vpop.f32.mrf.mxu0
      %v3261 = vadd.f32 0.0, %v3260
      %v3262 = vpop.f32.mrf.mxu0
      %v3263 = vadd.f32 0.0, %v3262
      %3264 = vmatmul.bf16.gmra.mxu0 %v3180
      %v3265 = vpop.f32.mrf.mxu0
      %v3266 = vadd.f32 0.0, %v3265
      %v3267 = vpop.f32.mrf.mxu0
      %v3268 = vadd.f32 0.0, %v3267
      %3269 = vmatmul.bf16.gmra.mxu0 %v3183
      %v3270 = vpop.f32.mrf.mxu0
      %v3271 = vadd.f32 0.0, %v3270
      %v3272 = vpop.f32.mrf.mxu0
      %v3273 = vadd.f32 0.0, %v3272
      %3274 = vmatmul.bf16.gmra.mxu0 %v3186
      %v3275 = vpop.f32.mrf.mxu0
      %v3276 = vadd.f32 0.0, %v3275
      %v3277 = vpop.f32.mrf.mxu0
      %v3278 = vadd.f32 0.0, %v3277
      %3279 = vmatmul.bf16.gmra.mxu0 %v3189
      %v3280 = vpop.f32.mrf.mxu0
      %v3281 = vadd.f32 0.0, %v3280
      %v3282 = vpop.f32.mrf.mxu0
      %v3283 = vadd.f32 0.0, %v3282
      %3284 = vmatmul.bf16.gmra.mxu0 %v3192
      %v3285 = vpop.f32.mrf.mxu0
      %v3286 = vadd.f32 0.0, %v3285
      %v3287 = vpop.f32.mrf.mxu0
      %v3288 = vadd.f32 0.0, %v3287
      %3289 = vmatmul.bf16.gmra.mxu0 %v3195
      %v3290 = vpop.f32.mrf.mxu0
      %v3291 = vadd.f32 0.0, %v3290
      %v3292 = vpop.f32.mrf.mxu0
      %v3293 = vadd.f32 0.0, %v3292
      %3294 = vmatmul.bf16.gmra.mxu0 %v3198
      %v3295 = vpop.f32.mrf.mxu0
      %v3296 = vadd.f32 0.0, %v3295
      %v3297 = vpop.f32.mrf.mxu0
      %v3298 = vadd.f32 0.0, %v3297
      %3299 = vmatmul.bf16.gmra.mxu0 %v3201
      %v3300 = vpop.f32.mrf.mxu0
      %v3301 = vadd.f32 0.0, %v3300
      %v3302 = vpop.f32.mrf.mxu0
      %v3303 = vadd.f32 0.0, %v3302
      %3304 = vmatmul.bf16.gmra.mxu0 %v3204
      %v3305 = vpop.f32.mrf.mxu0
      %v3306 = vadd.f32 0.0, %v3305
      %v3307 = vpop.f32.mrf.mxu0
      %v3308 = vadd.f32 0.0, %v3307
      %3309 = vmatmul.bf16.gmra.mxu0 %v3207
      %v3310 = vpop.f32.mrf.mxu0
      %v3311 = vadd.f32 0.0, %v3310
      %v3312 = vpop.f32.mrf.mxu0
      %v3313 = vadd.f32 0.0, %v3312
      %3314 = vmatmul.bf16.gmra.mxu0 %v3210
      %v3315 = vpop.f32.mrf.mxu0
      %v3316 = vadd.f32 0.0, %v3315
      %v3317 = vpop.f32.mrf.mxu0
      %v3318 = vadd.f32 0.0, %v3317
      %3319 = vmatmul.bf16.gmra.mxu0 %v3213
      %v3320 = vpop.f32.mrf.mxu0
      %v3321 = vadd.f32 0.0, %v3320
      %v3322 = vpop.f32.mrf.mxu0
      %v3323 = vadd.f32 0.0, %v3322
      %3324 = vmatmul.bf16.gmra.mxu0 %v3216
      %v3325 = vpop.f32.mrf.mxu0
      %v3326 = vadd.f32 0.0, %v3325
      %v3327 = vpop.f32.mrf.mxu0
      %v3328 = vadd.f32 0.0, %v3327
      %3329 = vdwg.mxu0
      %v3330 = vadd.f32 %v3071, %v3231
      %v3331 = vadd.f32 %v3072, %v3233
      %v3332 = vadd.f32 %v3073, %v3236
      %v3333 = vadd.f32 %v3074, %v3238
      %v3334 = vadd.f32 %v3075, %v3241
      %v3335 = vadd.f32 %v3076, %v3243
      %v3336 = vadd.f32 %v3077, %v3246
      %v3337 = vadd.f32 %v3078, %v3248
      %v3338 = vadd.f32 %v3079, %v3251
      %v3339 = vadd.f32 %v3080, %v3253
      %v3340 = vadd.f32 %v3081, %v3256
      %v3341 = vadd.f32 %v3082, %v3258
      %v3342 = vadd.f32 %v3083, %v3261
      %v3343 = vadd.f32 %v3084, %v3263
      %v3344 = vadd.f32 %v3085, %v3266
      %v3345 = vadd.f32 %v3086, %v3268
      %v3346 = vadd.f32 %v3087, %v3271
      %v3347 = vadd.f32 %v3088, %v3273
      %v3348 = vadd.f32 %v3089, %v3276
      %v3349 = vadd.f32 %v3090, %v3278
      %v3350 = vadd.f32 %v3091, %v3281
      %v3351 = vadd.f32 %v3092, %v3283
      %v3352 = vadd.f32 %v3093, %v3286
      %v3353 = vadd.f32 %v3094, %v3288
      %v3354 = vadd.f32 %v3095, %v3291
      %v3355 = vadd.f32 %v3096, %v3293
      %v3356 = vadd.f32 %v3097, %v3296
      %v3357 = vadd.f32 %v3098, %v3298
      %v3358 = vadd.f32 %v3099, %v3301
      %v3359 = vadd.f32 %v3100, %v3303
      %v3360 = vadd.f32 %v3101, %v3306
      %v3361 = vadd.f32 %v3102, %v3308
      %v3362 = vadd.f32 %v3103, %v3311
      %v3363 = vadd.f32 %v3104, %v3313
      %v3364 = vadd.f32 %v3105, %v3316
      %v3365 = vadd.f32 %v3106, %v3318
      %v3366 = vadd.f32 %v3107, %v3321
      %v3367 = vadd.f32 %v3108, %v3323
      %v3368 = vadd.f32 %v3109, %v3326
      %v3369 = vadd.f32 %v3110, %v3328
      %v3370 = vld [vmem:[%s253] sm:$0xf]
      %v3371 = vld [vmem:[%s253 + $0x4] sm:$0xf]
      %v3372 = vld [vmem:[%s253 + $0x8] sm:$0xf]
      %v3373 = vld [vmem:[%s253 + $0xc] sm:$0xf]
      %v3374 = vld [vmem:[%s253 + $0x10] sm:$0xf]
      %v3375 = vld [vmem:[%s253 + $0x14] sm:$0xf]
      %v3376 = vld [vmem:[%s253 + $0x18] sm:$0xf]
      %v3377 = vld [vmem:[%s253 + $0x1c] sm:$0xf]
      %v3378 = vld [vmem:[%s253 + $0x20] sm:$0xf]
      %v3379 = vld [vmem:[%s253 + $0x24] sm:$0xf]
      %v3380 = vld [vmem:[%s253 + $0x28] sm:$0xf]
      %v3381 = vld [vmem:[%s253 + $0x2c] sm:$0xf]
      %v3382 = vld [vmem:[%s253 + $0x30] sm:$0xf]
      %v3383 = vld [vmem:[%s253 + $0x34] sm:$0xf]
      %v3384 = vld [vmem:[%s253 + $0x38] sm:$0xf]
      %v3385 = vld [vmem:[%s253 + $0x3c] sm:$0xf]
      %v3386 = vld [vmem:[%s253 + $0x40] sm:$0xf]
      %v3387 = vld [vmem:[%s253 + $0x44] sm:$0xf]
      %v3388 = vld [vmem:[%s253 + $0x48] sm:$0xf]
      %v3389 = vld [vmem:[%s253 + $0x4c] sm:$0xf]
      %v3390 = vld [vmem:[%s253 + $0x50] sm:$0xf]
      %v3391 = vld [vmem:[%s253 + $0x54] sm:$0xf]
      %v3392 = vld [vmem:[%s253 + $0x58] sm:$0xf]
      %v3393 = vld [vmem:[%s253 + $0x5c] sm:$0xf]
      %v3394 = vld [vmem:[%s253 + $0x60] sm:$0xf]
      %v3395 = vld [vmem:[%s253 + $0x64] sm:$0xf]
      %v3396 = vld [vmem:[%s253 + $0x68] sm:$0xf]
      %v3397 = vld [vmem:[%s253 + $0x6c] sm:$0xf]
      %v3398 = vld [vmem:[%s253 + $0x70] sm:$0xf]
      %v3399 = vld [vmem:[%s253 + $0x74] sm:$0xf]
      %v3400 = vld [vmem:[%s253 + $0x78] sm:$0xf]
      %v3401 = vld [vmem:[%s253 + $0x7c] sm:$0xf]
      %v3402 = vld [vmem:[%s253 + $0x80] sm:$0xf]
      %v3403 = vld [vmem:[%s253 + $0x84] sm:$0xf]
      %v3404 = vld [vmem:[%s253 + $0x88] sm:$0xf]
      %v3405 = vld [vmem:[%s253 + $0x8c] sm:$0xf]
      %v3406 = vld [vmem:[%s253 + $0x90] sm:$0xf]
      %v3407 = vld [vmem:[%s253 + $0x94] sm:$0xf]
      %v3408 = vld [vmem:[%s253 + $0x98] sm:$0xf]
      %v3409 = vld [vmem:[%s253 + $0x9c] sm:$0xf]
      %v3410 = vunpack.c.l.bf16 %v3370
      %v3411 = vunpack.c.l.bf16 %v3371
      %v3412 = vunpack.c.l.bf16 %v3372
      %v3413 = vunpack.c.l.bf16 %v3373
      %v3414 = vunpack.c.l.bf16 %v3374
      %v3415 = vunpack.c.l.bf16 %v3375
      %v3416 = vunpack.c.l.bf16 %v3376
      %v3417 = vunpack.c.l.bf16 %v3377
      %v3418 = vunpack.c.l.bf16 %v3378
      %v3419 = vunpack.c.l.bf16 %v3379
      %v3420 = vunpack.c.l.bf16 %v3380
      %v3421 = vunpack.c.l.bf16 %v3381
      %v3422 = vunpack.c.l.bf16 %v3382
      %v3423 = vunpack.c.l.bf16 %v3383
      %v3424 = vunpack.c.l.bf16 %v3384
      %v3425 = vunpack.c.l.bf16 %v3385
      %v3426 = vunpack.c.l.bf16 %v3386
      %v3427 = vunpack.c.l.bf16 %v3387
      %v3428 = vunpack.c.l.bf16 %v3388
      %v3429 = vunpack.c.l.bf16 %v3389
      %v3430 = vunpack.c.l.bf16 %v3390
      %v3431 = vunpack.c.l.bf16 %v3391
      %v3432 = vunpack.c.l.bf16 %v3392
      %v3433 = vunpack.c.l.bf16 %v3393
      %v3434 = vunpack.c.l.bf16 %v3394
      %v3435 = vunpack.c.l.bf16 %v3395
      %v3436 = vunpack.c.l.bf16 %v3396
      %v3437 = vunpack.c.l.bf16 %v3397
      %v3438 = vunpack.c.l.bf16 %v3398
      %v3439 = vunpack.c.l.bf16 %v3399
      %v3440 = vunpack.c.l.bf16 %v3400
      %v3441 = vunpack.c.l.bf16 %v3401
      %v3442 = vunpack.c.l.bf16 %v3402
      %v3443 = vunpack.c.l.bf16 %v3403
      %v3444 = vunpack.c.l.bf16 %v3404
      %v3445 = vunpack.c.l.bf16 %v3405
      %v3446 = vunpack.c.l.bf16 %v3406
      %v3447 = vunpack.c.l.bf16 %v3407
      %v3448 = vunpack.c.l.bf16 %v3408
      %v3449 = vunpack.c.l.bf16 %v3409
      %3451 = vset.pattern.permute.xlu0 0
      %3452 = vperm.xlu0 %3451, %v3410
      %v3453 = vpop.permute.xlu0 %3452
      %3456 = vset.pattern.permute.xlu0 0
      %3457 = vperm.xlu0 %3456, %v3411
      %v3458 = vpop.permute.xlu0 %3457
      %3461 = vset.pattern.permute.xlu0 0
      %3462 = vperm.xlu0 %3461, %v3412
      %v3463 = vpop.permute.xlu0 %3462
      %3466 = vset.pattern.permute.xlu0 0
      %3467 = vperm.xlu0 %3466, %v3413
      %v3468 = vpop.permute.xlu0 %3467
      %3471 = vset.pattern.permute.xlu0 0
      %3472 = vperm.xlu0 %3471, %v3414
      %v3473 = vpop.permute.xlu0 %3472
      %3476 = vset.pattern.permute.xlu0 0
      %3477 = vperm.xlu0 %3476, %v3415
      %v3478 = vpop.permute.xlu0 %3477
      %3481 = vset.pattern.permute.xlu0 0
      %3482 = vperm.xlu0 %3481, %v3416
      %v3483 = vpop.permute.xlu0 %3482
      %3486 = vset.pattern.permute.xlu0 0
      %3487 = vperm.xlu0 %3486, %v3417
      %v3488 = vpop.permute.xlu0 %3487
      %3491 = vset.pattern.permute.xlu0 0
      %3492 = vperm.xlu0 %3491, %v3418
      %v3493 = vpop.permute.xlu0 %3492
      %3496 = vset.pattern.permute.xlu0 0
      %3497 = vperm.xlu0 %3496, %v3419
      %v3498 = vpop.permute.xlu0 %3497
      %3501 = vset.pattern.permute.xlu0 0
      %3502 = vperm.xlu0 %3501, %v3420
      %v3503 = vpop.permute.xlu0 %3502
      %3506 = vset.pattern.permute.xlu0 0
      %3507 = vperm.xlu0 %3506, %v3421
      %v3508 = vpop.permute.xlu0 %3507
      %3511 = vset.pattern.permute.xlu0 0
      %3512 = vperm.xlu0 %3511, %v3422
      %v3513 = vpop.permute.xlu0 %3512
      %3516 = vset.pattern.permute.xlu0 0
      %3517 = vperm.xlu0 %3516, %v3423
      %v3518 = vpop.permute.xlu0 %3517
      %3521 = vset.pattern.permute.xlu0 0
      %3522 = vperm.xlu0 %3521, %v3424
      %v3523 = vpop.permute.xlu0 %3522
      %3526 = vset.pattern.permute.xlu0 0
      %3527 = vperm.xlu0 %3526, %v3425
      %v3528 = vpop.permute.xlu0 %3527
      %3531 = vset.pattern.permute.xlu0 0
      %3532 = vperm.xlu0 %3531, %v3426
      %v3533 = vpop.permute.xlu0 %3532
      %3536 = vset.pattern.permute.xlu0 0
      %3537 = vperm.xlu0 %3536, %v3427
      %v3538 = vpop.permute.xlu0 %3537
      %3541 = vset.pattern.permute.xlu0 0
      %3542 = vperm.xlu0 %3541, %v3428
      %v3543 = vpop.permute.xlu0 %3542
      %3546 = vset.pattern.permute.xlu0 0
      %3547 = vperm.xlu0 %3546, %v3429
      %v3548 = vpop.permute.xlu0 %3547
      %3551 = vset.pattern.permute.xlu0 0
      %3552 = vperm.xlu0 %3551, %v3430
      %v3553 = vpop.permute.xlu0 %3552
      %3556 = vset.pattern.permute.xlu0 0
      %3557 = vperm.xlu0 %3556, %v3431
      %v3558 = vpop.permute.xlu0 %3557
      %3561 = vset.pattern.permute.xlu0 0
      %3562 = vperm.xlu0 %3561, %v3432
      %v3563 = vpop.permute.xlu0 %3562
      %3566 = vset.pattern.permute.xlu0 0
      %3567 = vperm.xlu0 %3566, %v3433
      %v3568 = vpop.permute.xlu0 %3567
      %3571 = vset.pattern.permute.xlu0 0
      %3572 = vperm.xlu0 %3571, %v3434
      %v3573 = vpop.permute.xlu0 %3572
      %3576 = vset.pattern.permute.xlu0 0
      %3577 = vperm.xlu0 %3576, %v3435
      %v3578 = vpop.permute.xlu0 %3577
      %3581 = vset.pattern.permute.xlu0 0
      %3582 = vperm.xlu0 %3581, %v3436
      %v3583 = vpop.permute.xlu0 %3582
      %3586 = vset.pattern.permute.xlu0 0
      %3587 = vperm.xlu0 %3586, %v3437
      %v3588 = vpop.permute.xlu0 %3587
      %3591 = vset.pattern.permute.xlu0 0
      %3592 = vperm.xlu0 %3591, %v3438
      %v3593 = vpop.permute.xlu0 %3592
      %3596 = vset.pattern.permute.xlu0 0
      %3597 = vperm.xlu0 %3596, %v3439
      %v3598 = vpop.permute.xlu0 %3597
      %3601 = vset.pattern.permute.xlu0 0
      %3602 = vperm.xlu0 %3601, %v3440
      %v3603 = vpop.permute.xlu0 %3602
      %3606 = vset.pattern.permute.xlu0 0
      %3607 = vperm.xlu0 %3606, %v3441
      %v3608 = vpop.permute.xlu0 %3607
      %3611 = vset.pattern.permute.xlu0 0
      %3612 = vperm.xlu0 %3611, %v3442
      %v3613 = vpop.permute.xlu0 %3612
      %3616 = vset.pattern.permute.xlu0 0
      %3617 = vperm.xlu0 %3616, %v3443
      %v3618 = vpop.permute.xlu0 %3617
      %3621 = vset.pattern.permute.xlu0 0
      %3622 = vperm.xlu0 %3621, %v3444
      %v3623 = vpop.permute.xlu0 %3622
      %3626 = vset.pattern.permute.xlu0 0
      %3627 = vperm.xlu0 %3626, %v3445
      %v3628 = vpop.permute.xlu0 %3627
      %3631 = vset.pattern.permute.xlu0 0
      %3632 = vperm.xlu0 %3631, %v3446
      %v3633 = vpop.permute.xlu0 %3632
      %3636 = vset.pattern.permute.xlu0 0
      %3637 = vperm.xlu0 %3636, %v3447
      %v3638 = vpop.permute.xlu0 %3637
      %3641 = vset.pattern.permute.xlu0 0
      %3642 = vperm.xlu0 %3641, %v3448
      %v3643 = vpop.permute.xlu0 %3642
      %3646 = vset.pattern.permute.xlu0 0
      %3647 = vperm.xlu0 %3646, %v3449
      %v3648 = vpop.permute.xlu0 %3647
      %v3650 = vmul.f32 %v3330, %v3453
      %v3651 = vmul.f32 %v3331, %v3458
      %v3652 = vmul.f32 %v3332, %v3463
      %v3653 = vmul.f32 %v3333, %v3468
      %v3654 = vmul.f32 %v3334, %v3473
      %v3655 = vmul.f32 %v3335, %v3478
      %v3656 = vmul.f32 %v3336, %v3483
      %v3657 = vmul.f32 %v3337, %v3488
      %v3658 = vmul.f32 %v3338, %v3493
      %v3659 = vmul.f32 %v3339, %v3498
      %v3660 = vmul.f32 %v3340, %v3503
      %v3661 = vmul.f32 %v3341, %v3508
      %v3662 = vmul.f32 %v3342, %v3513
      %v3663 = vmul.f32 %v3343, %v3518
      %v3664 = vmul.f32 %v3344, %v3523
      %v3665 = vmul.f32 %v3345, %v3528
      %v3666 = vmul.f32 %v3346, %v3533
      %v3667 = vmul.f32 %v3347, %v3538
      %v3668 = vmul.f32 %v3348, %v3543
      %v3669 = vmul.f32 %v3349, %v3548
      %v3670 = vmul.f32 %v3350, %v3553
      %v3671 = vmul.f32 %v3351, %v3558
      %v3672 = vmul.f32 %v3352, %v3563
      %v3673 = vmul.f32 %v3353, %v3568
      %v3674 = vmul.f32 %v3354, %v3573
      %v3675 = vmul.f32 %v3355, %v3578
      %v3676 = vmul.f32 %v3356, %v3583
      %v3677 = vmul.f32 %v3357, %v3588
      %v3678 = vmul.f32 %v3358, %v3593
      %v3679 = vmul.f32 %v3359, %v3598
      %v3680 = vmul.f32 %v3360, %v3603
      %v3681 = vmul.f32 %v3361, %v3608
      %v3682 = vmul.f32 %v3362, %v3613
      %v3683 = vmul.f32 %v3363, %v3618
      %v3684 = vmul.f32 %v3364, %v3623
      %v3685 = vmul.f32 %v3365, %v3628
      %v3686 = vmul.f32 %v3366, %v3633
      %v3687 = vmul.f32 %v3367, %v3638
      %v3688 = vmul.f32 %v3368, %v3643
      %v3689 = vmul.f32 %v3369, %v3648
      %v3690 = vpack.c.bf16 %v3650, %v3650
      %v3691 = vpack.c.bf16 %v3651, %v3651
      %v3692 = vpack.c.bf16 %v3652, %v3652
      %v3693 = vpack.c.bf16 %v3653, %v3653
      %v3694 = vpack.c.bf16 %v3654, %v3654
      %v3695 = vpack.c.bf16 %v3655, %v3655
      %v3696 = vpack.c.bf16 %v3656, %v3656
      %v3697 = vpack.c.bf16 %v3657, %v3657
      %v3698 = vpack.c.bf16 %v3658, %v3658
      %v3699 = vpack.c.bf16 %v3659, %v3659
      %v3700 = vpack.c.bf16 %v3660, %v3660
      %v3701 = vpack.c.bf16 %v3661, %v3661
      %v3702 = vpack.c.bf16 %v3662, %v3662
      %v3703 = vpack.c.bf16 %v3663, %v3663
      %v3704 = vpack.c.bf16 %v3664, %v3664
      %v3705 = vpack.c.bf16 %v3665, %v3665
      %v3706 = vpack.c.bf16 %v3666, %v3666
      %v3707 = vpack.c.bf16 %v3667, %v3667
      %v3708 = vpack.c.bf16 %v3668, %v3668
      %v3709 = vpack.c.bf16 %v3669, %v3669
      %v3710 = vpack.c.bf16 %v3670, %v3670
      %v3711 = vpack.c.bf16 %v3671, %v3671
      %v3712 = vpack.c.bf16 %v3672, %v3672
      %v3713 = vpack.c.bf16 %v3673, %v3673
      %v3714 = vpack.c.bf16 %v3674, %v3674
      %v3715 = vpack.c.bf16 %v3675, %v3675
      %v3716 = vpack.c.bf16 %v3676, %v3676
      %v3717 = vpack.c.bf16 %v3677, %v3677
      %v3718 = vpack.c.bf16 %v3678, %v3678
      %v3719 = vpack.c.bf16 %v3679, %v3679
      %v3720 = vpack.c.bf16 %v3680, %v3680
      %v3721 = vpack.c.bf16 %v3681, %v3681
      %v3722 = vpack.c.bf16 %v3682, %v3682
      %v3723 = vpack.c.bf16 %v3683, %v3683
      %v3724 = vpack.c.bf16 %v3684, %v3684
      %v3725 = vpack.c.bf16 %v3685, %v3685
      %v3726 = vpack.c.bf16 %v3686, %v3686
      %v3727 = vpack.c.bf16 %v3687, %v3687
      %v3728 = vpack.c.bf16 %v3688, %v3688
      %v3729 = vpack.c.bf16 %v3689, %v3689
      %3730 = vst [vmem:[%s259] sm:$0xf] %v3690
      %3731 = vst [vmem:[%s259 + $0x4] sm:$0xf] %v3691
      %3732 = vst [vmem:[%s259 + $0x8] sm:$0xf] %v3692
      %3733 = vst [vmem:[%s259 + $0xc] sm:$0xf] %v3693
      %3734 = vst [vmem:[%s259 + $0x10] sm:$0xf] %v3694
      %3735 = vst [vmem:[%s259 + $0x14] sm:$0xf] %v3695
      %3736 = vst [vmem:[%s259 + $0x18] sm:$0xf] %v3696
      %3737 = vst [vmem:[%s259 + $0x1c] sm:$0xf] %v3697
      %3738 = vst [vmem:[%s259 + $0x20] sm:$0xf] %v3698
      %3739 = vst [vmem:[%s259 + $0x24] sm:$0xf] %v3699
      %3740 = vst [vmem:[%s259 + $0x28] sm:$0xf] %v3700
      %3741 = vst [vmem:[%s259 + $0x2c] sm:$0xf] %v3701
      %3742 = vst [vmem:[%s259 + $0x30] sm:$0xf] %v3702
      %3743 = vst [vmem:[%s259 + $0x34] sm:$0xf] %v3703
      %3744 = vst [vmem:[%s259 + $0x38] sm:$0xf] %v3704
      %3745 = vst [vmem:[%s259 + $0x3c] sm:$0xf] %v3705
      %3746 = vst [vmem:[%s259 + $0x40] sm:$0xf] %v3706
      %3747 = vst [vmem:[%s259 + $0x44] sm:$0xf] %v3707
      %3748 = vst [vmem:[%s259 + $0x48] sm:$0xf] %v3708
      %3749 = vst [vmem:[%s259 + $0x4c] sm:$0xf] %v3709
      %3750 = vst [vmem:[%s259 + $0x50] sm:$0xf] %v3710
      %3751 = vst [vmem:[%s259 + $0x54] sm:$0xf] %v3711
      %3752 = vst [vmem:[%s259 + $0x58] sm:$0xf] %v3712
      %3753 = vst [vmem:[%s259 + $0x5c] sm:$0xf] %v3713
      %3754 = vst [vmem:[%s259 + $0x60] sm:$0xf] %v3714
      %3755 = vst [vmem:[%s259 + $0x64] sm:$0xf] %v3715
      %3756 = vst [vmem:[%s259 + $0x68] sm:$0xf] %v3716
      %3757 = vst [vmem:[%s259 + $0x6c] sm:$0xf] %v3717
      %3758 = vst [vmem:[%s259 + $0x70] sm:$0xf] %v3718
      %3759 = vst [vmem:[%s259 + $0x74] sm:$0xf] %v3719
      %3760 = vst [vmem:[%s259 + $0x78] sm:$0xf] %v3720
      %3761 = vst [vmem:[%s259 + $0x7c] sm:$0xf] %v3721
      %3762 = vst [vmem:[%s259 + $0x80] sm:$0xf] %v3722
      %3763 = vst [vmem:[%s259 + $0x84] sm:$0xf] %v3723
      %3764 = vst [vmem:[%s259 + $0x88] sm:$0xf] %v3724
      %3765 = vst [vmem:[%s259 + $0x8c] sm:$0xf] %v3725
      %3766 = vst [vmem:[%s259 + $0x90] sm:$0xf] %v3726
      %3767 = vst [vmem:[%s259 + $0x94] sm:$0xf] %v3727
      %3768 = vst [vmem:[%s259 + $0x98] sm:$0xf] %v3728
      %3769 = vst [vmem:[%s259 + $0x9c] sm:$0xf] %v3729
      %v3770 = vadd.f32 %v3650, %v3651
      %v3771 = vadd.f32 %v3770, %v3652
      %v3772 = vadd.f32 %v3771, %v3653
      %v3773 = vadd.f32 %v3772, %v3654
      %v3774 = vadd.f32 %v3773, %v3655
      %v3775 = vadd.f32 %v3774, %v3656
      %v3776 = vadd.f32 %v3775, %v3657
      %v3777 = vadd.f32 %v3776, %v3658
      %v3778 = vadd.f32 %v3777, %v3659
      %v3779 = vadd.f32 %v3778, %v3660
      %v3780 = vadd.f32 %v3779, %v3661
      %v3781 = vadd.f32 %v3780, %v3662
      %v3782 = vadd.f32 %v3781, %v3663
      %v3783 = vadd.f32 %v3782, %v3664
      %v3784 = vadd.f32 %v3783, %v3665
      %v3785 = vadd.f32 %v3784, %v3666
      %v3786 = vadd.f32 %v3785, %v3667
      %v3787 = vadd.f32 %v3786, %v3668
      %v3788 = vadd.f32 %v3787, %v3669
      %v3789 = vadd.f32 %v3788, %v3670
      %v3790 = vadd.f32 %v3789, %v3671
      %v3791 = vadd.f32 %v3790, %v3672
      %v3792 = vadd.f32 %v3791, %v3673
      %v3793 = vadd.f32 %v3792, %v3674
      %v3794 = vadd.f32 %v3793, %v3675
      %v3795 = vadd.f32 %v3794, %v3676
      %v3796 = vadd.f32 %v3795, %v3677
      %v3797 = vadd.f32 %v3796, %v3678
      %v3798 = vadd.f32 %v3797, %v3679
      %v3799 = vadd.f32 %v3798, %v3680
      %v3800 = vadd.f32 %v3799, %v3681
      %v3801 = vadd.f32 %v3800, %v3682
      %v3802 = vadd.f32 %v3801, %v3683
      %v3803 = vadd.f32 %v3802, %v3684
      %v3804 = vadd.f32 %v3803, %v3685
      %v3805 = vadd.f32 %v3804, %v3686
      %v3806 = vadd.f32 %v3805, %v3687
      %v3807 = vadd.f32 %v3806, %v3688
      %v3808 = vadd.f32 %v3807, %v3689
      %v3809 = vrot.slane %v3808, 4
      %v3810 = vadd.f32 %v3808, %v3809
      %v3811 = vrot.slane %v3810, 2
      %v3812 = vadd.f32 %v3810, %v3811
      %v3813 = vrot.slane %v3812, 1
      %v3814 = vadd.f32 %v3812, %v3813
      %v3815 = vmul.f32 %v3650, %v3650
      %v3816 = vmul.f32 %v3651, %v3651
      %v3817 = vmul.f32 %v3652, %v3652
      %v3818 = vmul.f32 %v3653, %v3653
      %v3819 = vmul.f32 %v3654, %v3654
      %v3820 = vmul.f32 %v3655, %v3655
      %v3821 = vmul.f32 %v3656, %v3656
      %v3822 = vmul.f32 %v3657, %v3657
      %v3823 = vmul.f32 %v3658, %v3658
      %v3824 = vmul.f32 %v3659, %v3659
      %v3825 = vmul.f32 %v3660, %v3660
      %v3826 = vmul.f32 %v3661, %v3661
      %v3827 = vmul.f32 %v3662, %v3662
      %v3828 = vmul.f32 %v3663, %v3663
      %v3829 = vmul.f32 %v3664, %v3664
      %v3830 = vmul.f32 %v3665, %v3665
      %v3831 = vmul.f32 %v3666, %v3666
      %v3832 = vmul.f32 %v3667, %v3667
      %v3833 = vmul.f32 %v3668, %v3668
      %v3834 = vmul.f32 %v3669, %v3669
      %v3835 = vmul.f32 %v3670, %v3670
      %v3836 = vmul.f32 %v3671, %v3671
      %v3837 = vmul.f32 %v3672, %v3672
      %v3838 = vmul.f32 %v3673, %v3673
      %v3839 = vmul.f32 %v3674, %v3674
      %v3840 = vmul.f32 %v3675, %v3675
      %v3841 = vmul.f32 %v3676, %v3676
      %v3842 = vmul.f32 %v3677, %v3677
      %v3843 = vmul.f32 %v3678, %v3678
      %v3844 = vmul.f32 %v3679, %v3679
      %v3845 = vmul.f32 %v3680, %v3680
      %v3846 = vmul.f32 %v3681, %v3681
      %v3847 = vmul.f32 %v3682, %v3682
      %v3848 = vmul.f32 %v3683, %v3683
      %v3849 = vmul.f32 %v3684, %v3684
      %v3850 = vmul.f32 %v3685, %v3685
      %v3851 = vmul.f32 %v3686, %v3686
      %v3852 = vmul.f32 %v3687, %v3687
      %v3853 = vmul.f32 %v3688, %v3688
      %v3854 = vmul.f32 %v3689, %v3689
      %v3855 = vadd.f32 %v3815, %v3816
      %v3856 = vadd.f32 %v3855, %v3817
      %v3857 = vadd.f32 %v3856, %v3818
      %v3858 = vadd.f32 %v3857, %v3819
      %v3859 = vadd.f32 %v3858, %v3820
      %v3860 = vadd.f32 %v3859, %v3821
      %v3861 = vadd.f32 %v3860, %v3822
      %v3862 = vadd.f32 %v3861, %v3823
      %v3863 = vadd.f32 %v3862, %v3824
      %v3864 = vadd.f32 %v3863, %v3825
      %v3865 = vadd.f32 %v3864, %v3826
      %v3866 = vadd.f32 %v3865, %v3827
      %v3867 = vadd.f32 %v3866, %v3828
      %v3868 = vadd.f32 %v3867, %v3829
      %v3869 = vadd.f32 %v3868, %v3830
      %v3870 = vadd.f32 %v3869, %v3831
      %v3871 = vadd.f32 %v3870, %v3832
      %v3872 = vadd.f32 %v3871, %v3833
      %v3873 = vadd.f32 %v3872, %v3834
      %v3874 = vadd.f32 %v3873, %v3835
      %v3875 = vadd.f32 %v3874, %v3836
      %v3876 = vadd.f32 %v3875, %v3837
      %v3877 = vadd.f32 %v3876, %v3838
      %v3878 = vadd.f32 %v3877, %v3839
      %v3879 = vadd.f32 %v3878, %v3840
      %v3880 = vadd.f32 %v3879, %v3841
      %v3881 = vadd.f32 %v3880, %v3842
      %v3882 = vadd.f32 %v3881, %v3843
      %v3883 = vadd.f32 %v3882, %v3844
      %v3884 = vadd.f32 %v3883, %v3845
      %v3885 = vadd.f32 %v3884, %v3846
      %v3886 = vadd.f32 %v3885, %v3847
      %v3887 = vadd.f32 %v3886, %v3848
      %v3888 = vadd.f32 %v3887, %v3849
      %v3889 = vadd.f32 %v3888, %v3850
      %v3890 = vadd.f32 %v3889, %v3851
      %v3891 = vadd.f32 %v3890, %v3852
      %v3892 = vadd.f32 %v3891, %v3853
      %v3893 = vadd.f32 %v3892, %v3854
      %v3894 = vrot.slane %v3893, 4
      %v3895 = vadd.f32 %v3893, %v3894
      %v3896 = vrot.slane %v3895, 2
      %v3897 = vadd.f32 %v3895, %v3896
      %v3898 = vrot.slane %v3897, 1
      %v3899 = vadd.f32 %v3897, %v3898
      %3900 = vst [vmem:[%s264] sm:$0xff] %v3814
      %3901 = vst [vmem:[%s268] sm:$0xff] %v3899
      %s3902 = smul.u32 40, %s17
      %p3903 = scmp.lt.s32.totalorder %s3902, 79
      %s3904 = scalar_select %p3903, %s3902, 79
      %s3905 = smul.addr %s3904, 4
      %s3906 = scalar_lea.vmem %s3, %s3905
      %p3907 = scmp.lt.s32.totalorder %s17, 1
      %s3908 = scalar_select %p3907, %s17, 1
      %s3909 = smul.addr %s3908, 8
      %s3910 = scalar_lea.vmem %s4, %s3909
      %p3911 = scmp.lt.s32.totalorder %s17, 1
      %s3912 = scalar_select %p3911, %s17, 1
      %s3913 = smul.addr %s3912, 8
      %s3914 = scalar_lea.vmem %s5, %s3913
      // Predicated region
      $region33: #{cnn_block_forward.2} parent=31 // pred_check
        %p3915 = pneg %p108
      $region34: #{cnn_block_forward.2} parent=31 // pred_check_branch
        %3917 = sbr.rel (%p3915) target = $region36
      $region35: #{cnn_block_forward.2} parent=31 // pred_region
        %s3918 = smul.u32 40, %s17
      $region36: #{cnn_block_forward.2} parent=31 // pred_fallthru
        _
      // Predicated region
      $region37: #{cnn_block_forward.2} parent=31 // pred_check
        %p3919 = pneg %p134
      $region38: #{cnn_block_forward.2} parent=31 // pred_check_branch
        %3921 = sbr.rel (%p3919) target = $region40
      $region39: #{cnn_block_forward.2} parent=31 // pred_region
        _
      $region40: #{cnn_block_forward.2} parent=31 // pred_fallthru
        _
      // Predicated region
      $region41: #{cnn_block_forward.2} parent=31 // pred_check
        %p3922 = pneg %p160
      $region42: #{cnn_block_forward.2} parent=31 // pred_check_branch
        %3924 = sbr.rel (%p3922) target = $region44
      $region43: #{cnn_block_forward.2} parent=31 // pred_region
        _
      $region44: #{cnn_block_forward.2} parent=31 // pred_fallthru
        _
    $region32: #{cnn_block_forward.2} parent=5 // pred_fallthru
      _
    %p3925 = scmp.le.s32.totalorder 2, %s12
    // Predicated region
    $region45: #{cnn_block_forward.2} parent=5 // pred_check
      %p3926 = pneg %p3925
    $region46: #{cnn_block_forward.2} parent=5 // pred_check_branch
      %3928 = sbr.rel (%p3926) target = $region48
    $region47: #{cnn_block_forward.2} parent=5 // pred_region
      %s3929 = ssub.s32 %s12, 2
      // Predicated region
      $region49: #{cnn_block_forward.2} parent=47 // pred_check
        %p3930 = pneg %p114
      $region50: #{cnn_block_forward.2} parent=47 // pred_check_branch
        %3932 = sbr.rel (%p3930) target = $region52
      $region51: #{cnn_block_forward.2} parent=47 // pred_region
        %s3933 = smul.u32 40, %s18
        %p3934 = scmp.lt.s32.totalorder %s3933, 79
        %s3935 = scalar_select %p3934, %s3933, 79
        %s3936 = smul.addr %s3935, 4
        %s3937 = scalar_lea.vmem %s3, %s3936
      $region52: #{cnn_block_forward.2} parent=47 // pred_fallthru
        _
      // Predicated region
      $region53: #{cnn_block_forward.2} parent=47 // pred_check
        %p3938 = pneg %p140
      $region54: #{cnn_block_forward.2} parent=47 // pred_check_branch
        %3940 = sbr.rel (%p3938) target = $region56
      $region55: #{cnn_block_forward.2} parent=47 // pred_region
        %p3941 = scmp.lt.s32.totalorder %s18, 1
        %s3942 = scalar_select %p3941, %s18, 1
        %s3943 = smul.addr %s3942, 8
        %s3944 = scalar_lea.vmem %s4, %s3943
      $region56: #{cnn_block_forward.2} parent=47 // pred_fallthru
        _
      // Predicated region
      $region57: #{cnn_block_forward.2} parent=47 // pred_check
        %p3945 = pneg %p166
      $region58: #{cnn_block_forward.2} parent=47 // pred_check_branch
        %3947 = sbr.rel (%p3945) target = $region60
      $region59: #{cnn_block_forward.2} parent=47 // pred_region
        %p3948 = scmp.lt.s32.totalorder %s18, 1
        %s3949 = scalar_select %p3948, %s18, 1
        %s3950 = smul.addr %s3949, 8
        %s3951 = scalar_lea.vmem %s5, %s3950
      $region60: #{cnn_block_forward.2} parent=47 // pred_fallthru
        _
    $region48: #{cnn_block_forward.2} parent=5 // pred_fallthru
      _
  $region6: #{cnn_block_forward.2} parent=0 // loop_footer
    %s16 = sadd.s32 1, %s12
  $region7: #{cnn_block_forward.2} parent=0 // loop_footer_branch
    %11 = sbr.rel target = $region3
  $region8: #{cnn_block_forward.2} parent=0 // loop_exit
    _

</llo_original>
